<compile_context>
chip_gen: v7x
topology: tpu7x:2x2x1
jax: 0.10.0
libtpu: 0.0.40
codegen_flags: <defaults>
</compile_context>

<pallas_src>
import jax
import jax.numpy as jnp
from jax import lax
from jax.experimental import pallas as pl
from jax.experimental.pallas import tpu as pltpu

# ------------------------- configuration -------------------------
L = 2                 # number_of_blocks
B = 2                 # batch
T = 64                # tokens per batch element
D = 128               # input_dim_primary
A = 128               # attention_dim
HID = 128             # hidden_dim
NH = 4                # n_heads
HD_Q = A // NH        # per-head q/k dim = 32
HD_V = HID // NH      # per-head v dim   = 32
M = 128               # mlp hidden = max(mlp_structure=[128])
BT = B * T            # 128 token rows (full MXU M fill)
LN_EPS = 1e-5
SCALE = 1.0 / float(HD_Q) ** 0.5

PARAM_ORDER = ("ln1_g", "ln1_b", "wqkv", "bqkv", "wo", "bo",
               "ln2_g", "ln2_b", "w1", "b1", "w2", "b2")

BF16 = jnp.bfloat16


# ------------------------- shared math helpers -------------------------
def _ln(x, g, b):
    mu = jnp.mean(x, axis=-1, keepdims=True)
    var = jnp.mean((x - mu) ** 2, axis=-1, keepdims=True)
    return (x - mu) * lax.rsqrt(var + LN_EPS) * g + b


def _gelu(x):
    # tanh-approximate GELU (EUP tanh slot; same fn used in kernel and reference)
    c = 0.7978845608028654  # sqrt(2/pi)
    return 0.5 * x * (1.0 + jnp.tanh(c * (x + 0.044715 * x * x * x)))


# ------------------------- Pallas kernel -------------------------
def _stack_kernel(x_ref,
                  ln1_g, ln1_b, wqkv, bqkv, wo, bo,
                  ln2_g, ln2_b, w1, b1, w2, b2,
                  o_ref):
    blk = pl.program_id(0)

    # Load the input once; the running activation lives in the resident output
    # buffer (constant out_spec across the "arbitrary" grid -> stays in VMEM).
    @pl.when(blk == 0)
    def _():
        o_ref[...] = x_ref[...].astype(jnp.float32)

    x = o_ref[...]                                             # [BT, D] f32

    # ---------------- MHA sublayer: X = X + MHA(LN1(X)) ----------------
    xn = _ln(x, ln1_g[...], ln1_b[...])
    # Fused QKV projection: one [128,128]x[128,384] bf16 matmul, f32 accumulate.
    qkv = jnp.dot(xn.astype(BF16), wqkv[...],
                  preferred_element_type=jnp.float32) + bqkv[...]      # [BT, 3A]
    q = qkv[:, :A]            # 128-lane-aligned slices (free)
    k = qkv[:, A:2 * A]
    v = qkv[:, 2 * A:]

    wo_w = wo[...]                                             # [HID, D] bf16

    for bi in range(B):                                        # static unroll (B=2)
        r0 = bi * T
        attn_b = None                                          # [T, D] f32 accumulator
        for h in range(NH):                                    # static unroll (NH=4)
            qh = q[r0:r0 + T, h * HD_Q:(h + 1) * HD_Q].astype(BF16)   # [T, 32]
            kh = k[r0:r0 + T, h * HD_Q:(h + 1) * HD_Q].astype(BF16)
            vh = v[r0:r0 + T, h * HD_V:(h + 1) * HD_V].astype(BF16)
            # q @ k^T via contracting-dim spec (no explicit XLU transpose).
            s = lax.dot_general(qh, kh, (((1,), (1,)), ((), ())),
                                preferred_element_type=jnp.float32) * SCALE
            s = s - jnp.max(s, axis=-1, keepdims=True)
            p = jnp.exp(s)                                     # unnormalized probs
            denom = jnp.sum(p, axis=-1, keepdims=True)         # [T, 1]
            o_h = jnp.dot(p.astype(BF16), vh,
                          preferred_element_type=jnp.float32)  # [T, 32]
            # Deferred softmax normalization (EUP reciprocal, scales [T,32] only).
            o_h = o_h * pl.reciprocal(denom, approx=True)
            # Per-head output projection: accumulate into attn_b (no concat).
            contrib = jnp.dot(o_h.astype(BF16),
                              wo_w[h * HD_V:(h + 1) * HD_V, :],
                              preferred_element_type=jnp.float32)      # [T, D]
            attn_b = contrib if attn_b is None else attn_b + contrib
        # dropout p=0 -> identity; write residual rows back (sublane-aligned store).
        o_ref[r0:r0 + T, :] = x[r0:r0 + T, :] + attn_b + bo[...]

    # ---------------- MLP sublayer: X = X + MLP(LN2(X)) ----------------
    x = o_ref[...]
    xn2 = _ln(x, ln2_g[...], ln2_b[...])
    h1 = _gelu(jnp.dot(xn2.astype(BF16), w1[...],
                       preferred_element_type=jnp.float32) + b1[...])
    x = x + jnp.dot(h1.astype(BF16), w2[...],
                    preferred_element_type=jnp.float32) + b2[...]
    o_ref[...] = x


# ------------------------- wrapper -------------------------
def transformer_block_stack(x, pk):
    """x: [B, T, D] -> final output [B, T, D].

    Equivalent to TransformerBlockStack.forward(X, return_at='end',
    return_attention=False), which returns (X_final, []) -- only X_final here.
    """
    x2 = x.reshape(BT, D)

    def stacked_spec(name):
        shape = tuple(pk[name].shape[1:])
        return pl.BlockSpec((pl.Squeezed(),) + shape, lambda l: (l, 0, 0))

    in_specs = [pl.BlockSpec((BT, D), lambda l: (0, 0))]
    in_specs += [stacked_spec(n) for n in PARAM_ORDER]

    y = pl.pallas_call(
        _stack_kernel,
        out_shape=jax.ShapeDtypeStruct((BT, D), jnp.float32),
        grid_spec=pltpu.PrefetchScalarGridSpec(
            num_scalar_prefetch=0,
            grid=(L,),
            in_specs=in_specs,
            out_specs=pl.BlockSpec((BT, D), lambda l: (0, 0)),
        ),
        compiler_params=pltpu.CompilerParams(
            dimension_semantics=("arbitrary",)),   # sequential residual carry
    )(x2, *[pk[n] for n in PARAM_ORDER])

    return y.reshape(B, T, D)


# ------------------------- pure-JAX reference -------------------------
def reference_forward(x, pk):
    """Same math / same dtype policy (bf16 matmul operands, f32 accumulate)."""
    hp = lax.Precision.HIGHEST
    y = x.astype(jnp.float32)
    for l in range(L):
        xn = _ln(y, pk["ln1_g"][l, 0], pk["ln1_b"][l, 0])
        qkv = jnp.einsum("btd,da->bta", xn.astype(BF16), pk["wqkv"][l],
                         precision=hp, preferred_element_type=jnp.float32)
        qkv = qkv + pk["bqkv"][l, 0]
        q, k, v = qkv[..., :A], qkv[..., A:2 * A], qkv[..., 2 * A:]
        qh = q.reshape(B, T, NH, HD_Q).astype(BF16)
        kh = k.reshape(B, T, NH, HD_Q).astype(BF16)
        vh = v.reshape(B, T, NH, HD_V).astype(BF16)
        s = jnp.einsum("bqhd,bkhd->bhqk", qh, kh, precision=hp,
                       preferred_element_type=jnp.float32) * SCALE
        s = s - jnp.max(s, axis=-1, keepdims=True)
        p = jnp.exp(s)
        denom = jnp.sum(p, axis=-1, keepdims=True)             # [B, NH, T, 1]
        ctx = jnp.einsum("bhqk,bkhd->bqhd", p.astype(BF16), vh, precision=hp,
                         preferred_element_type=jnp.float32)
        ctx = ctx / jnp.swapaxes(denom, 1, 2)                  # [B, T, NH, HD_V]
        ctx = ctx.reshape(B, T, HID)
        attn = jnp.einsum("bth,hd->btd", ctx.astype(BF16), pk["wo"][l],
                          precision=hp, preferred_element_type=jnp.float32)
        y = y + attn + pk["bo"][l, 0]
        xn2 = _ln(y, pk["ln2_g"][l, 0], pk["ln2_b"][l, 0])
        h1 = _gelu(jnp.einsum("btd,dm->btm", xn2.astype(BF16), pk["w1"][l],
                              precision=hp, preferred_element_type=jnp.float32)
                   + pk["b1"][l, 0])
        y = y + jnp.einsum("btm,md->btd", h1.astype(BF16), pk["w2"][l],
                           precision=hp, preferred_element_type=jnp.float32)
        y = y + pk["b2"][l, 0]
    return y


# ------------------------- parameter init / packing -------------------------
def init_params(key):
    ks = jax.random.split(key, 16)

    def nrm(k, shape, s):
        return s * jax.random.normal(k, shape, jnp.float32)

    return {
        "ln1_g": 1.0 + 0.1 * jax.random.normal(ks[0], (L, 1, D), jnp.float32),
        "ln1_b": 0.05 * jax.random.normal(ks[1], (L, 1, D), jnp.float32),
        "wq": nrm(ks[2], (L, D, A), 0.05),   "bq": nrm(ks[3], (L, 1, A), 0.02),
        "wk": nrm(ks[4], (L, D, A), 0.05),   "bk": nrm(ks[5], (L, 1, A), 0.02),
        "wv": nrm(ks[6], (L, D, HID), 0.05), "bv": nrm(ks[7], (L, 1, HID), 0.02),
        "wo": nrm(ks[8], (L, HID, D), 0.05), "bo": nrm(ks[9], (L, 1, D), 0.02),
        "ln2_g": 1.0 + 0.1 * jax.random.normal(ks[10], (L, 1, D), jnp.float32),
        "ln2_b": 0.05 * jax.random.normal(ks[11], (L, 1, D), jnp.float32),
        "w1": nrm(ks[12], (L, D, M), 0.05),  "b1": nrm(ks[13], (L, 1, M), 0.02),
        "w2": nrm(ks[14], (L, M, D), 0.05),  "b2": nrm(ks[15], (L, 1, D), 0.02),
    }


def pack_params(p):
    """Wrapper-side restructuring: fuse QKV and store weight matrices in bf16."""
    return {
        "ln1_g": p["ln1_g"], "ln1_b": p["ln1_b"],
        "wqkv": jnp.concatenate([p["wq"], p["wk"], p["wv"]], axis=-1).astype(BF16),
        "bqkv": jnp.concatenate([p["bq"], p["bk"], p["bv"]], axis=-1),
        "wo": p["wo"].astype(BF16), "bo": p["bo"],
        "ln2_g": p["ln2_g"], "ln2_b": p["ln2_b"],
        "w1": p["w1"].astype(BF16), "b1": p["b1"],
        "w2": p["w2"].astype(BF16), "b2": p["b2"],
    }


if __name__ == "__main__":
    key = jax.random.PRNGKey(0)
    kx, kp = jax.random.split(key)
    x = jax.random.normal(kx, (B, T, D), jnp.float32)
    packed = pack_params(init_params(kp))

    out = jax.block_until_ready(transformer_block_stack(x, packed))
    ref = jax.block_until_ready(reference_forward(x, packed))

    assert out.shape == (B, T, D), out.shape
    max_err = float(jnp.max(jnp.abs(out - ref)))
    # Tolerance covers the approx-reciprocal softmax normalization and
    # accumulation-order differences (weights/operands are bf16 in both paths).
    assert jnp.allclose(out, ref, atol=1e-2, rtol=1e-2), f"mismatch vs reference: {max_err}"
    print("KERNEL_OK")
</pallas_src>

<mosaic_0001>
module attributes {stable_mosaic.version = 11 : i64} {
  func.func @_stack_kernel(%arg0: i32, %arg1: memref<128x128xf32, #tpu.memory_space<vmem>>, %arg2: memref<1x1x128xf32, #tpu.memory_space<vmem>>, %arg3: memref<1x1x128xf32, #tpu.memory_space<vmem>>, %arg4: memref<1x128x384xbf16, #tpu.memory_space<vmem>>, %arg5: memref<1x1x384xf32, #tpu.memory_space<vmem>>, %arg6: memref<1x128x128xbf16, #tpu.memory_space<vmem>>, %arg7: memref<1x1x128xf32, #tpu.memory_space<vmem>>, %arg8: memref<1x1x128xf32, #tpu.memory_space<vmem>>, %arg9: memref<1x1x128xf32, #tpu.memory_space<vmem>>, %arg10: memref<1x128x128xbf16, #tpu.memory_space<vmem>>, %arg11: memref<1x1x128xf32, #tpu.memory_space<vmem>>, %arg12: memref<1x128x128xbf16, #tpu.memory_space<vmem>>, %arg13: memref<1x1x128xf32, #tpu.memory_space<vmem>>, %arg14: memref<128x128xf32, #tpu.memory_space<vmem>>) attributes {dimension_semantics = [#tpu.dimension_semantics<arbitrary>], iteration_bounds = array<i64: 2>, scalar_prefetch = 0 : i64, scratch_operands = 0 : i64, tpu.core_type = #tpu.core_type<tc>, window_params = [{pipeline_mode = #tpu.pipeline_mode<synchronous>, transform_indices = @transform_0, window_bounds = array<i64: 128, 128>}, {transform_indices = @transform_1, window_bounds = array<i64: 1, 1, 128>}, {transform_indices = @transform_2, window_bounds = array<i64: 1, 1, 128>}, {transform_indices = @transform_3, window_bounds = array<i64: 1, 128, 384>}, {transform_indices = @transform_4, window_bounds = array<i64: 1, 1, 384>}, {transform_indices = @transform_5, window_bounds = array<i64: 1, 128, 128>}, {transform_indices = @transform_6, window_bounds = array<i64: 1, 1, 128>}, {transform_indices = @transform_7, window_bounds = array<i64: 1, 1, 128>}, {transform_indices = @transform_8, window_bounds = array<i64: 1, 1, 128>}, {transform_indices = @transform_9, window_bounds = array<i64: 1, 128, 128>}, {transform_indices = @transform_10, window_bounds = array<i64: 1, 1, 128>}, {transform_indices = @transform_11, window_bounds = array<i64: 1, 128, 128>}, {transform_indices = @transform_12, window_bounds = array<i64: 1, 1, 128>}, {pipeline_mode = #tpu.pipeline_mode<synchronous>, transform_indices = @transform_13, window_bounds = array<i64: 128, 128>}]} {
    %c0_i32 = arith.constant 0 : i32
    %0 = arith.cmpi eq, %arg0, %c0_i32 : i32
    %1 = arith.extui %0 : i1 to i32
    %c0_i32_0 = arith.constant 0 : i32
    %2 = arith.cmpi ne, %1, %c0_i32_0 : i32
    scf.if %2 {
      %c0_112 = arith.constant 0 : index
      %c0_113 = arith.constant 0 : index
      %313 = vector.load %arg1[%c0_112, %c0_113] : memref<128x128xf32, #tpu.memory_space<vmem>>, vector<128x128xf32>
      %c0_114 = arith.constant 0 : index
      %c0_115 = arith.constant 0 : index
      %314 = vector.load %arg14[%c0_114, %c0_115] : memref<128x128xf32, #tpu.memory_space<vmem>>, vector<128x128xf32>
      tpu.vector_store %arg14[%c0_114, %c0_115], %313 {strides = array<i32>} : memref<128x128xf32, #tpu.memory_space<vmem>>, vector<128x128xf32>,
    } else {
    }
    %c0 = arith.constant 0 : index
    %c0_1 = arith.constant 0 : index
    %3 = vector.load %arg14[%c0, %c0_1] : memref<128x128xf32, #tpu.memory_space<vmem>>, vector<128x128xf32>
    %c0_2 = arith.constant 0 : index
    %c0_3 = arith.constant 0 : index
    %c0_4 = arith.constant 0 : index
    %4 = vector.load %arg2[%c0_2, %c0_3, %c0_4] : memref<1x1x128xf32, #tpu.memory_space<vmem>>, vector<1x1x128xf32>
    %5 = vector.shape_cast %4 : vector<1x1x128xf32> to vector<1x128xf32>
    %c0_5 = arith.constant 0 : index
    %c0_6 = arith.constant 0 : index
    %c0_7 = arith.constant 0 : index
    %6 = vector.load %arg3[%c0_5, %c0_6, %c0_7] : memref<1x1x128xf32, #tpu.memory_space<vmem>>, vector<1x1x128xf32>
    %7 = vector.shape_cast %6 : vector<1x1x128xf32> to vector<1x128xf32>
    %cst = arith.constant dense<0.000000e+00> : vector<128xf32>
    %8 = vector.multi_reduction <add>, %3, %cst [1] : vector<128x128xf32> to vector<128xf32>
    %9 = vector.shape_cast %8 : vector<128xf32> to vector<128x1xf32>
    %cst_8 = arith.constant 1.280000e+02 : f32
    %10 = vector.broadcast %cst_8 : f32 to vector<128x1xf32>
    %11 = arith.divf %9, %10 : vector<128x1xf32>
    %12 = vector.broadcast %11 : vector<128x1xf32> to vector<128x128xf32>
    %13 = arith.subf %3, %12 : vector<128x128xf32>
    %14 = arith.mulf %13, %13 : vector<128x128xf32>
    %cst_9 = arith.constant dense<0.000000e+00> : vector<128xf32>
    %15 = vector.multi_reduction <add>, %14, %cst_9 [1] : vector<128x128xf32> to vector<128xf32>
    %16 = vector.shape_cast %15 : vector<128xf32> to vector<128x1xf32>
    %cst_10 = arith.constant 1.280000e+02 : f32
    %17 = vector.broadcast %cst_10 : f32 to vector<128x1xf32>
    %18 = arith.divf %16, %17 : vector<128x1xf32>
    %19 = vector.broadcast %11 : vector<128x1xf32> to vector<128x128xf32>
    %20 = arith.subf %3, %19 : vector<128x128xf32>
    %cst_11 = arith.constant 9.99999974E-6 : f32
    %21 = vector.broadcast %cst_11 : f32 to vector<128x1xf32>
    %22 = arith.addf %18, %21 : vector<128x1xf32>
    %23 = math.rsqrt %22 : vector<128x1xf32>
    %24 = vector.broadcast %23 : vector<128x1xf32> to vector<128x128xf32>
    %25 = arith.mulf %20, %24 : vector<128x128xf32>
    %26 = vector.broadcast %5 : vector<1x128xf32> to vector<128x128xf32>
    %27 = arith.mulf %25, %26 : vector<128x128xf32>
    %28 = vector.broadcast %7 : vector<1x128xf32> to vector<128x128xf32>
    %29 = arith.addf %27, %28 : vector<128x128xf32>
    %30 = arith.truncf %29 : vector<128x128xf32> to vector<128x128xbf16>
    %c0_12 = arith.constant 0 : index
    %c0_13 = arith.constant 0 : index
    %c0_14 = arith.constant 0 : index
    %31 = vector.load %arg4[%c0_12, %c0_13, %c0_14] : memref<1x128x384xbf16, #tpu.memory_space<vmem>>, vector<1x128x384xbf16>
    %32 = vector.shape_cast %31 : vector<1x128x384xbf16> to vector<128x384xbf16>
    %cst_15 = arith.constant dense<0.000000e+00> : vector<128x384xf32>
    %33 = tpu.matmul %30, %32, %cst_15 {dimension_numbers = #tpu.dot_dimension_numbers<[1], [0], [0], [1], [0, 0, 1, 1], [], []>} : vector<128x128xbf16>, vector<128x384xbf16>, vector<128x384xf32> -> vector<128x384xf32>
    %c0_16 = arith.constant 0 : index
    %c0_17 = arith.constant 0 : index
    %c0_18 = arith.constant 0 : index
    %34 = vector.load %arg5[%c0_16, %c0_17, %c0_18] : memref<1x1x384xf32, #tpu.memory_space<vmem>>, vector<1x1x384xf32>
    %35 = vector.shape_cast %34 : vector<1x1x384xf32> to vector<1x384xf32>
    %36 = vector.broadcast %35 : vector<1x384xf32> to vector<128x384xf32>
    %37 = arith.addf %33, %36 : vector<128x384xf32>
    %38 = vector.extract_strided_slice %37 {offsets = [0, 0], sizes = [128, 128], strides = [1, 1]} : vector<128x384xf32> to vector<128x128xf32>
    %39 = vector.extract_strided_slice %37 {offsets = [0, 128], sizes = [128, 128], strides = [1, 1]} : vector<128x384xf32> to vector<128x128xf32>
    %40 = vector.extract_strided_slice %37 {offsets = [0, 256], sizes = [128, 128], strides = [1, 1]} : vector<128x384xf32> to vector<128x128xf32>
    %c0_19 = arith.constant 0 : index
    %c0_20 = arith.constant 0 : index
    %c0_21 = arith.constant 0 : index
    %41 = vector.load %arg6[%c0_19, %c0_20, %c0_21] : memref<1x128x128xbf16, #tpu.memory_space<vmem>>, vector<1x128x128xbf16>
    %42 = vector.shape_cast %41 : vector<1x128x128xbf16> to vector<128x128xbf16>
    %43 = vector.extract_strided_slice %38 {offsets = [0, 0], sizes = [64, 32], strides = [1, 1]} : vector<128x128xf32> to vector<64x32xf32>
    %44 = arith.truncf %43 : vector<64x32xf32> to vector<64x32xbf16>
    %45 = vector.extract_strided_slice %39 {offsets = [0, 0], sizes = [64, 32], strides = [1, 1]} : vector<128x128xf32> to vector<64x32xf32>
    %46 = arith.truncf %45 : vector<64x32xf32> to vector<64x32xbf16>
    %47 = vector.extract_strided_slice %40 {offsets = [0, 0], sizes = [64, 32], strides = [1, 1]} : vector<128x128xf32> to vector<64x32xf32>
    %48 = arith.truncf %47 : vector<64x32xf32> to vector<64x32xbf16>
    %cst_22 = arith.constant dense<0.000000e+00> : vector<64x64xf32>
    %49 = tpu.matmul %44, %46, %cst_22 {dimension_numbers = #tpu.dot_dimension_numbers<[1], [1], [0], [0], [0, 0, 1, 0], [], []>} : vector<64x32xbf16>, vector<64x32xbf16>, vector<64x64xf32> -> vector<64x64xf32>
    %cst_23 = arith.constant 0.176776692 : f32
    %50 = vector.broadcast %cst_23 : f32 to vector<64x64xf32>
    %51 = arith.mulf %49, %50 : vector<64x64xf32>
    %cst_24 = arith.constant dense<0xFF800000> : vector<64xf32>
    %52 = vector.multi_reduction <maximumf>, %51, %cst_24 [1] : vector<64x64xf32> to vector<64xf32>
    %53 = vector.shape_cast %52 : vector<64xf32> to vector<64x1xf32>
    %54 = vector.broadcast %53 : vector<64x1xf32> to vector<64x64xf32>
    %55 = arith.subf %51, %54 : vector<64x64xf32>
    %56 = math.exp %55 : vector<64x64xf32>
    %cst_25 = arith.constant dense<0.000000e+00> : vector<64xf32>
    %57 = vector.multi_reduction <add>, %56, %cst_25 [1] : vector<64x64xf32> to vector<64xf32>
    %58 = vector.shape_cast %57 : vector<64xf32> to vector<64x1xf32>
    %59 = arith.truncf %56 : vector<64x64xf32> to vector<64x64xbf16>
    %cst_26 = arith.constant dense<0.000000e+00> : vector<64x32xf32>
    %60 = tpu.matmul %59, %48, %cst_26 {dimension_numbers = #tpu.dot_dimension_numbers<[1], [0], [0], [1], [0, 0, 1, 1], [], []>} : vector<64x64xbf16>, vector<64x32xbf16>, vector<64x32xf32> -> vector<64x32xf32>
    %61 = tpu.reciprocal %58 {approx = true} : vector<64x1xf32> -> vector<64x1xf32>
    %62 = vector.broadcast %61 : vector<64x1xf32> to vector<64x32xf32>
    %63 = arith.mulf %60, %62 : vector<64x32xf32>
    %64 = arith.truncf %63 : vector<64x32xf32> to vector<64x32xbf16>
    %65 = vector.extract_strided_slice %42 {offsets = [0, 0], sizes = [32, 128], strides = [1, 1]} : vector<128x128xbf16> to vector<32x128xbf16>
    %cst_27 = arith.constant dense<0.000000e+00> : vector<64x128xf32>
    %66 = tpu.matmul %64, %65, %cst_27 {dimension_numbers = #tpu.dot_dimension_numbers<[1], [0], [0], [1], [0, 0, 1, 1], [], []>} : vector<64x32xbf16>, vector<32x128xbf16>, vector<64x128xf32> -> vector<64x128xf32>
    %67 = vector.extract_strided_slice %38 {offsets = [0, 32], sizes = [64, 32], strides = [1, 1]} : vector<128x128xf32> to vector<64x32xf32>
    %68 = arith.truncf %67 : vector<64x32xf32> to vector<64x32xbf16>
    %69 = vector.extract_strided_slice %39 {offsets = [0, 32], sizes = [64, 32], strides = [1, 1]} : vector<128x128xf32> to vector<64x32xf32>
    %70 = arith.truncf %69 : vector<64x32xf32> to vector<64x32xbf16>
    %71 = vector.extract_strided_slice %40 {offsets = [0, 32], sizes = [64, 32], strides = [1, 1]} : vector<128x128xf32> to vector<64x32xf32>
    %72 = arith.truncf %71 : vector<64x32xf32> to vector<64x32xbf16>
    %cst_28 = arith.constant dense<0.000000e+00> : vector<64x64xf32>
    %73 = tpu.matmul %68, %70, %cst_28 {dimension_numbers = #tpu.dot_dimension_numbers<[1], [1], [0], [0], [0, 0, 1, 0], [], []>} : vector<64x32xbf16>, vector<64x32xbf16>, vector<64x64xf32> -> vector<64x64xf32>
    %cst_29 = arith.constant 0.176776692 : f32
    %74 = vector.broadcast %cst_29 : f32 to vector<64x64xf32>
    %75 = arith.mulf %73, %74 : vector<64x64xf32>
    %cst_30 = arith.constant dense<0xFF800000> : vector<64xf32>
    %76 = vector.multi_reduction <maximumf>, %75, %cst_30 [1] : vector<64x64xf32> to vector<64xf32>
    %77 = vector.shape_cast %76 : vector<64xf32> to vector<64x1xf32>
    %78 = vector.broadcast %77 : vector<64x1xf32> to vector<64x64xf32>
    %79 = arith.subf %75, %78 : vector<64x64xf32>
    %80 = math.exp %79 : vector<64x64xf32>
    %cst_31 = arith.constant dense<0.000000e+00> : vector<64xf32>
    %81 = vector.multi_reduction <add>, %80, %cst_31 [1] : vector<64x64xf32> to vector<64xf32>
    %82 = vector.shape_cast %81 : vector<64xf32> to vector<64x1xf32>
    %83 = arith.truncf %80 : vector<64x64xf32> to vector<64x64xbf16>
    %cst_32 = arith.constant dense<0.000000e+00> : vector<64x32xf32>
    %84 = tpu.matmul %83, %72, %cst_32 {dimension_numbers = #tpu.dot_dimension_numbers<[1], [0], [0], [1], [0, 0, 1, 1], [], []>} : vector<64x64xbf16>, vector<64x32xbf16>, vector<64x32xf32> -> vector<64x32xf32>
    %85 = tpu.reciprocal %82 {approx = true} : vector<64x1xf32> -> vector<64x1xf32>
    %86 = vector.broadcast %85 : vector<64x1xf32> to vector<64x32xf32>
    %87 = arith.mulf %84, %86 : vector<64x32xf32>
    %88 = arith.truncf %87 : vector<64x32xf32> to vector<64x32xbf16>
    %89 = vector.extract_strided_slice %42 {offsets = [32, 0], sizes = [32, 128], strides = [1, 1]} : vector<128x128xbf16> to vector<32x128xbf16>
    %cst_33 = arith.constant dense<0.000000e+00> : vector<64x128xf32>
    %90 = tpu.matmul %88, %89, %cst_33 {dimension_numbers = #tpu.dot_dimension_numbers<[1], [0], [0], [1], [0, 0, 1, 1], [], []>} : vector<64x32xbf16>, vector<32x128xbf16>, vector<64x128xf32> -> vector<64x128xf32>
    %91 = arith.addf %66, %90 : vector<64x128xf32>
    %92 = vector.extract_strided_slice %38 {offsets = [0, 64], sizes = [64, 32], strides = [1, 1]} : vector<128x128xf32> to vector<64x32xf32>
    %93 = arith.truncf %92 : vector<64x32xf32> to vector<64x32xbf16>
    %94 = vector.extract_strided_slice %39 {offsets = [0, 64], sizes = [64, 32], strides = [1, 1]} : vector<128x128xf32> to vector<64x32xf32>
    %95 = arith.truncf %94 : vector<64x32xf32> to vector<64x32xbf16>
    %96 = vector.extract_strided_slice %40 {offsets = [0, 64], sizes = [64, 32], strides = [1, 1]} : vector<128x128xf32> to vector<64x32xf32>
    %97 = arith.truncf %96 : vector<64x32xf32> to vector<64x32xbf16>
    %cst_34 = arith.constant dense<0.000000e+00> : vector<64x64xf32>
    %98 = tpu.matmul %93, %95, %cst_34 {dimension_numbers = #tpu.dot_dimension_numbers<[1], [1], [0], [0], [0, 0, 1, 0], [], []>} : vector<64x32xbf16>, vector<64x32xbf16>, vector<64x64xf32> -> vector<64x64xf32>
    %cst_35 = arith.constant 0.176776692 : f32
    %99 = vector.broadcast %cst_35 : f32 to vector<64x64xf32>
    %100 = arith.mulf %98, %99 : vector<64x64xf32>
    %cst_36 = arith.constant dense<0xFF800000> : vector<64xf32>
    %101 = vector.multi_reduction <maximumf>, %100, %cst_36 [1] : vector<64x64xf32> to vector<64xf32>
    %102 = vector.shape_cast %101 : vector<64xf32> to vector<64x1xf32>
    %103 = vector.broadcast %102 : vector<64x1xf32> to vector<64x64xf32>
    %104 = arith.subf %100, %103 : vector<64x64xf32>
    %105 = math.exp %104 : vector<64x64xf32>
    %cst_37 = arith.constant dense<0.000000e+00> : vector<64xf32>
    %106 = vector.multi_reduction <add>, %105, %cst_37 [1] : vector<64x64xf32> to vector<64xf32>
    %107 = vector.shape_cast %106 : vector<64xf32> to vector<64x1xf32>
    %108 = arith.truncf %105 : vector<64x64xf32> to vector<64x64xbf16>
    %cst_38 = arith.constant dense<0.000000e+00> : vector<64x32xf32>
    %109 = tpu.matmul %108, %97, %cst_38 {dimension_numbers = #tpu.dot_dimension_numbers<[1], [0], [0], [1], [0, 0, 1, 1], [], []>} : vector<64x64xbf16>, vector<64x32xbf16>, vector<64x32xf32> -> vector<64x32xf32>
    %110 = tpu.reciprocal %107 {approx = true} : vector<64x1xf32> -> vector<64x1xf32>
    %111 = vector.broadcast %110 : vector<64x1xf32> to vector<64x32xf32>
    %112 = arith.mulf %109, %111 : vector<64x32xf32>
    %113 = arith.truncf %112 : vector<64x32xf32> to vector<64x32xbf16>
    %114 = vector.extract_strided_slice %42 {offsets = [64, 0], sizes = [32, 128], strides = [1, 1]} : vector<128x128xbf16> to vector<32x128xbf16>
    %cst_39 = arith.constant dense<0.000000e+00> : vector<64x128xf32>
    %115 = tpu.matmul %113, %114, %cst_39 {dimension_numbers = #tpu.dot_dimension_numbers<[1], [0], [0], [1], [0, 0, 1, 1], [], []>} : vector<64x32xbf16>, vector<32x128xbf16>, vector<64x128xf32> -> vector<64x128xf32>
    %116 = arith.addf %91, %115 : vector<64x128xf32>
    %117 = vector.extract_strided_slice %38 {offsets = [0, 96], sizes = [64, 32], strides = [1, 1]} : vector<128x128xf32> to vector<64x32xf32>
    %118 = arith.truncf %117 : vector<64x32xf32> to vector<64x32xbf16>
    %119 = vector.extract_strided_slice %39 {offsets = [0, 96], sizes = [64, 32], strides = [1, 1]} : vector<128x128xf32> to vector<64x32xf32>
    %120 = arith.truncf %119 : vector<64x32xf32> to vector<64x32xbf16>
    %121 = vector.extract_strided_slice %40 {offsets = [0, 96], sizes = [64, 32], strides = [1, 1]} : vector<128x128xf32> to vector<64x32xf32>
    %122 = arith.truncf %121 : vector<64x32xf32> to vector<64x32xbf16>
    %cst_40 = arith.constant dense<0.000000e+00> : vector<64x64xf32>
    %123 = tpu.matmul %118, %120, %cst_40 {dimension_numbers = #tpu.dot_dimension_numbers<[1], [1], [0], [0], [0, 0, 1, 0], [], []>} : vector<64x32xbf16>, vector<64x32xbf16>, vector<64x64xf32> -> vector<64x64xf32>
    %cst_41 = arith.constant 0.176776692 : f32
    %124 = vector.broadcast %cst_41 : f32 to vector<64x64xf32>
    %125 = arith.mulf %123, %124 : vector<64x64xf32>
    %cst_42 = arith.constant dense<0xFF800000> : vector<64xf32>
    %126 = vector.multi_reduction <maximumf>, %125, %cst_42 [1] : vector<64x64xf32> to vector<64xf32>
    %127 = vector.shape_cast %126 : vector<64xf32> to vector<64x1xf32>
    %128 = vector.broadcast %127 : vector<64x1xf32> to vector<64x64xf32>
    %129 = arith.subf %125, %128 : vector<64x64xf32>
    %130 = math.exp %129 : vector<64x64xf32>
    %cst_43 = arith.constant dense<0.000000e+00> : vector<64xf32>
    %131 = vector.multi_reduction <add>, %130, %cst_43 [1] : vector<64x64xf32> to vector<64xf32>
    %132 = vector.shape_cast %131 : vector<64xf32> to vector<64x1xf32>
    %133 = arith.truncf %130 : vector<64x64xf32> to vector<64x64xbf16>
    %cst_44 = arith.constant dense<0.000000e+00> : vector<64x32xf32>
    %134 = tpu.matmul %133, %122, %cst_44 {dimension_numbers = #tpu.dot_dimension_numbers<[1], [0], [0], [1], [0, 0, 1, 1], [], []>} : vector<64x64xbf16>, vector<64x32xbf16>, vector<64x32xf32> -> vector<64x32xf32>
    %135 = tpu.reciprocal %132 {approx = true} : vector<64x1xf32> -> vector<64x1xf32>
    %136 = vector.broadcast %135 : vector<64x1xf32> to vector<64x32xf32>
    %137 = arith.mulf %134, %136 : vector<64x32xf32>
    %138 = arith.truncf %137 : vector<64x32xf32> to vector<64x32xbf16>
    %139 = vector.extract_strided_slice %42 {offsets = [96, 0], sizes = [32, 128], strides = [1, 1]} : vector<128x128xbf16> to vector<32x128xbf16>
    %cst_45 = arith.constant dense<0.000000e+00> : vector<64x128xf32>
    %140 = tpu.matmul %138, %139, %cst_45 {dimension_numbers = #tpu.dot_dimension_numbers<[1], [0], [0], [1], [0, 0, 1, 1], [], []>} : vector<64x32xbf16>, vector<32x128xbf16>, vector<64x128xf32> -> vector<64x128xf32>
    %141 = arith.addf %116, %140 : vector<64x128xf32>
    %142 = vector.extract_strided_slice %3 {offsets = [0, 0], sizes = [64, 128], strides = [1, 1]} : vector<128x128xf32> to vector<64x128xf32>
    %143 = arith.addf %142, %141 : vector<64x128xf32>
    %c0_46 = arith.constant 0 : index
    %c0_47 = arith.constant 0 : index
    %c0_48 = arith.constant 0 : index
    %144 = vector.load %arg7[%c0_46, %c0_47, %c0_48] : memref<1x1x128xf32, #tpu.memory_space<vmem>>, vector<1x1x128xf32>
    %145 = vector.shape_cast %144 : vector<1x1x128xf32> to vector<1x128xf32>
    %146 = vector.broadcast %145 : vector<1x128xf32> to vector<64x128xf32>
    %147 = arith.addf %143, %146 : vector<64x128xf32>
    %c0_49 = arith.constant 0 : index
    %c0_50 = arith.constant 0 : index
    %148 = vector.load %arg14[%c0_49, %c0_50] : memref<128x128xf32, #tpu.memory_space<vmem>>, vector<64x128xf32>
    tpu.vector_store %arg14[%c0_49, %c0_50], %147 {strides = array<i32>} : memref<128x128xf32, #tpu.memory_space<vmem>>, vector<64x128xf32>,
    %149 = vector.extract_strided_slice %38 {offsets = [64, 0], sizes = [64, 32], strides = [1, 1]} : vector<128x128xf32> to vector<64x32xf32>
    %150 = arith.truncf %149 : vector<64x32xf32> to vector<64x32xbf16>
    %151 = vector.extract_strided_slice %39 {offsets = [64, 0], sizes = [64, 32], strides = [1, 1]} : vector<128x128xf32> to vector<64x32xf32>
    %152 = arith.truncf %151 : vector<64x32xf32> to vector<64x32xbf16>
    %153 = vector.extract_strided_slice %40 {offsets = [64, 0], sizes = [64, 32], strides = [1, 1]} : vector<128x128xf32> to vector<64x32xf32>
    %154 = arith.truncf %153 : vector<64x32xf32> to vector<64x32xbf16>
    %cst_51 = arith.constant dense<0.000000e+00> : vector<64x64xf32>
    %155 = tpu.matmul %150, %152, %cst_51 {dimension_numbers = #tpu.dot_dimension_numbers<[1], [1], [0], [0], [0, 0, 1, 0], [], []>} : vector<64x32xbf16>, vector<64x32xbf16>, vector<64x64xf32> -> vector<64x64xf32>
    %cst_52 = arith.constant 0.176776692 : f32
    %156 = vector.broadcast %cst_52 : f32 to vector<64x64xf32>
    %157 = arith.mulf %155, %156 : vector<64x64xf32>
    %cst_53 = arith.constant dense<0xFF800000> : vector<64xf32>
    %158 = vector.multi_reduction <maximumf>, %157, %cst_53 [1] : vector<64x64xf32> to vector<64xf32>
    %159 = vector.shape_cast %158 : vector<64xf32> to vector<64x1xf32>
    %160 = vector.broadcast %159 : vector<64x1xf32> to vector<64x64xf32>
    %161 = arith.subf %157, %160 : vector<64x64xf32>
    %162 = math.exp %161 : vector<64x64xf32>
    %cst_54 = arith.constant dense<0.000000e+00> : vector<64xf32>
    %163 = vector.multi_reduction <add>, %162, %cst_54 [1] : vector<64x64xf32> to vector<64xf32>
    %164 = vector.shape_cast %163 : vector<64xf32> to vector<64x1xf32>
    %165 = arith.truncf %162 : vector<64x64xf32> to vector<64x64xbf16>
    %cst_55 = arith.constant dense<0.000000e+00> : vector<64x32xf32>
    %166 = tpu.matmul %165, %154, %cst_55 {dimension_numbers = #tpu.dot_dimension_numbers<[1], [0], [0], [1], [0, 0, 1, 1], [], []>} : vector<64x64xbf16>, vector<64x32xbf16>, vector<64x32xf32> -> vector<64x32xf32>
    %167 = tpu.reciprocal %164 {approx = true} : vector<64x1xf32> -> vector<64x1xf32>
    %168 = vector.broadcast %167 : vector<64x1xf32> to vector<64x32xf32>
    %169 = arith.mulf %166, %168 : vector<64x32xf32>
    %170 = arith.truncf %169 : vector<64x32xf32> to vector<64x32xbf16>
    %171 = vector.extract_strided_slice %42 {offsets = [0, 0], sizes = [32, 128], strides = [1, 1]} : vector<128x128xbf16> to vector<32x128xbf16>
    %cst_56 = arith.constant dense<0.000000e+00> : vector<64x128xf32>
    %172 = tpu.matmul %170, %171, %cst_56 {dimension_numbers = #tpu.dot_dimension_numbers<[1], [0], [0], [1], [0, 0, 1, 1], [], []>} : vector<64x32xbf16>, vector<32x128xbf16>, vector<64x128xf32> -> vector<64x128xf32>
    %173 = vector.extract_strided_slice %38 {offsets = [64, 32], sizes = [64, 32], strides = [1, 1]} : vector<128x128xf32> to vector<64x32xf32>
    %174 = arith.truncf %173 : vector<64x32xf32> to vector<64x32xbf16>
    %175 = vector.extract_strided_slice %39 {offsets = [64, 32], sizes = [64, 32], strides = [1, 1]} : vector<128x128xf32> to vector<64x32xf32>
    %176 = arith.truncf %175 : vector<64x32xf32> to vector<64x32xbf16>
    %177 = vector.extract_strided_slice %40 {offsets = [64, 32], sizes = [64, 32], strides = [1, 1]} : vector<128x128xf32> to vector<64x32xf32>
    %178 = arith.truncf %177 : vector<64x32xf32> to vector<64x32xbf16>
    %cst_57 = arith.constant dense<0.000000e+00> : vector<64x64xf32>
    %179 = tpu.matmul %174, %176, %cst_57 {dimension_numbers = #tpu.dot_dimension_numbers<[1], [1], [0], [0], [0, 0, 1, 0], [], []>} : vector<64x32xbf16>, vector<64x32xbf16>, vector<64x64xf32> -> vector<64x64xf32>
    %cst_58 = arith.constant 0.176776692 : f32
    %180 = vector.broadcast %cst_58 : f32 to vector<64x64xf32>
    %181 = arith.mulf %179, %180 : vector<64x64xf32>
    %cst_59 = arith.constant dense<0xFF800000> : vector<64xf32>
    %182 = vector.multi_reduction <maximumf>, %181, %cst_59 [1] : vector<64x64xf32> to vector<64xf32>
    %183 = vector.shape_cast %182 : vector<64xf32> to vector<64x1xf32>
    %184 = vector.broadcast %183 : vector<64x1xf32> to vector<64x64xf32>
    %185 = arith.subf %181, %184 : vector<64x64xf32>
    %186 = math.exp %185 : vector<64x64xf32>
    %cst_60 = arith.constant dense<0.000000e+00> : vector<64xf32>
    %187 = vector.multi_reduction <add>, %186, %cst_60 [1] : vector<64x64xf32> to vector<64xf32>
    %188 = vector.shape_cast %187 : vector<64xf32> to vector<64x1xf32>
    %189 = arith.truncf %186 : vector<64x64xf32> to vector<64x64xbf16>
    %cst_61 = arith.constant dense<0.000000e+00> : vector<64x32xf32>
    %190 = tpu.matmul %189, %178, %cst_61 {dimension_numbers = #tpu.dot_dimension_numbers<[1], [0], [0], [1], [0, 0, 1, 1], [], []>} : vector<64x64xbf16>, vector<64x32xbf16>, vector<64x32xf32> -> vector<64x32xf32>
    %191 = tpu.reciprocal %188 {approx = true} : vector<64x1xf32> -> vector<64x1xf32>
    %192 = vector.broadcast %191 : vector<64x1xf32> to vector<64x32xf32>
    %193 = arith.mulf %190, %192 : vector<64x32xf32>
    %194 = arith.truncf %193 : vector<64x32xf32> to vector<64x32xbf16>
    %195 = vector.extract_strided_slice %42 {offsets = [32, 0], sizes = [32, 128], strides = [1, 1]} : vector<128x128xbf16> to vector<32x128xbf16>
    %cst_62 = arith.constant dense<0.000000e+00> : vector<64x128xf32>
    %196 = tpu.matmul %194, %195, %cst_62 {dimension_numbers = #tpu.dot_dimension_numbers<[1], [0], [0], [1], [0, 0, 1, 1], [], []>} : vector<64x32xbf16>, vector<32x128xbf16>, vector<64x128xf32> -> vector<64x128xf32>
    %197 = arith.addf %172, %196 : vector<64x128xf32>
    %198 = vector.extract_strided_slice %38 {offsets = [64, 64], sizes = [64, 32], strides = [1, 1]} : vector<128x128xf32> to vector<64x32xf32>
    %199 = arith.truncf %198 : vector<64x32xf32> to vector<64x32xbf16>
    %200 = vector.extract_strided_slice %39 {offsets = [64, 64], sizes = [64, 32], strides = [1, 1]} : vector<128x128xf32> to vector<64x32xf32>
    %201 = arith.truncf %200 : vector<64x32xf32> to vector<64x32xbf16>
    %202 = vector.extract_strided_slice %40 {offsets = [64, 64], sizes = [64, 32], strides = [1, 1]} : vector<128x128xf32> to vector<64x32xf32>
    %203 = arith.truncf %202 : vector<64x32xf32> to vector<64x32xbf16>
    %cst_63 = arith.constant dense<0.000000e+00> : vector<64x64xf32>
    %204 = tpu.matmul %199, %201, %cst_63 {dimension_numbers = #tpu.dot_dimension_numbers<[1], [1], [0], [0], [0, 0, 1, 0], [], []>} : vector<64x32xbf16>, vector<64x32xbf16>, vector<64x64xf32> -> vector<64x64xf32>
    %cst_64 = arith.constant 0.176776692 : f32
    %205 = vector.broadcast %cst_64 : f32 to vector<64x64xf32>
    %206 = arith.mulf %204, %205 : vector<64x64xf32>
    %cst_65 = arith.constant dense<0xFF800000> : vector<64xf32>
    %207 = vector.multi_reduction <maximumf>, %206, %cst_65 [1] : vector<64x64xf32> to vector<64xf32>
    %208 = vector.shape_cast %207 : vector<64xf32> to vector<64x1xf32>
    %209 = vector.broadcast %208 : vector<64x1xf32> to vector<64x64xf32>
    %210 = arith.subf %206, %209 : vector<64x64xf32>
    %211 = math.exp %210 : vector<64x64xf32>
    %cst_66 = arith.constant dense<0.000000e+00> : vector<64xf32>
    %212 = vector.multi_reduction <add>, %211, %cst_66 [1] : vector<64x64xf32> to vector<64xf32>
    %213 = vector.shape_cast %212 : vector<64xf32> to vector<64x1xf32>
    %214 = arith.truncf %211 : vector<64x64xf32> to vector<64x64xbf16>
    %cst_67 = arith.constant dense<0.000000e+00> : vector<64x32xf32>
    %215 = tpu.matmul %214, %203, %cst_67 {dimension_numbers = #tpu.dot_dimension_numbers<[1], [0], [0], [1], [0, 0, 1, 1], [], []>} : vector<64x64xbf16>, vector<64x32xbf16>, vector<64x32xf32> -> vector<64x32xf32>
    %216 = tpu.reciprocal %213 {approx = true} : vector<64x1xf32> -> vector<64x1xf32>
    %217 = vector.broadcast %216 : vector<64x1xf32> to vector<64x32xf32>
    %218 = arith.mulf %215, %217 : vector<64x32xf32>
    %219 = arith.truncf %218 : vector<64x32xf32> to vector<64x32xbf16>
    %220 = vector.extract_strided_slice %42 {offsets = [64, 0], sizes = [32, 128], strides = [1, 1]} : vector<128x128xbf16> to vector<32x128xbf16>
    %cst_68 = arith.constant dense<0.000000e+00> : vector<64x128xf32>
    %221 = tpu.matmul %219, %220, %cst_68 {dimension_numbers = #tpu.dot_dimension_numbers<[1], [0], [0], [1], [0, 0, 1, 1], [], []>} : vector<64x32xbf16>, vector<32x128xbf16>, vector<64x128xf32> -> vector<64x128xf32>
    %222 = arith.addf %197, %221 : vector<64x128xf32>
    %223 = vector.extract_strided_slice %38 {offsets = [64, 96], sizes = [64, 32], strides = [1, 1]} : vector<128x128xf32> to vector<64x32xf32>
    %224 = arith.truncf %223 : vector<64x32xf32> to vector<64x32xbf16>
    %225 = vector.extract_strided_slice %39 {offsets = [64, 96], sizes = [64, 32], strides = [1, 1]} : vector<128x128xf32> to vector<64x32xf32>
    %226 = arith.truncf %225 : vector<64x32xf32> to vector<64x32xbf16>
    %227 = vector.extract_strided_slice %40 {offsets = [64, 96], sizes = [64, 32], strides = [1, 1]} : vector<128x128xf32> to vector<64x32xf32>
    %228 = arith.truncf %227 : vector<64x32xf32> to vector<64x32xbf16>
    %cst_69 = arith.constant dense<0.000000e+00> : vector<64x64xf32>
    %229 = tpu.matmul %224, %226, %cst_69 {dimension_numbers = #tpu.dot_dimension_numbers<[1], [1], [0], [0], [0, 0, 1, 0], [], []>} : vector<64x32xbf16>, vector<64x32xbf16>, vector<64x64xf32> -> vector<64x64xf32>
    %cst_70 = arith.constant 0.176776692 : f32
    %230 = vector.broadcast %cst_70 : f32 to vector<64x64xf32>
    %231 = arith.mulf %229, %230 : vector<64x64xf32>
    %cst_71 = arith.constant dense<0xFF800000> : vector<64xf32>
    %232 = vector.multi_reduction <maximumf>, %231, %cst_71 [1] : vector<64x64xf32> to vector<64xf32>
    %233 = vector.shape_cast %232 : vector<64xf32> to vector<64x1xf32>
    %234 = vector.broadcast %233 : vector<64x1xf32> to vector<64x64xf32>
    %235 = arith.subf %231, %234 : vector<64x64xf32>
    %236 = math.exp %235 : vector<64x64xf32>
    %cst_72 = arith.constant dense<0.000000e+00> : vector<64xf32>
    %237 = vector.multi_reduction <add>, %236, %cst_72 [1] : vector<64x64xf32> to vector<64xf32>
    %238 = vector.shape_cast %237 : vector<64xf32> to vector<64x1xf32>
    %239 = arith.truncf %236 : vector<64x64xf32> to vector<64x64xbf16>
    %cst_73 = arith.constant dense<0.000000e+00> : vector<64x32xf32>
    %240 = tpu.matmul %239, %228, %cst_73 {dimension_numbers = #tpu.dot_dimension_numbers<[1], [0], [0], [1], [0, 0, 1, 1], [], []>} : vector<64x64xbf16>, vector<64x32xbf16>, vector<64x32xf32> -> vector<64x32xf32>
    %241 = tpu.reciprocal %238 {approx = true} : vector<64x1xf32> -> vector<64x1xf32>
    %242 = vector.broadcast %241 : vector<64x1xf32> to vector<64x32xf32>
    %243 = arith.mulf %240, %242 : vector<64x32xf32>
    %244 = arith.truncf %243 : vector<64x32xf32> to vector<64x32xbf16>
    %245 = vector.extract_strided_slice %42 {offsets = [96, 0], sizes = [32, 128], strides = [1, 1]} : vector<128x128xbf16> to vector<32x128xbf16>
    %cst_74 = arith.constant dense<0.000000e+00> : vector<64x128xf32>
    %246 = tpu.matmul %244, %245, %cst_74 {dimension_numbers = #tpu.dot_dimension_numbers<[1], [0], [0], [1], [0, 0, 1, 1], [], []>} : vector<64x32xbf16>, vector<32x128xbf16>, vector<64x128xf32> -> vector<64x128xf32>
    %247 = arith.addf %222, %246 : vector<64x128xf32>
    %248 = vector.extract_strided_slice %3 {offsets = [64, 0], sizes = [64, 128], strides = [1, 1]} : vector<128x128xf32> to vector<64x128xf32>
    %249 = arith.addf %248, %247 : vector<64x128xf32>
    %c0_75 = arith.constant 0 : index
    %c0_76 = arith.constant 0 : index
    %c0_77 = arith.constant 0 : index
    %250 = vector.load %arg7[%c0_75, %c0_76, %c0_77] : memref<1x1x128xf32, #tpu.memory_space<vmem>>, vector<1x1x128xf32>
    %251 = vector.shape_cast %250 : vector<1x1x128xf32> to vector<1x128xf32>
    %252 = vector.broadcast %251 : vector<1x128xf32> to vector<64x128xf32>
    %253 = arith.addf %249, %252 : vector<64x128xf32>
    %c64 = arith.constant 64 : index
    %c0_78 = arith.constant 0 : index
    %254 = vector.load %arg14[%c64, %c0_78] : memref<128x128xf32, #tpu.memory_space<vmem>>, vector<64x128xf32>
    tpu.vector_store %arg14[%c64, %c0_78], %253 {strides = array<i32>} : memref<128x128xf32, #tpu.memory_space<vmem>>, vector<64x128xf32>,
    %c0_79 = arith.constant 0 : index
    %c0_80 = arith.constant 0 : index
    %255 = vector.load %arg14[%c0_79, %c0_80] : memref<128x128xf32, #tpu.memory_space<vmem>>, vector<128x128xf32>
    %c0_81 = arith.constant 0 : index
    %c0_82 = arith.constant 0 : index
    %c0_83 = arith.constant 0 : index
    %256 = vector.load %arg8[%c0_81, %c0_82, %c0_83] : memref<1x1x128xf32, #tpu.memory_space<vmem>>, vector<1x1x128xf32>
    %257 = vector.shape_cast %256 : vector<1x1x128xf32> to vector<1x128xf32>
    %c0_84 = arith.constant 0 : index
    %c0_85 = arith.constant 0 : index
    %c0_86 = arith.constant 0 : index
    %258 = vector.load %arg9[%c0_84, %c0_85, %c0_86] : memref<1x1x128xf32, #tpu.memory_space<vmem>>, vector<1x1x128xf32>
    %259 = vector.shape_cast %258 : vector<1x1x128xf32> to vector<1x128xf32>
    %cst_87 = arith.constant dense<0.000000e+00> : vector<128xf32>
    %260 = vector.multi_reduction <add>, %255, %cst_87 [1] : vector<128x128xf32> to vector<128xf32>
    %261 = vector.shape_cast %260 : vector<128xf32> to vector<128x1xf32>
    %cst_88 = arith.constant 1.280000e+02 : f32
    %262 = vector.broadcast %cst_88 : f32 to vector<128x1xf32>
    %263 = arith.divf %261, %262 : vector<128x1xf32>
    %264 = vector.broadcast %263 : vector<128x1xf32> to vector<128x128xf32>
    %265 = arith.subf %255, %264 : vector<128x128xf32>
    %266 = arith.mulf %265, %265 : vector<128x128xf32>
    %cst_89 = arith.constant dense<0.000000e+00> : vector<128xf32>
    %267 = vector.multi_reduction <add>, %266, %cst_89 [1] : vector<128x128xf32> to vector<128xf32>
    %268 = vector.shape_cast %267 : vector<128xf32> to vector<128x1xf32>
    %cst_90 = arith.constant 1.280000e+02 : f32
    %269 = vector.broadcast %cst_90 : f32 to vector<128x1xf32>
    %270 = arith.divf %268, %269 : vector<128x1xf32>
    %271 = vector.broadcast %263 : vector<128x1xf32> to vector<128x128xf32>
    %272 = arith.subf %255, %271 : vector<128x128xf32>
    %cst_91 = arith.constant 9.99999974E-6 : f32
    %273 = vector.broadcast %cst_91 : f32 to vector<128x1xf32>
    %274 = arith.addf %270, %273 : vector<128x1xf32>
    %275 = math.rsqrt %274 : vector<128x1xf32>
    %276 = vector.broadcast %275 : vector<128x1xf32> to vector<128x128xf32>
    %277 = arith.mulf %272, %276 : vector<128x128xf32>
    %278 = vector.broadcast %257 : vector<1x128xf32> to vector<128x128xf32>
    %279 = arith.mulf %277, %278 : vector<128x128xf32>
    %280 = vector.broadcast %259 : vector<1x128xf32> to vector<128x128xf32>
    %281 = arith.addf %279, %280 : vector<128x128xf32>
    %282 = arith.truncf %281 : vector<128x128xf32> to vector<128x128xbf16>
    %c0_92 = arith.constant 0 : index
    %c0_93 = arith.constant 0 : index
    %c0_94 = arith.constant 0 : index
    %283 = vector.load %arg10[%c0_92, %c0_93, %c0_94] : memref<1x128x128xbf16, #tpu.memory_space<vmem>>, vector<1x128x128xbf16>
    %284 = vector.shape_cast %283 : vector<1x128x128xbf16> to vector<128x128xbf16>
    %cst_95 = arith.constant dense<0.000000e+00> : vector<128x128xf32>
    %285 = tpu.matmul %282, %284, %cst_95 {dimension_numbers = #tpu.dot_dimension_numbers<[1], [0], [0], [1], [0, 0, 1, 1], [], []>} : vector<128x128xbf16>, vector<128x128xbf16>, vector<128x128xf32> -> vector<128x128xf32>
    %c0_96 = arith.constant 0 : index
    %c0_97 = arith.constant 0 : index
    %c0_98 = arith.constant 0 : index
    %286 = vector.load %arg11[%c0_96, %c0_97, %c0_98] : memref<1x1x128xf32, #tpu.memory_space<vmem>>, vector<1x1x128xf32>
    %287 = vector.shape_cast %286 : vector<1x1x128xf32> to vector<1x128xf32>
    %288 = vector.broadcast %287 : vector<1x128xf32> to vector<128x128xf32>
    %289 = arith.addf %285, %288 : vector<128x128xf32>
    %cst_99 = arith.constant 5.000000e-01 : f32
    %290 = vector.broadcast %cst_99 : f32 to vector<128x128xf32>
    %291 = arith.mulf %290, %289 : vector<128x128xf32>
    %cst_100 = arith.constant 4.471500e-02 : f32
    %292 = vector.broadcast %cst_100 : f32 to vector<128x128xf32>
    %293 = arith.mulf %292, %289 : vector<128x128xf32>
    %294 = arith.mulf %293, %289 : vector<128x128xf32>
    %295 = arith.mulf %294, %289 : vector<128x128xf32>
    %296 = arith.addf %289, %295 : vector<128x128xf32>
    %cst_101 = arith.constant 0.797884583 : f32
    %297 = vector.broadcast %cst_101 : f32 to vector<128x128xf32>
    %298 = arith.mulf %297, %296 : vector<128x128xf32>
    %299 = math.tanh %298 : vector<128x128xf32>
    %cst_102 = arith.constant 1.000000e+00 : f32
    %300 = vector.broadcast %cst_102 : f32 to vector<128x128xf32>
    %301 = arith.addf %300, %299 : vector<128x128xf32>
    %302 = arith.mulf %291, %301 : vector<128x128xf32>
    %303 = arith.truncf %302 : vector<128x128xf32> to vector<128x128xbf16>
    %c0_103 = arith.constant 0 : index
    %c0_104 = arith.constant 0 : index
    %c0_105 = arith.constant 0 : index
    %304 = vector.load %arg12[%c0_103, %c0_104, %c0_105] : memref<1x128x128xbf16, #tpu.memory_space<vmem>>, vector<1x128x128xbf16>
    %305 = vector.shape_cast %304 : vector<1x128x128xbf16> to vector<128x128xbf16>
    %cst_106 = arith.constant dense<0.000000e+00> : vector<128x128xf32>
    %306 = tpu.matmul %303, %305, %cst_106 {dimension_numbers = #tpu.dot_dimension_numbers<[1], [0], [0], [1], [0, 0, 1, 1], [], []>} : vector<128x128xbf16>, vector<128x128xbf16>, vector<128x128xf32> -> vector<128x128xf32>
    %307 = arith.addf %255, %306 : vector<128x128xf32>
    %c0_107 = arith.constant 0 : index
    %c0_108 = arith.constant 0 : index
    %c0_109 = arith.constant 0 : index
    %308 = vector.load %arg13[%c0_107, %c0_108, %c0_109] : memref<1x1x128xf32, #tpu.memory_space<vmem>>, vector<1x1x128xf32>
    %309 = vector.shape_cast %308 : vector<1x1x128xf32> to vector<1x128xf32>
    %310 = vector.broadcast %309 : vector<1x128xf32> to vector<128x128xf32>
    %311 = arith.addf %307, %310 : vector<128x128xf32>
    %c0_110 = arith.constant 0 : index
    %c0_111 = arith.constant 0 : index
    %312 = vector.load %arg14[%c0_110, %c0_111] : memref<128x128xf32, #tpu.memory_space<vmem>>, vector<128x128xf32>
    tpu.vector_store %arg14[%c0_110, %c0_111], %311 {strides = array<i32>} : memref<128x128xf32, #tpu.memory_space<vmem>>, vector<128x128xf32>,
    return
  }
  func.func @transform_0(%arg0: i32) -> (i32, i32) {
    %c0_i32 = arith.constant 0 : i32
    %c0_i32_0 = arith.constant 0 : i32
    %c0_i32_1 = arith.constant 0 : i32
    return %c0_i32, %c0_i32_0 : i32, i32
  }
  func.func @transform_1(%arg0: i32) -> (i32, i32, i32) {
    %c0_i32 = arith.constant 0 : i32
    %c0_i32_0 = arith.constant 0 : i32
    %c0_i32_1 = arith.constant 0 : i32
    return %arg0, %c0_i32, %c0_i32_0 : i32, i32, i32
  }
  func.func @transform_2(%arg0: i32) -> (i32, i32, i32) {
    %c0_i32 = arith.constant 0 : i32
    %c0_i32_0 = arith.constant 0 : i32
    %c0_i32_1 = arith.constant 0 : i32
    return %arg0, %c0_i32, %c0_i32_0 : i32, i32, i32
  }
  func.func @transform_3(%arg0: i32) -> (i32, i32, i32) {
    %c0_i32 = arith.constant 0 : i32
    %c0_i32_0 = arith.constant 0 : i32
    %c0_i32_1 = arith.constant 0 : i32
    return %arg0, %c0_i32, %c0_i32_0 : i32, i32, i32
  }
  func.func @transform_4(%arg0: i32) -> (i32, i32, i32) {
    %c0_i32 = arith.constant 0 : i32
    %c0_i32_0 = arith.constant 0 : i32
    %c0_i32_1 = arith.constant 0 : i32
    return %arg0, %c0_i32, %c0_i32_0 : i32, i32, i32
  }
  func.func @transform_5(%arg0: i32) -> (i32, i32, i32) {
    %c0_i32 = arith.constant 0 : i32
    %c0_i32_0 = arith.constant 0 : i32
    %c0_i32_1 = arith.constant 0 : i32
    return %arg0, %c0_i32, %c0_i32_0 : i32, i32, i32
  }
  func.func @transform_6(%arg0: i32) -> (i32, i32, i32) {
    %c0_i32 = arith.constant 0 : i32
    %c0_i32_0 = arith.constant 0 : i32
    %c0_i32_1 = arith.constant 0 : i32
    return %arg0, %c0_i32, %c0_i32_0 : i32, i32, i32
  }
  func.func @transform_7(%arg0: i32) -> (i32, i32, i32) {
    %c0_i32 = arith.constant 0 : i32
    %c0_i32_0 = arith.constant 0 : i32
    %c0_i32_1 = arith.constant 0 : i32
    return %arg0, %c0_i32, %c0_i32_0 : i32, i32, i32
  }
  func.func @transform_8(%arg0: i32) -> (i32, i32, i32) {
    %c0_i32 = arith.constant 0 : i32
    %c0_i32_0 = arith.constant 0 : i32
    %c0_i32_1 = arith.constant 0 : i32
    return %arg0, %c0_i32, %c0_i32_0 : i32, i32, i32
  }
  func.func @transform_9(%arg0: i32) -> (i32, i32, i32) {
    %c0_i32 = arith.constant 0 : i32
    %c0_i32_0 = arith.constant 0 : i32
    %c0_i32_1 = arith.constant 0 : i32
    return %arg0, %c0_i32, %c0_i32_0 : i32, i32, i32
  }
  func.func @transform_10(%arg0: i32) -> (i32, i32, i32) {
    %c0_i32 = arith.constant 0 : i32
    %c0_i32_0 = arith.constant 0 : i32
    %c0_i32_1 = arith.constant 0 : i32
    return %arg0, %c0_i32, %c0_i32_0 : i32, i32, i32
  }
  func.func @transform_11(%arg0: i32) -> (i32, i32, i32) {
    %c0_i32 = arith.constant 0 : i32
    %c0_i32_0 = arith.constant 0 : i32
    %c0_i32_1 = arith.constant 0 : i32
    return %arg0, %c0_i32, %c0_i32_0 : i32, i32, i32
  }
  func.func @transform_12(%arg0: i32) -> (i32, i32, i32) {
    %c0_i32 = arith.constant 0 : i32
    %c0_i32_0 = arith.constant 0 : i32
    %c0_i32_1 = arith.constant 0 : i32
    return %arg0, %c0_i32, %c0_i32_0 : i32, i32, i32
  }
  func.func @transform_13(%arg0: i32) -> (i32, i32) {
    %c0_i32 = arith.constant 0 : i32
    %c0_i32_0 = arith.constant 0 : i32
    %c0_i32_1 = arith.constant 0 : i32
    return %c0_i32, %c0_i32_0 : i32, i32
  }
}

</mosaic_0001>

<llo_original>
// kernel: tpu_custom_call.1
$region0: #{tpu_custom_call.1}
  #allocation0 [shape = 'u32[]', space=smem, size = 0x4, offset = 0x4, fixed_abs, tag = 'smem constant byte address 0x4 - core index']
  #allocation1 [shape = 'u32[144,128]{1,0:T(1,128)}', space=vmem, size = 0x12000, scoped, tag = 'internal scratch']
  %s0 = inlined_call_operand.hbm [shape: f32[128,128], index: 0, kind: input, shape index: {}]
  %s1 = inlined_call_operand.vmem [shape: f32[2,1,128], index: 1, kind: input, shape index: {}]
  %s2 = inlined_call_operand.vmem [shape: f32[2,1,128], index: 2, kind: input, shape index: {}]
  %s3 = inlined_call_operand.hbm [shape: bf16[2,128,384], index: 3, kind: input, shape index: {}]
  %s4 = inlined_call_operand.vmem [shape: f32[2,1,384], index: 4, kind: input, shape index: {}]
  %s5 = inlined_call_operand.hbm [shape: bf16[2,128,128], index: 5, kind: input, shape index: {}]
  %s6 = inlined_call_operand.vmem [shape: f32[2,1,128], index: 6, kind: input, shape index: {}]
  %s7 = inlined_call_operand.vmem [shape: f32[2,1,128], index: 7, kind: input, shape index: {}]
  %s8 = inlined_call_operand.vmem [shape: f32[2,1,128], index: 8, kind: input, shape index: {}]
  %s9 = inlined_call_operand.hbm [shape: bf16[2,128,128], index: 9, kind: input, shape index: {}]
  %s10 = inlined_call_operand.vmem [shape: f32[2,1,128], index: 10, kind: input, shape index: {}]
  %s11 = inlined_call_operand.hbm [shape: bf16[2,128,128], index: 11, kind: input, shape index: {}]
  %s12 = inlined_call_operand.vmem [shape: f32[2,1,128], index: 12, kind: input, shape index: {}]
  %s13 = inlined_call_operand.hbm [shape: f32[128,128], index: 13, kind: output, shape index: {}]
  %s14 = sld [smem:[#allocation0]]
  $region109: #{tpu_custom_call.1} parent=0
    _
  %s16 = ssub.s32 1, %s14
  %s17 = scalar_select 0, %s16, %s14
  $region1: #{tpu_custom_call.1} parent=0
    #allocation2 [shape = 'u8[65536]{0}', space=vmem, size = 0x10000, scoped, tag = 'input window, operand 0, single buffered']
    #allocation3 [shape = 's32[2]{0}', space=sflag, size = 0x8, scoped, tag = 'scoped memory for tpu_custom_call.1']
    #allocation4 [shape = 's32[2]{0}', space=sflag, size = 0x8, scoped, tag = 'scoped memory for tpu_custom_call.1']
    #allocation5 [shape = 'u8[196608]{0}', space=vmem, size = 0x30000, scoped, tag = 'input window, operand 3']
    #allocation6 [shape = 's32[2]{0}', space=sflag, size = 0x8, scoped, tag = 'scoped memory for tpu_custom_call.1']
    #allocation7 [shape = 'u8[65536]{0}', space=vmem, size = 0x10000, scoped, tag = 'input window, operand 5']
    #allocation8 [shape = 'u8[65536]{0}', space=vmem, size = 0x10000, scoped, tag = 'input window, operand 9']
    #allocation9 [shape = 's32[2]{0}', space=sflag, size = 0x8, scoped, tag = 'scoped memory for tpu_custom_call.1']
    #allocation10 [shape = 'u8[65536]{0}', space=vmem, size = 0x10000, scoped, tag = 'input window, operand 11']
    #allocation11 [shape = 'u8[65536]{0}', space=vmem, size = 0x10000, scoped, tag = 'output window, operand 0, single buffered']
    %18 = vsyncpa [#allocation3], 0
    %19 = vsyncpa [#allocation6], 0
    %s20 = scalar_lea.sflag [#allocation6], 1
    %21 = vsyncpa %s20, 0
    %22 = vsyncpa [#allocation9], 0
    %s23 = scalar_lea.sflag [#allocation9], 1
    %24 = vsyncpa %s23, 0
    %25 = vsyncpa [#allocation4], 0
    loop: start=0, step=1, limit=4
    $region2: #{tpu_custom_call.1} parent=1 // loop_pre_header
      _
    $region3: #{tpu_custom_call.1} parent=1 // loop_header
      %s27 = sphi 0, %s31
      %p28 = scmp.ge.s32.totalorder %s27, 4
      %s35 = sphi 0, %s35
      %s37 = sphi 0, %s35
      %s38 = sphi 0, %s37
      %s52 = sphi 0, %s38
      %s58 = sphi 0, %s60
      %s61 = sphi 0, %s58
      %s62 = sphi 0, %s61
      %s78 = sphi 0, %s62
      %s84 = sphi 0, %s86
      %s87 = sphi 0, %s84
      %s88 = sphi 0, %s87
      %s104 = sphi 0, %s88
      %s110 = sphi 0, %s112
      %s113 = sphi 0, %s110
      %s114 = sphi 0, %s113
      %s130 = sphi 0, %s114
      %s136 = sphi 0, %s138
      %s139 = sphi 0, %s136
      %s140 = sphi 0, %s139
      %s156 = sphi 0, %s140
      %s162 = sphi 0, %s164
      %s165 = sphi 0, %s162
      %s166 = sphi 0, %s165
      %s182 = sphi 0, %s166
      %s188 = sphi 0, %s190
      %s191 = sphi 0, %s188
      %s192 = sphi 0, %s191
      %s208 = sphi 0, %s192
      %s214 = sphi 0, %s216
      %s217 = sphi 0, %s214
      %s218 = sphi 0, %s217
      %s234 = sphi 0, %s218
      %s240 = sphi 0, %s242
      %s243 = sphi 0, %s240
      %s244 = sphi 0, %s243
      %s260 = sphi 0, %s244
      %s266 = sphi 0, %s268
      %s269 = sphi 0, %s266
      %s270 = sphi 0, %s269
      %s286 = sphi 0, %s270
      %s292 = sphi 0, %s294
      %s295 = sphi 0, %s292
      %s296 = sphi 0, %s295
      %s312 = sphi 0, %s296
      %s318 = sphi 0, %s320
      %s321 = sphi 0, %s318
      %s322 = sphi 0, %s321
      %s338 = sphi 0, %s322
      %s344 = sphi 0, %s346
      %s347 = sphi 0, %s344
      %s348 = sphi 0, %s347
      %s364 = sphi 0, %s348
      %s368 = sphi 0, %s368
      %s370 = sphi 0, %s368
      %s371 = sphi 0, %s370
      %s385 = sphi 0, %s371
    $region4: #{tpu_custom_call.1} parent=1 // loop_header_branch
      %30 = sbr.rel (%p28) target = $region8
    $region5: #{tpu_custom_call.1} parent=1 // loop_body
      %s32 = ssub.s32 %s27, 1
      %s33 = ssub.s32 %s27, 2
      %s34 = sadd.s32 %s27, 1
      %s36 = sadd.s32 %s35, 1
      %p39 = scmp.eq.s32.totalorder %s27, 1
      %p40 = scmp.ne.s32.totalorder %s35, %s37
      %p41 = scmp.eq.s32.totalorder %s27, 0
      %p42 = por %p40, %p41
      %p43 = scmp.ne.s32.totalorder %s35, %s37
      %p44 = scmp.eq.s32.totalorder %s32, 1
      %p45 = por %p43, %p44
      %p46 = scmp.ne.s32.totalorder %s37, %s38
      %p47 = scmp.eq.s32.totalorder %s32, 0
      %p48 = por %p46, %p47
      %p49 = scmp.ne.s32.totalorder %s37, %s38
      %p50 = scmp.eq.s32.totalorder %s33, 1
      %p51 = por %p49, %p50
      %p53 = scmp.ne.s32.totalorder %s38, %s52
      %p54 = scmp.eq.s32.totalorder %s33, 0
      %p55 = por %p53, %p54
      %s56 = ssub.s32 %s27, %s34
      %p57 = scmp.eq.s32.totalorder %s56, 0
      %s59 = sadd.s32 %s58, 1
      %s60 = scalar_select %p57, %s58, %s59
      %p63 = pneg %p57
      %p64 = scmp.eq.s32.totalorder %s27, 1
      %p65 = por %p63, %p64
      %p66 = scmp.ne.s32.totalorder %s58, %s61
      %p67 = scmp.eq.s32.totalorder %s27, 0
      %p68 = por %p66, %p67
      %p69 = scmp.ne.s32.totalorder %s58, %s61
      %p70 = scmp.eq.s32.totalorder %s32, 1
      %p71 = por %p69, %p70
      %p72 = scmp.ne.s32.totalorder %s61, %s62
      %p73 = scmp.eq.s32.totalorder %s32, 0
      %p74 = por %p72, %p73
      %p75 = scmp.ne.s32.totalorder %s61, %s62
      %p76 = scmp.eq.s32.totalorder %s33, 1
      %p77 = por %p75, %p76
      %p79 = scmp.ne.s32.totalorder %s62, %s78
      %p80 = scmp.eq.s32.totalorder %s33, 0
      %p81 = por %p79, %p80
      %s82 = ssub.s32 %s27, %s34
      %p83 = scmp.eq.s32.totalorder %s82, 0
      %s85 = sadd.s32 %s84, 1
      %s86 = scalar_select %p83, %s84, %s85
      %p89 = pneg %p83
      %p90 = scmp.eq.s32.totalorder %s27, 1
      %p91 = por %p89, %p90
      %p92 = scmp.ne.s32.totalorder %s84, %s87
      %p93 = scmp.eq.s32.totalorder %s27, 0
      %p94 = por %p92, %p93
      %p95 = scmp.ne.s32.totalorder %s84, %s87
      %p96 = scmp.eq.s32.totalorder %s32, 1
      %p97 = por %p95, %p96
      %p98 = scmp.ne.s32.totalorder %s87, %s88
      %p99 = scmp.eq.s32.totalorder %s32, 0
      %p100 = por %p98, %p99
      %p101 = scmp.ne.s32.totalorder %s87, %s88
      %p102 = scmp.eq.s32.totalorder %s33, 1
      %p103 = por %p101, %p102
      %p105 = scmp.ne.s32.totalorder %s88, %s104
      %p106 = scmp.eq.s32.totalorder %s33, 0
      %p107 = por %p105, %p106
      %s108 = ssub.s32 %s27, %s34
      %p109 = scmp.eq.s32.totalorder %s108, 0
      %s111 = sadd.s32 %s110, 1
      %s112 = scalar_select %p109, %s110, %s111
      %p115 = pneg %p109
      %p116 = scmp.eq.s32.totalorder %s27, 1
      %p117 = por %p115, %p116
      %p118 = scmp.ne.s32.totalorder %s110, %s113
      %p119 = scmp.eq.s32.totalorder %s27, 0
      %p120 = por %p118, %p119
      %p121 = scmp.ne.s32.totalorder %s110, %s113
      %p122 = scmp.eq.s32.totalorder %s32, 1
      %p123 = por %p121, %p122
      %p124 = scmp.ne.s32.totalorder %s113, %s114
      %p125 = scmp.eq.s32.totalorder %s32, 0
      %p126 = por %p124, %p125
      %p127 = scmp.ne.s32.totalorder %s113, %s114
      %p128 = scmp.eq.s32.totalorder %s33, 1
      %p129 = por %p127, %p128
      %p131 = scmp.ne.s32.totalorder %s114, %s130
      %p132 = scmp.eq.s32.totalorder %s33, 0
      %p133 = por %p131, %p132
      %s134 = ssub.s32 %s27, %s34
      %p135 = scmp.eq.s32.totalorder %s134, 0
      %s137 = sadd.s32 %s136, 1
      %s138 = scalar_select %p135, %s136, %s137
      %p141 = pneg %p135
      %p142 = scmp.eq.s32.totalorder %s27, 1
      %p143 = por %p141, %p142
      %p144 = scmp.ne.s32.totalorder %s136, %s139
      %p145 = scmp.eq.s32.totalorder %s27, 0
      %p146 = por %p144, %p145
      %p147 = scmp.ne.s32.totalorder %s136, %s139
      %p148 = scmp.eq.s32.totalorder %s32, 1
      %p149 = por %p147, %p148
      %p150 = scmp.ne.s32.totalorder %s139, %s140
      %p151 = scmp.eq.s32.totalorder %s32, 0
      %p152 = por %p150, %p151
      %p153 = scmp.ne.s32.totalorder %s139, %s140
      %p154 = scmp.eq.s32.totalorder %s33, 1
      %p155 = por %p153, %p154
      %p157 = scmp.ne.s32.totalorder %s140, %s156
      %p158 = scmp.eq.s32.totalorder %s33, 0
      %p159 = por %p157, %p158
      %s160 = ssub.s32 %s27, %s34
      %p161 = scmp.eq.s32.totalorder %s160, 0
      %s163 = sadd.s32 %s162, 1
      %s164 = scalar_select %p161, %s162, %s163
      %p167 = pneg %p161
      %p168 = scmp.eq.s32.totalorder %s27, 1
      %p169 = por %p167, %p168
      %p170 = scmp.ne.s32.totalorder %s162, %s165
      %p171 = scmp.eq.s32.totalorder %s27, 0
      %p172 = por %p170, %p171
      %p173 = scmp.ne.s32.totalorder %s162, %s165
      %p174 = scmp.eq.s32.totalorder %s32, 1
      %p175 = por %p173, %p174
      %p176 = scmp.ne.s32.totalorder %s165, %s166
      %p177 = scmp.eq.s32.totalorder %s32, 0
      %p178 = por %p176, %p177
      %p179 = scmp.ne.s32.totalorder %s165, %s166
      %p180 = scmp.eq.s32.totalorder %s33, 1
      %p181 = por %p179, %p180
      %p183 = scmp.ne.s32.totalorder %s166, %s182
      %p184 = scmp.eq.s32.totalorder %s33, 0
      %p185 = por %p183, %p184
      %s186 = ssub.s32 %s27, %s34
      %p187 = scmp.eq.s32.totalorder %s186, 0
      %s189 = sadd.s32 %s188, 1
      %s190 = scalar_select %p187, %s188, %s189
      %p193 = pneg %p187
      %p194 = scmp.eq.s32.totalorder %s27, 1
      %p195 = por %p193, %p194
      %p196 = scmp.ne.s32.totalorder %s188, %s191
      %p197 = scmp.eq.s32.totalorder %s27, 0
      %p198 = por %p196, %p197
      %p199 = scmp.ne.s32.totalorder %s188, %s191
      %p200 = scmp.eq.s32.totalorder %s32, 1
      %p201 = por %p199, %p200
      %p202 = scmp.ne.s32.totalorder %s191, %s192
      %p203 = scmp.eq.s32.totalorder %s32, 0
      %p204 = por %p202, %p203
      %p205 = scmp.ne.s32.totalorder %s191, %s192
      %p206 = scmp.eq.s32.totalorder %s33, 1
      %p207 = por %p205, %p206
      %p209 = scmp.ne.s32.totalorder %s192, %s208
      %p210 = scmp.eq.s32.totalorder %s33, 0
      %p211 = por %p209, %p210
      %s212 = ssub.s32 %s27, %s34
      %p213 = scmp.eq.s32.totalorder %s212, 0
      %s215 = sadd.s32 %s214, 1
      %s216 = scalar_select %p213, %s214, %s215
      %p219 = pneg %p213
      %p220 = scmp.eq.s32.totalorder %s27, 1
      %p221 = por %p219, %p220
      %p222 = scmp.ne.s32.totalorder %s214, %s217
      %p223 = scmp.eq.s32.totalorder %s27, 0
      %p224 = por %p222, %p223
      %p225 = scmp.ne.s32.totalorder %s214, %s217
      %p226 = scmp.eq.s32.totalorder %s32, 1
      %p227 = por %p225, %p226
      %p228 = scmp.ne.s32.totalorder %s217, %s218
      %p229 = scmp.eq.s32.totalorder %s32, 0
      %p230 = por %p228, %p229
      %p231 = scmp.ne.s32.totalorder %s217, %s218
      %p232 = scmp.eq.s32.totalorder %s33, 1
      %p233 = por %p231, %p232
      %p235 = scmp.ne.s32.totalorder %s218, %s234
      %p236 = scmp.eq.s32.totalorder %s33, 0
      %p237 = por %p235, %p236
      %s238 = ssub.s32 %s27, %s34
      %p239 = scmp.eq.s32.totalorder %s238, 0
      %s241 = sadd.s32 %s240, 1
      %s242 = scalar_select %p239, %s240, %s241
      %p245 = pneg %p239
      %p246 = scmp.eq.s32.totalorder %s27, 1
      %p247 = por %p245, %p246
      %p248 = scmp.ne.s32.totalorder %s240, %s243
      %p249 = scmp.eq.s32.totalorder %s27, 0
      %p250 = por %p248, %p249
      %p251 = scmp.ne.s32.totalorder %s240, %s243
      %p252 = scmp.eq.s32.totalorder %s32, 1
      %p253 = por %p251, %p252
      %p254 = scmp.ne.s32.totalorder %s243, %s244
      %p255 = scmp.eq.s32.totalorder %s32, 0
      %p256 = por %p254, %p255
      %p257 = scmp.ne.s32.totalorder %s243, %s244
      %p258 = scmp.eq.s32.totalorder %s33, 1
      %p259 = por %p257, %p258
      %p261 = scmp.ne.s32.totalorder %s244, %s260
      %p262 = scmp.eq.s32.totalorder %s33, 0
      %p263 = por %p261, %p262
      %s264 = ssub.s32 %s27, %s34
      %p265 = scmp.eq.s32.totalorder %s264, 0
      %s267 = sadd.s32 %s266, 1
      %s268 = scalar_select %p265, %s266, %s267
      %p271 = pneg %p265
      %p272 = scmp.eq.s32.totalorder %s27, 1
      %p273 = por %p271, %p272
      %p274 = scmp.ne.s32.totalorder %s266, %s269
      %p275 = scmp.eq.s32.totalorder %s27, 0
      %p276 = por %p274, %p275
      %p277 = scmp.ne.s32.totalorder %s266, %s269
      %p278 = scmp.eq.s32.totalorder %s32, 1
      %p279 = por %p277, %p278
      %p280 = scmp.ne.s32.totalorder %s269, %s270
      %p281 = scmp.eq.s32.totalorder %s32, 0
      %p282 = por %p280, %p281
      %p283 = scmp.ne.s32.totalorder %s269, %s270
      %p284 = scmp.eq.s32.totalorder %s33, 1
      %p285 = por %p283, %p284
      %p287 = scmp.ne.s32.totalorder %s270, %s286
      %p288 = scmp.eq.s32.totalorder %s33, 0
      %p289 = por %p287, %p288
      %s290 = ssub.s32 %s27, %s34
      %p291 = scmp.eq.s32.totalorder %s290, 0
      %s293 = sadd.s32 %s292, 1
      %s294 = scalar_select %p291, %s292, %s293
      %p297 = pneg %p291
      %p298 = scmp.eq.s32.totalorder %s27, 1
      %p299 = por %p297, %p298
      %p300 = scmp.ne.s32.totalorder %s292, %s295
      %p301 = scmp.eq.s32.totalorder %s27, 0
      %p302 = por %p300, %p301
      %p303 = scmp.ne.s32.totalorder %s292, %s295
      %p304 = scmp.eq.s32.totalorder %s32, 1
      %p305 = por %p303, %p304
      %p306 = scmp.ne.s32.totalorder %s295, %s296
      %p307 = scmp.eq.s32.totalorder %s32, 0
      %p308 = por %p306, %p307
      %p309 = scmp.ne.s32.totalorder %s295, %s296
      %p310 = scmp.eq.s32.totalorder %s33, 1
      %p311 = por %p309, %p310
      %p313 = scmp.ne.s32.totalorder %s296, %s312
      %p314 = scmp.eq.s32.totalorder %s33, 0
      %p315 = por %p313, %p314
      %s316 = ssub.s32 %s27, %s34
      %p317 = scmp.eq.s32.totalorder %s316, 0
      %s319 = sadd.s32 %s318, 1
      %s320 = scalar_select %p317, %s318, %s319
      %p323 = pneg %p317
      %p324 = scmp.eq.s32.totalorder %s27, 1
      %p325 = por %p323, %p324
      %p326 = scmp.ne.s32.totalorder %s318, %s321
      %p327 = scmp.eq.s32.totalorder %s27, 0
      %p328 = por %p326, %p327
      %p329 = scmp.ne.s32.totalorder %s318, %s321
      %p330 = scmp.eq.s32.totalorder %s32, 1
      %p331 = por %p329, %p330
      %p332 = scmp.ne.s32.totalorder %s321, %s322
      %p333 = scmp.eq.s32.totalorder %s32, 0
      %p334 = por %p332, %p333
      %p335 = scmp.ne.s32.totalorder %s321, %s322
      %p336 = scmp.eq.s32.totalorder %s33, 1
      %p337 = por %p335, %p336
      %p339 = scmp.ne.s32.totalorder %s322, %s338
      %p340 = scmp.eq.s32.totalorder %s33, 0
      %p341 = por %p339, %p340
      %s342 = ssub.s32 %s27, %s34
      %p343 = scmp.eq.s32.totalorder %s342, 0
      %s345 = sadd.s32 %s344, 1
      %s346 = scalar_select %p343, %s344, %s345
      %p349 = pneg %p343
      %p350 = scmp.eq.s32.totalorder %s27, 1
      %p351 = por %p349, %p350
      %p352 = scmp.ne.s32.totalorder %s344, %s347
      %p353 = scmp.eq.s32.totalorder %s27, 0
      %p354 = por %p352, %p353
      %p355 = scmp.ne.s32.totalorder %s344, %s347
      %p356 = scmp.eq.s32.totalorder %s32, 1
      %p357 = por %p355, %p356
      %p358 = scmp.ne.s32.totalorder %s347, %s348
      %p359 = scmp.eq.s32.totalorder %s32, 0
      %p360 = por %p358, %p359
      %p361 = scmp.ne.s32.totalorder %s347, %s348
      %p362 = scmp.eq.s32.totalorder %s33, 1
      %p363 = por %p361, %p362
      %p365 = scmp.ne.s32.totalorder %s348, %s364
      %p366 = scmp.eq.s32.totalorder %s33, 0
      %p367 = por %p365, %p366
      %s369 = sadd.s32 %s368, 1
      %p372 = scmp.eq.s32.totalorder %s27, 1
      %p373 = scmp.ne.s32.totalorder %s368, %s370
      %p374 = scmp.eq.s32.totalorder %s27, 0
      %p375 = por %p373, %p374
      %p376 = scmp.ne.s32.totalorder %s368, %s370
      %p377 = scmp.eq.s32.totalorder %s32, 1
      %p378 = por %p376, %p377
      %p379 = scmp.ne.s32.totalorder %s370, %s371
      %p380 = scmp.eq.s32.totalorder %s32, 0
      %p381 = por %p379, %p380
      %p382 = scmp.ne.s32.totalorder %s370, %s371
      %p383 = scmp.eq.s32.totalorder %s33, 1
      %p384 = por %p382, %p383
      %p386 = scmp.ne.s32.totalorder %s371, %s385
      %p387 = scmp.eq.s32.totalorder %s33, 0
      %p388 = por %p386, %p387
      %p389 = scmp.le.s32.totalorder 1, %s27
      %p390 = scmp.lt.s32.totalorder %s27, 3
      %p391 = pnand %p389, %p390
      %p392 = pneg %p391
      // Predicated region
      $region9: #{tpu_custom_call.1} parent=5 // pred_check
        _
      $region10: #{tpu_custom_call.1} parent=5 // pred_check_branch
        %394 = sbr.rel (%p391) target = $region12
      $region11: #{tpu_custom_call.1} parent=5 // pred_region
        %s395 = ssub.s32 %s27, 1
        // Predicated region
        $region13: #{tpu_custom_call.1} parent=11 // pred_check
          %p396 = pneg %p48
        $region14: #{tpu_custom_call.1} parent=11 // pred_check_branch
          %398 = sbr.rel (%p396) target = $region16
        $region15: #{tpu_custom_call.1} parent=11 // pred_region
          %s400 = ssub.s32 2048, 2048
          %401 = vsyncadd [#allocation3], %s400
          %s402 = sshll.u32 [#allocation2], 4
          %s403 = int_to_ptr.vmem [resolvable:$true] %s402
          %408 = dma.hbm_to_vmem [thread:$0]  %s0, 2048, %s403, [#allocation3], 128, 128, 8
        $region16: #{tpu_custom_call.1} parent=11 // pred_fallthru
          _
      $region12: #{tpu_custom_call.1} parent=5 // pred_fallthru
        _
      %p409 = scmp.lt.s32.totalorder %s27, 2
      // Predicated region
      $region17: #{tpu_custom_call.1} parent=5 // pred_check
        %p410 = pneg %p409
      $region18: #{tpu_custom_call.1} parent=5 // pred_check_branch
        %412 = sbr.rel (%p410) target = $region20
      $region19: #{tpu_custom_call.1} parent=5 // pred_region
        // Predicated region
        $region21: #{tpu_custom_call.1} parent=19 // pred_check
          %p413 = pneg %p68
        $region22: #{tpu_custom_call.1} parent=19 // pred_check_branch
          %415 = sbr.rel (%p413) target = $region24
        $region23: #{tpu_custom_call.1} parent=19 // pred_region
          %p416 = scmp.lt.s32.totalorder %s27, 1
          %s417 = scalar_select %p416, %s27, 1
          %s418 = scalar_lea.vmem %s1, %s417
        $region24: #{tpu_custom_call.1} parent=19 // pred_fallthru
          _
        // Predicated region
        $region25: #{tpu_custom_call.1} parent=19 // pred_check
          %p419 = pneg %p94
        $region26: #{tpu_custom_call.1} parent=19 // pred_check_branch
          %421 = sbr.rel (%p419) target = $region28
        $region27: #{tpu_custom_call.1} parent=19 // pred_region
          %p422 = scmp.lt.s32.totalorder %s27, 1
          %s423 = scalar_select %p422, %s27, 1
          %s424 = scalar_lea.vmem %s2, %s423
        $region28: #{tpu_custom_call.1} parent=19 // pred_fallthru
          _
        // Predicated region
        $region29: #{tpu_custom_call.1} parent=19 // pred_check
          %p425 = pneg %p120
        $region30: #{tpu_custom_call.1} parent=19 // pred_check_branch
          %427 = sbr.rel (%p425) target = $region32
        $region31: #{tpu_custom_call.1} parent=19 // pred_region
          %s428 = sand.u32 %s27, 1
          %s429 = scalar_lea.sflag [#allocation6], %s428
          %s430 = sand.u32 %s110, 1
          %s431 = smul.addr %s430, 192
          %s432 = scalar_lea.vmem [#allocation5], %s431
          %s434 = ssub.s32 3072, 3072
          %435 = vsyncadd %s429, %s434
          %s436 = smul.addr %s27, 48
          %s437 = smul.addr %s436, 64
          %s438 = scalar_lea.hbm %s3, %s437
          %s439 = sshll.u32 %s432, 4
          %s440 = int_to_ptr.vmem [resolvable:$true] %s439
          %445 = dma.hbm_to_vmem [thread:$0]  %s438, 3072, %s440, %s429, 192, 192, 12
        $region32: #{tpu_custom_call.1} parent=19 // pred_fallthru
          _
        // Predicated region
        $region33: #{tpu_custom_call.1} parent=19 // pred_check
          %p446 = pneg %p146
        $region34: #{tpu_custom_call.1} parent=19 // pred_check_branch
          %448 = sbr.rel (%p446) target = $region36
        $region35: #{tpu_custom_call.1} parent=19 // pred_region
          %p449 = scmp.lt.s32.totalorder %s27, 1
          %s450 = scalar_select %p449, %s27, 1
          %s451 = smul.addr %s450, 3
          %s452 = scalar_lea.vmem %s4, %s451
        $region36: #{tpu_custom_call.1} parent=19 // pred_fallthru
          _
        // Predicated region
        $region37: #{tpu_custom_call.1} parent=19 // pred_check
          %p453 = pneg %p172
        $region38: #{tpu_custom_call.1} parent=19 // pred_check_branch
          %455 = sbr.rel (%p453) target = $region40
        $region39: #{tpu_custom_call.1} parent=19 // pred_region
          %s456 = sand.u32 %s27, 1
          %s457 = scalar_lea.sflag [#allocation6], %s456
          %s458 = sand.u32 %s162, 1
          %s459 = smul.addr %s458, 64
          %s460 = scalar_lea.vmem [#allocation7], %s459
          %s462 = ssub.s32 1024, 1024
          %463 = vsyncadd %s457, %s462
          %s464 = smul.addr %s27, 16
          %s465 = smul.addr %s464, 64
          %s466 = scalar_lea.hbm %s5, %s465
          %s467 = sshll.u32 %s460, 4
          %s468 = int_to_ptr.vmem [resolvable:$true] %s467
          %473 = dma.hbm_to_vmem [thread:$0]  %s466, 1024, %s468, %s457, 64, 64, 4
        $region40: #{tpu_custom_call.1} parent=19 // pred_fallthru
          _
        // Predicated region
        $region41: #{tpu_custom_call.1} parent=19 // pred_check
          %p474 = pneg %p198
        $region42: #{tpu_custom_call.1} parent=19 // pred_check_branch
          %476 = sbr.rel (%p474) target = $region44
        $region43: #{tpu_custom_call.1} parent=19 // pred_region
          %p477 = scmp.lt.s32.totalorder %s27, 1
          %s478 = scalar_select %p477, %s27, 1
          %s479 = scalar_lea.vmem %s6, %s478
        $region44: #{tpu_custom_call.1} parent=19 // pred_fallthru
          _
        // Predicated region
        $region45: #{tpu_custom_call.1} parent=19 // pred_check
          %p480 = pneg %p224
        $region46: #{tpu_custom_call.1} parent=19 // pred_check_branch
          %482 = sbr.rel (%p480) target = $region48
        $region47: #{tpu_custom_call.1} parent=19 // pred_region
          %p483 = scmp.lt.s32.totalorder %s27, 1
          %s484 = scalar_select %p483, %s27, 1
          %s485 = scalar_lea.vmem %s7, %s484
        $region48: #{tpu_custom_call.1} parent=19 // pred_fallthru
          _
        // Predicated region
        $region49: #{tpu_custom_call.1} parent=19 // pred_check
          %p486 = pneg %p250
        $region50: #{tpu_custom_call.1} parent=19 // pred_check_branch
          %488 = sbr.rel (%p486) target = $region52
        $region51: #{tpu_custom_call.1} parent=19 // pred_region
          %p489 = scmp.lt.s32.totalorder %s27, 1
          %s490 = scalar_select %p489, %s27, 1
          %s491 = scalar_lea.vmem %s8, %s490
        $region52: #{tpu_custom_call.1} parent=19 // pred_fallthru
          _
        // Predicated region
        $region53: #{tpu_custom_call.1} parent=19 // pred_check
          %p492 = pneg %p276
        $region54: #{tpu_custom_call.1} parent=19 // pred_check_branch
          %494 = sbr.rel (%p492) target = $region56
        $region55: #{tpu_custom_call.1} parent=19 // pred_region
          %s495 = sand.u32 %s27, 1
          %s496 = scalar_lea.sflag [#allocation9], %s495
          %s497 = sand.u32 %s266, 1
          %s498 = smul.addr %s497, 64
          %s499 = scalar_lea.vmem [#allocation8], %s498
          %s501 = ssub.s32 1024, 1024
          %502 = vsyncadd %s496, %s501
          %s503 = smul.addr %s27, 16
          %s504 = smul.addr %s503, 64
          %s505 = scalar_lea.hbm %s9, %s504
          %s506 = sshll.u32 %s499, 4
          %s507 = int_to_ptr.vmem [resolvable:$true] %s506
          %512 = dma.hbm_to_vmem [thread:$0]  %s505, 1024, %s507, %s496, 64, 64, 4
        $region56: #{tpu_custom_call.1} parent=19 // pred_fallthru
          _
        // Predicated region
        $region57: #{tpu_custom_call.1} parent=19 // pred_check
          %p513 = pneg %p302
        $region58: #{tpu_custom_call.1} parent=19 // pred_check_branch
          %515 = sbr.rel (%p513) target = $region60
        $region59: #{tpu_custom_call.1} parent=19 // pred_region
          %p516 = scmp.lt.s32.totalorder %s27, 1
          %s517 = scalar_select %p516, %s27, 1
          %s518 = scalar_lea.vmem %s10, %s517
        $region60: #{tpu_custom_call.1} parent=19 // pred_fallthru
          _
        // Predicated region
        $region61: #{tpu_custom_call.1} parent=19 // pred_check
          %p519 = pneg %p328
        $region62: #{tpu_custom_call.1} parent=19 // pred_check_branch
          %521 = sbr.rel (%p519) target = $region64
        $region63: #{tpu_custom_call.1} parent=19 // pred_region
          %s522 = sand.u32 %s27, 1
          %s523 = scalar_lea.sflag [#allocation9], %s522
          %s524 = sand.u32 %s318, 1
          %s525 = smul.addr %s524, 64
          %s526 = scalar_lea.vmem [#allocation10], %s525
          %s528 = ssub.s32 1024, 1024
          %529 = vsyncadd %s523, %s528
          %s530 = smul.addr %s27, 16
          %s531 = smul.addr %s530, 64
          %s532 = scalar_lea.hbm %s11, %s531
          %s533 = sshll.u32 %s526, 4
          %s534 = int_to_ptr.vmem [resolvable:$true] %s533
          %539 = dma.hbm_to_vmem [thread:$0]  %s532, 1024, %s534, %s523, 64, 64, 4
        $region64: #{tpu_custom_call.1} parent=19 // pred_fallthru
          _
        // Predicated region
        $region65: #{tpu_custom_call.1} parent=19 // pred_check
          %p540 = pneg %p354
        $region66: #{tpu_custom_call.1} parent=19 // pred_check_branch
          %542 = sbr.rel (%p540) target = $region68
        $region67: #{tpu_custom_call.1} parent=19 // pred_region
          %p543 = scmp.lt.s32.totalorder %s27, 1
          %s544 = scalar_select %p543, %s27, 1
          %s545 = scalar_lea.vmem %s12, %s544
        $region68: #{tpu_custom_call.1} parent=19 // pred_fallthru
          _
      $region20: #{tpu_custom_call.1} parent=5 // pred_fallthru
        _
      %p546 = scmp.le.s32.totalorder 1, %s27
      %p547 = scmp.lt.s32.totalorder %s27, 3
      %p548 = pnand %p546, %p547
      %p549 = pneg %p548
      // Predicated region
      $region69: #{tpu_custom_call.1} parent=5 // pred_check
        _
      $region70: #{tpu_custom_call.1} parent=5 // pred_check_branch
        %551 = sbr.rel (%p548) target = $region72
      $region71: #{tpu_custom_call.1} parent=5 // pred_region
        %s552 = ssub.s32 %s27, 1
        // Predicated region
        $region73: #{tpu_custom_call.1} parent=71 // pred_check
          %p553 = pneg %p48
        $region74: #{tpu_custom_call.1} parent=71 // pred_check_branch
          %555 = sbr.rel (%p553) target = $region76
        $region75: #{tpu_custom_call.1} parent=71 // pred_region
          %556 = dma.done [#allocation3], 2048
        $region76: #{tpu_custom_call.1} parent=71 // pred_fallthru
          _
        %s557 = sand.u32 %s32, 1
        %s558 = scalar_lea.sflag [#allocation6], %s557
        %s559 = sand.u32 %s113, 1
        %s560 = smul.addr %s559, 192
        %s561 = scalar_lea.vmem [#allocation5], %s560
        // Predicated region
        $region77: #{tpu_custom_call.1} parent=71 // pred_check
          %p562 = pneg %p126
        $region78: #{tpu_custom_call.1} parent=71 // pred_check_branch
          %564 = sbr.rel (%p562) target = $region80
        $region79: #{tpu_custom_call.1} parent=71 // pred_region
          %565 = dma.done %s558, 3072
        $region80: #{tpu_custom_call.1} parent=71 // pred_fallthru
          _
        %s566 = sand.u32 %s32, 1
        %s567 = scalar_lea.sflag [#allocation6], %s566
        %s568 = sand.u32 %s165, 1
        %s569 = smul.addr %s568, 64
        %s570 = scalar_lea.vmem [#allocation7], %s569
        // Predicated region
        $region81: #{tpu_custom_call.1} parent=71 // pred_check
          %p571 = pneg %p178
        $region82: #{tpu_custom_call.1} parent=71 // pred_check_branch
          %573 = sbr.rel (%p571) target = $region84
        $region83: #{tpu_custom_call.1} parent=71 // pred_region
          %574 = dma.done %s567, 1024
        $region84: #{tpu_custom_call.1} parent=71 // pred_fallthru
          _
        %s575 = sand.u32 %s32, 1
        %s576 = scalar_lea.sflag [#allocation9], %s575
        %s577 = sand.u32 %s269, 1
        %s578 = smul.addr %s577, 64
        %s579 = scalar_lea.vmem [#allocation8], %s578
        // Predicated region
        $region85: #{tpu_custom_call.1} parent=71 // pred_check
          %p580 = pneg %p282
        $region86: #{tpu_custom_call.1} parent=71 // pred_check_branch
          %582 = sbr.rel (%p580) target = $region88
        $region87: #{tpu_custom_call.1} parent=71 // pred_region
          %583 = dma.done %s576, 1024
        $region88: #{tpu_custom_call.1} parent=71 // pred_fallthru
          _
        %s584 = sand.u32 %s32, 1
        %s585 = scalar_lea.sflag [#allocation9], %s584
        %s586 = sand.u32 %s321, 1
        %s587 = smul.addr %s586, 64
        %s588 = scalar_lea.vmem [#allocation10], %s587
        // Predicated region
        $region89: #{tpu_custom_call.1} parent=71 // pred_check
          %p589 = pneg %p334
        $region90: #{tpu_custom_call.1} parent=71 // pred_check_branch
          %591 = sbr.rel (%p589) target = $region92
        $region91: #{tpu_custom_call.1} parent=71 // pred_region
          %592 = dma.done %s585, 1024
        $region92: #{tpu_custom_call.1} parent=71 // pred_fallthru
          _
        %p593 = pneg %p48
        %p594 = pneg %p45
        %p595 = scmp.lt.s32.totalorder %s32, 1
        %s596 = scalar_select %p595, %s32, 1
        %s597 = scalar_lea.vmem %s1, %s596
        %p598 = pneg %p74
        %p599 = pneg %p71
        %p600 = scmp.lt.s32.totalorder %s32, 1
        %s601 = scalar_select %p600, %s32, 1
        %s602 = scalar_lea.vmem %s2, %s601
        %p603 = pneg %p100
        %p604 = pneg %p97
        %s605 = sand.u32 %s32, 1
        %s606 = scalar_lea.sflag [#allocation6], %s605
        %s607 = sand.u32 %s113, 1
        %s608 = smul.addr %s607, 192
        %s609 = scalar_lea.vmem [#allocation5], %s608
        %p610 = pneg %p126
        %p611 = pneg %p123
        %p612 = scmp.lt.s32.totalorder %s32, 1
        %s613 = scalar_select %p612, %s32, 1
        %s614 = smul.addr %s613, 3
        %s615 = scalar_lea.vmem %s4, %s614
        %p616 = pneg %p152
        %p617 = pneg %p149
        %s618 = sand.u32 %s32, 1
        %s619 = scalar_lea.sflag [#allocation6], %s618
        %s620 = sand.u32 %s165, 1
        %s621 = smul.addr %s620, 64
        %s622 = scalar_lea.vmem [#allocation7], %s621
        %p623 = pneg %p178
        %p624 = pneg %p175
        %p625 = scmp.lt.s32.totalorder %s32, 1
        %s626 = scalar_select %p625, %s32, 1
        %s627 = scalar_lea.vmem %s6, %s626
        %p628 = pneg %p204
        %p629 = pneg %p201
        %p630 = scmp.lt.s32.totalorder %s32, 1
        %s631 = scalar_select %p630, %s32, 1
        %s632 = scalar_lea.vmem %s7, %s631
        %p633 = pneg %p230
        %p634 = pneg %p227
        %p635 = scmp.lt.s32.totalorder %s32, 1
        %s636 = scalar_select %p635, %s32, 1
        %s637 = scalar_lea.vmem %s8, %s636
        %p638 = pneg %p256
        %p639 = pneg %p253
        %s640 = sand.u32 %s32, 1
        %s641 = scalar_lea.sflag [#allocation9], %s640
        %s642 = sand.u32 %s269, 1
        %s643 = smul.addr %s642, 64
        %s644 = scalar_lea.vmem [#allocation8], %s643
        %p645 = pneg %p282
        %p646 = pneg %p279
        %p647 = scmp.lt.s32.totalorder %s32, 1
        %s648 = scalar_select %p647, %s32, 1
        %s649 = scalar_lea.vmem %s10, %s648
        %p650 = pneg %p308
        %p651 = pneg %p305
        %s652 = sand.u32 %s32, 1
        %s653 = scalar_lea.sflag [#allocation9], %s652
        %s654 = sand.u32 %s321, 1
        %s655 = smul.addr %s654, 64
        %s656 = scalar_lea.vmem [#allocation10], %s655
        %p657 = pneg %p334
        %p658 = pneg %p331
        %p659 = scmp.lt.s32.totalorder %s32, 1
        %s660 = scalar_select %p659, %s32, 1
        %s661 = scalar_lea.vmem %s12, %s660
        %p662 = pneg %p360
        %p663 = pneg %p357
        %p664 = pneg %p381
        %p665 = pneg %p378
        %p666 = scmp.lt.s32.totalorder %s32, 1
        %s667 = scalar_select %p666, %s32, 1
        %s668 = scalar_lea.vmem %s1, %s667
        %p669 = scmp.lt.s32.totalorder %s32, 1
        %s670 = scalar_select %p669, %s32, 1
        %s671 = scalar_lea.vmem %s2, %s670
        %p672 = scmp.lt.s32.totalorder %s32, 1
        %s673 = scalar_select %p672, %s32, 1
        %s674 = smul.addr %s673, 3
        %s675 = scalar_lea.vmem %s4, %s674
        %p676 = scmp.lt.s32.totalorder %s32, 1
        %s677 = scalar_select %p676, %s32, 1
        %s678 = scalar_lea.vmem %s6, %s677
        %p679 = scmp.lt.s32.totalorder %s32, 1
        %s680 = scalar_select %p679, %s32, 1
        %s681 = scalar_lea.vmem %s7, %s680
        %p682 = scmp.lt.s32.totalorder %s32, 1
        %s683 = scalar_select %p682, %s32, 1
        %s684 = scalar_lea.vmem %s8, %s683
        %p685 = scmp.lt.s32.totalorder %s32, 1
        %s686 = scalar_select %p685, %s32, 1
        %s687 = scalar_lea.vmem %s10, %s686
        %p688 = scmp.lt.s32.totalorder %s32, 1
        %s689 = scalar_select %p688, %s32, 1
        %s690 = scalar_lea.vmem %s12, %s689
        %p692 = scmp.eq.s32.totalorder %s32, 0
        // Predicated region
        $region93: #{tpu_custom_call.1} parent=71 // pred_check
          %p693 = pneg %p692
        $region94: #{tpu_custom_call.1} parent=71 // pred_check_branch
          %695 = sbr.rel (%p693) target = $region96
        $region95: #{tpu_custom_call.1} parent=71 // pred_region
          %v696 = vld [vmem:[#allocation2] sm:$0xff]
          %v697 = vld [vmem:[#allocation2 + $0x8] sm:$0xff]
          %v698 = vld [vmem:[#allocation2 + $0x10] sm:$0xff]
          %v699 = vld [vmem:[#allocation2 + $0x18] sm:$0xff]
          %v700 = vld [vmem:[#allocation2 + $0x20] sm:$0xff]
          %v701 = vld [vmem:[#allocation2 + $0x28] sm:$0xff]
          %v702 = vld [vmem:[#allocation2 + $0x30] sm:$0xff]
          %v703 = vld [vmem:[#allocation2 + $0x38] sm:$0xff]
          %v704 = vld [vmem:[#allocation2 + $0x40] sm:$0xff]
          %v705 = vld [vmem:[#allocation2 + $0x48] sm:$0xff]
          %v706 = vld [vmem:[#allocation2 + $0x50] sm:$0xff]
          %v707 = vld [vmem:[#allocation2 + $0x58] sm:$0xff]
          %v708 = vld [vmem:[#allocation2 + $0x60] sm:$0xff]
          %v709 = vld [vmem:[#allocation2 + $0x68] sm:$0xff]
          %v710 = vld [vmem:[#allocation2 + $0x70] sm:$0xff]
          %v711 = vld [vmem:[#allocation2 + $0x78] sm:$0xff]
          %712 = vst [vmem:[#allocation11] sm:$0xff] %v696
          %713 = vst [vmem:[#allocation11 + $0x8] sm:$0xff] %v697
          %714 = vst [vmem:[#allocation11 + $0x10] sm:$0xff] %v698
          %715 = vst [vmem:[#allocation11 + $0x18] sm:$0xff] %v699
          %716 = vst [vmem:[#allocation11 + $0x20] sm:$0xff] %v700
          %717 = vst [vmem:[#allocation11 + $0x28] sm:$0xff] %v701
          %718 = vst [vmem:[#allocation11 + $0x30] sm:$0xff] %v702
          %719 = vst [vmem:[#allocation11 + $0x38] sm:$0xff] %v703
          %720 = vst [vmem:[#allocation11 + $0x40] sm:$0xff] %v704
          %721 = vst [vmem:[#allocation11 + $0x48] sm:$0xff] %v705
          %722 = vst [vmem:[#allocation11 + $0x50] sm:$0xff] %v706
          %723 = vst [vmem:[#allocation11 + $0x58] sm:$0xff] %v707
          %724 = vst [vmem:[#allocation11 + $0x60] sm:$0xff] %v708
          %725 = vst [vmem:[#allocation11 + $0x68] sm:$0xff] %v709
          %726 = vst [vmem:[#allocation11 + $0x70] sm:$0xff] %v710
          %727 = vst [vmem:[#allocation11 + $0x78] sm:$0xff] %v711
        $region96: #{tpu_custom_call.1} parent=71 // pred_fallthru
          _
        %v728 = vld [vmem:[#allocation11] sm:$0xff]
        %v729 = vld [vmem:[#allocation11 + $0x8] sm:$0xff]
        %v730 = vld [vmem:[#allocation11 + $0x10] sm:$0xff]
        %v731 = vld [vmem:[#allocation11 + $0x18] sm:$0xff]
        %v732 = vld [vmem:[#allocation11 + $0x20] sm:$0xff]
        %v733 = vld [vmem:[#allocation11 + $0x28] sm:$0xff]
        %v734 = vld [vmem:[#allocation11 + $0x30] sm:$0xff]
        %v735 = vld [vmem:[#allocation11 + $0x38] sm:$0xff]
        %v736 = vld [vmem:[#allocation11 + $0x40] sm:$0xff]
        %v737 = vld [vmem:[#allocation11 + $0x48] sm:$0xff]
        %v738 = vld [vmem:[#allocation11 + $0x50] sm:$0xff]
        %v739 = vld [vmem:[#allocation11 + $0x58] sm:$0xff]
        %v740 = vld [vmem:[#allocation11 + $0x60] sm:$0xff]
        %v741 = vld [vmem:[#allocation11 + $0x68] sm:$0xff]
        %v742 = vld [vmem:[#allocation11 + $0x70] sm:$0xff]
        %v743 = vld [vmem:[#allocation11 + $0x78] sm:$0xff]
        %v744 = vld [vmem:[%s668] sm:$0x1]
        %v745 = vld [vmem:[%s671] sm:$0x1]
        %746 = vadd.xlane.f32.xlu0 %v728
        %v747 = vpop.xlane.xlu0 %746
        %748 = vadd.xlane.f32.xlu0 %v729
        %v749 = vpop.xlane.xlu0 %748
        %750 = vadd.xlane.f32.xlu0 %v730
        %v751 = vpop.xlane.xlu0 %750
        %752 = vadd.xlane.f32.xlu0 %v731
        %v753 = vpop.xlane.xlu0 %752
        %754 = vadd.xlane.f32.xlu0 %v732
        %v755 = vpop.xlane.xlu0 %754
        %756 = vadd.xlane.f32.xlu0 %v733
        %v757 = vpop.xlane.xlu0 %756
        %758 = vadd.xlane.f32.xlu0 %v734
        %v759 = vpop.xlane.xlu0 %758
        %760 = vadd.xlane.f32.xlu0 %v735
        %v761 = vpop.xlane.xlu0 %760
        %762 = vadd.xlane.f32.xlu0 %v736
        %v763 = vpop.xlane.xlu0 %762
        %764 = vadd.xlane.f32.xlu0 %v737
        %v765 = vpop.xlane.xlu0 %764
        %766 = vadd.xlane.f32.xlu0 %v738
        %v767 = vpop.xlane.xlu0 %766
        %768 = vadd.xlane.f32.xlu0 %v739
        %v769 = vpop.xlane.xlu0 %768
        %770 = vadd.xlane.f32.xlu0 %v740
        %v771 = vpop.xlane.xlu0 %770
        %772 = vadd.xlane.f32.xlu0 %v741
        %v773 = vpop.xlane.xlu0 %772
        %774 = vadd.xlane.f32.xlu0 %v742
        %v775 = vpop.xlane.xlu0 %774
        %776 = vadd.xlane.f32.xlu0 %v743
        %v777 = vpop.xlane.xlu0 %776
        %v778 = vrcp.pop 128.0
        %v779 = vmul.f32 %v747, %v778
        %v780 = vmul.f32 %v749, %v778
        %v781 = vmul.f32 %v751, %v778
        %v782 = vmul.f32 %v753, %v778
        %v783 = vmul.f32 %v755, %v778
        %v784 = vmul.f32 %v757, %v778
        %v785 = vmul.f32 %v759, %v778
        %v786 = vmul.f32 %v761, %v778
        %v787 = vmul.f32 %v763, %v778
        %v788 = vmul.f32 %v765, %v778
        %v789 = vmul.f32 %v767, %v778
        %v790 = vmul.f32 %v769, %v778
        %v791 = vmul.f32 %v771, %v778
        %v792 = vmul.f32 %v773, %v778
        %v793 = vmul.f32 %v775, %v778
        %v794 = vmul.f32 %v777, %v778
        %v795 = vsub.f32 %v728, %v779
        %v796 = vsub.f32 %v729, %v780
        %v797 = vsub.f32 %v730, %v781
        %v798 = vsub.f32 %v731, %v782
        %v799 = vsub.f32 %v732, %v783
        %v800 = vsub.f32 %v733, %v784
        %v801 = vsub.f32 %v734, %v785
        %v802 = vsub.f32 %v735, %v786
        %v803 = vsub.f32 %v736, %v787
        %v804 = vsub.f32 %v737, %v788
        %v805 = vsub.f32 %v738, %v789
        %v806 = vsub.f32 %v739, %v790
        %v807 = vsub.f32 %v740, %v791
        %v808 = vsub.f32 %v741, %v792
        %v809 = vsub.f32 %v742, %v793
        %v810 = vsub.f32 %v743, %v794
        %v811 = vmul.f32 %v795, %v795
        %v812 = vmul.f32 %v796, %v796
        %v813 = vmul.f32 %v797, %v797
        %v814 = vmul.f32 %v798, %v798
        %v815 = vmul.f32 %v799, %v799
        %v816 = vmul.f32 %v800, %v800
        %v817 = vmul.f32 %v801, %v801
        %v818 = vmul.f32 %v802, %v802
        %v819 = vmul.f32 %v803, %v803
        %v820 = vmul.f32 %v804, %v804
        %v821 = vmul.f32 %v805, %v805
        %v822 = vmul.f32 %v806, %v806
        %v823 = vmul.f32 %v807, %v807
        %v824 = vmul.f32 %v808, %v808
        %v825 = vmul.f32 %v809, %v809
        %v826 = vmul.f32 %v810, %v810
        %827 = vadd.xlane.f32.xlu0 %v811
        %v828 = vpop.xlane.xlu0 %827
        %829 = vadd.xlane.f32.xlu0 %v812
        %v830 = vpop.xlane.xlu0 %829
        %831 = vadd.xlane.f32.xlu0 %v813
        %v832 = vpop.xlane.xlu0 %831
        %833 = vadd.xlane.f32.xlu0 %v814
        %v834 = vpop.xlane.xlu0 %833
        %835 = vadd.xlane.f32.xlu0 %v815
        %v836 = vpop.xlane.xlu0 %835
        %837 = vadd.xlane.f32.xlu0 %v816
        %v838 = vpop.xlane.xlu0 %837
        %839 = vadd.xlane.f32.xlu0 %v817
        %v840 = vpop.xlane.xlu0 %839
        %841 = vadd.xlane.f32.xlu0 %v818
        %v842 = vpop.xlane.xlu0 %841
        %843 = vadd.xlane.f32.xlu0 %v819
        %v844 = vpop.xlane.xlu0 %843
        %845 = vadd.xlane.f32.xlu0 %v820
        %v846 = vpop.xlane.xlu0 %845
        %847 = vadd.xlane.f32.xlu0 %v821
        %v848 = vpop.xlane.xlu0 %847
        %849 = vadd.xlane.f32.xlu0 %v822
        %v850 = vpop.xlane.xlu0 %849
        %851 = vadd.xlane.f32.xlu0 %v823
        %v852 = vpop.xlane.xlu0 %851
        %853 = vadd.xlane.f32.xlu0 %v824
        %v854 = vpop.xlane.xlu0 %853
        %855 = vadd.xlane.f32.xlu0 %v825
        %v856 = vpop.xlane.xlu0 %855
        %857 = vadd.xlane.f32.xlu0 %v826
        %v858 = vpop.xlane.xlu0 %857
        %v859 = vmul.f32 %v828, %v778
        %v860 = vmul.f32 %v830, %v778
        %v861 = vmul.f32 %v832, %v778
        %v862 = vmul.f32 %v834, %v778
        %v863 = vmul.f32 %v836, %v778
        %v864 = vmul.f32 %v838, %v778
        %v865 = vmul.f32 %v840, %v778
        %v866 = vmul.f32 %v842, %v778
        %v867 = vmul.f32 %v844, %v778
        %v868 = vmul.f32 %v846, %v778
        %v869 = vmul.f32 %v848, %v778
        %v870 = vmul.f32 %v850, %v778
        %v871 = vmul.f32 %v852, %v778
        %v872 = vmul.f32 %v854, %v778
        %v873 = vmul.f32 %v856, %v778
        %v874 = vmul.f32 %v858, %v778
        %v875 = vadd.f32 %v859, 1e-05
        %v876 = vadd.f32 %v860, 1e-05
        %v877 = vadd.f32 %v861, 1e-05
        %v878 = vadd.f32 %v862, 1e-05
        %v879 = vadd.f32 %v863, 1e-05
        %v880 = vadd.f32 %v864, 1e-05
        %v881 = vadd.f32 %v865, 1e-05
        %v882 = vadd.f32 %v866, 1e-05
        %v883 = vadd.f32 %v867, 1e-05
        %v884 = vadd.f32 %v868, 1e-05
        %v885 = vadd.f32 %v869, 1e-05
        %v886 = vadd.f32 %v870, 1e-05
        %v887 = vadd.f32 %v871, 1e-05
        %v888 = vadd.f32 %v872, 1e-05
        %v889 = vadd.f32 %v873, 1e-05
        %v890 = vadd.f32 %v874, 1e-05
        %v891 = vrsqrt.pop %v875
        %v892 = vrsqrt.pop %v876
        %v893 = vrsqrt.pop %v877
        %v894 = vrsqrt.pop %v878
        %v895 = vrsqrt.pop %v879
        %v896 = vrsqrt.pop %v880
        %v897 = vrsqrt.pop %v881
        %v898 = vrsqrt.pop %v882
        %v899 = vrsqrt.pop %v883
        %v900 = vrsqrt.pop %v884
        %v901 = vrsqrt.pop %v885
        %v902 = vrsqrt.pop %v886
        %v903 = vrsqrt.pop %v887
        %v904 = vrsqrt.pop %v888
        %v905 = vrsqrt.pop %v889
        %v906 = vrsqrt.pop %v890
        %v907 = vmul.f32 %v795, %v891
        %v908 = vmul.f32 %v796, %v892
        %v909 = vmul.f32 %v797, %v893
        %v910 = vmul.f32 %v798, %v894
        %v911 = vmul.f32 %v799, %v895
        %v912 = vmul.f32 %v800, %v896
        %v913 = vmul.f32 %v801, %v897
        %v914 = vmul.f32 %v802, %v898
        %v915 = vmul.f32 %v803, %v899
        %v916 = vmul.f32 %v804, %v900
        %v917 = vmul.f32 %v805, %v901
        %v918 = vmul.f32 %v806, %v902
        %v919 = vmul.f32 %v807, %v903
        %v920 = vmul.f32 %v808, %v904
        %v921 = vmul.f32 %v809, %v905
        %v922 = vmul.f32 %v810, %v906
        %v924 = vlaneseq
        %v925 = vshrl.u32 %v924, 7
        %v926 = vsub.s32 0, %v925
        %v927 = vrot.slane %v744, %v926
        %v929 = vmul.f32 %v907, %v927
        %v930 = vmul.f32 %v908, %v927
        %v931 = vmul.f32 %v909, %v927
        %v932 = vmul.f32 %v910, %v927
        %v933 = vmul.f32 %v911, %v927
        %v934 = vmul.f32 %v912, %v927
        %v935 = vmul.f32 %v913, %v927
        %v936 = vmul.f32 %v914, %v927
        %v937 = vmul.f32 %v915, %v927
        %v938 = vmul.f32 %v916, %v927
        %v939 = vmul.f32 %v917, %v927
        %v940 = vmul.f32 %v918, %v927
        %v941 = vmul.f32 %v919, %v927
        %v942 = vmul.f32 %v920, %v927
        %v943 = vmul.f32 %v921, %v927
        %v944 = vmul.f32 %v922, %v927
        %v946 = vlaneseq
        %v947 = vshrl.u32 %v946, 7
        %v948 = vsub.s32 0, %v947
        %v949 = vrot.slane %v745, %v948
        %v951 = vadd.f32 %v929, %v949
        %v952 = vadd.f32 %v930, %v949
        %v953 = vadd.f32 %v931, %v949
        %v954 = vadd.f32 %v932, %v949
        %v955 = vadd.f32 %v933, %v949
        %v956 = vadd.f32 %v934, %v949
        %v957 = vadd.f32 %v935, %v949
        %v958 = vadd.f32 %v936, %v949
        %v959 = vadd.f32 %v937, %v949
        %v960 = vadd.f32 %v938, %v949
        %v961 = vadd.f32 %v939, %v949
        %v962 = vadd.f32 %v940, %v949
        %v963 = vadd.f32 %v941, %v949
        %v964 = vadd.f32 %v942, %v949
        %v965 = vadd.f32 %v943, %v949
        %v966 = vadd.f32 %v944, %v949
        %v967 = vpack.c.bf16 %v952, %v951
        %v968 = vpack.c.bf16 %v954, %v953
        %v969 = vpack.c.bf16 %v956, %v955
        %v970 = vpack.c.bf16 %v958, %v957
        %v971 = vpack.c.bf16 %v960, %v959
        %v972 = vpack.c.bf16 %v962, %v961
        %v973 = vpack.c.bf16 %v964, %v963
        %v974 = vpack.c.bf16 %v966, %v965
        %v975 = vld [vmem:[%s561] sm:$0xff]
        %v976 = vld [vmem:[%s561 + $0x8] sm:$0xf]
        %v977 = vld [vmem:[%s561 + $0xc] sm:$0xff]
        %v978 = vld [vmem:[%s561 + $0x14] sm:$0xf]
        %v979 = vld [vmem:[%s561 + $0x18] sm:$0xff]
        %v980 = vld [vmem:[%s561 + $0x20] sm:$0xf]
        %v981 = vld [vmem:[%s561 + $0x24] sm:$0xff]
        %v982 = vld [vmem:[%s561 + $0x2c] sm:$0xf]
        %v983 = vld [vmem:[%s561 + $0x30] sm:$0xff]
        %v984 = vld [vmem:[%s561 + $0x38] sm:$0xf]
        %v985 = vld [vmem:[%s561 + $0x3c] sm:$0xff]
        %v986 = vld [vmem:[%s561 + $0x44] sm:$0xf]
        %v987 = vld [vmem:[%s561 + $0x48] sm:$0xff]
        %v988 = vld [vmem:[%s561 + $0x50] sm:$0xf]
        %v989 = vld [vmem:[%s561 + $0x54] sm:$0xff]
        %v990 = vld [vmem:[%s561 + $0x5c] sm:$0xf]
        %v991 = vld [vmem:[%s561 + $0x60] sm:$0xff]
        %v992 = vld [vmem:[%s561 + $0x68] sm:$0xf]
        %v993 = vld [vmem:[%s561 + $0x6c] sm:$0xff]
        %v994 = vld [vmem:[%s561 + $0x74] sm:$0xf]
        %v995 = vld [vmem:[%s561 + $0x78] sm:$0xff]
        %v996 = vld [vmem:[%s561 + $0x80] sm:$0xf]
        %v997 = vld [vmem:[%s561 + $0x84] sm:$0xff]
        %v998 = vld [vmem:[%s561 + $0x8c] sm:$0xf]
        %v999 = vld [vmem:[%s561 + $0x90] sm:$0xff]
        %v1000 = vld [vmem:[%s561 + $0x98] sm:$0xf]
        %v1001 = vld [vmem:[%s561 + $0x9c] sm:$0xff]
        %v1002 = vld [vmem:[%s561 + $0xa4] sm:$0xf]
        %v1003 = vld [vmem:[%s561 + $0xa8] sm:$0xff]
        %v1004 = vld [vmem:[%s561 + $0xb0] sm:$0xf]
        %v1005 = vld [vmem:[%s561 + $0xb4] sm:$0xff]
        %v1006 = vld [vmem:[%s561 + $0xbc] sm:$0xf]
        %v1007 = vld [vmem:[%s675] sm:$0x7]
        %v1009 = vlaneseq
        %v1010 = vshrl.u32 %v1009, 7
        %v1011 = vsub.s32 0, %v1010
        %v1012 = vrot.slane %v1007, %v1011
        %v1013 = vlaneseq
        %v1014 = vshrl.u32 %v1013, 7
        %v1015 = vsub.s32 1, %v1014
        %v1016 = vrot.slane %v1007, %v1015
        %v1017 = vlaneseq
        %v1018 = vshrl.u32 %v1017, 7
        %v1019 = vsub.s32 2, %v1018
        %v1020 = vrot.slane %v1007, %v1019
        %v1056 = vunpack.c.l.b16 %v975
        %v1057 = vunpack.c.h.b16 %v975
        %v1058 = vunpack.c.l.b16 %v976
        %v1059 = vunpack.c.l.b16 %v977
        %v1060 = vunpack.c.h.b16 %v977
        %v1061 = vunpack.c.l.b16 %v978
        %v1062 = vunpack.c.l.b16 %v979
        %v1063 = vunpack.c.h.b16 %v979
        %v1064 = vunpack.c.l.b16 %v980
        %v1065 = vunpack.c.l.b16 %v981
        %v1066 = vunpack.c.h.b16 %v981
        %v1067 = vunpack.c.l.b16 %v982
        %v1068 = vunpack.c.l.b16 %v983
        %v1069 = vunpack.c.h.b16 %v983
        %v1070 = vunpack.c.l.b16 %v984
        %v1071 = vunpack.c.l.b16 %v985
        %v1072 = vunpack.c.h.b16 %v985
        %v1073 = vunpack.c.l.b16 %v986
        %v1074 = vunpack.c.l.b16 %v987
        %v1075 = vunpack.c.h.b16 %v987
        %v1076 = vunpack.c.l.b16 %v988
        %v1077 = vunpack.c.l.b16 %v989
        %v1078 = vunpack.c.h.b16 %v989
        %v1079 = vunpack.c.l.b16 %v990
        %v1080 = vunpack.c.l.b16 %v991
        %v1081 = vunpack.c.h.b16 %v991
        %v1082 = vunpack.c.l.b16 %v992
        %v1083 = vunpack.c.l.b16 %v993
        %v1084 = vunpack.c.h.b16 %v993
        %v1085 = vunpack.c.l.b16 %v994
        %v1086 = vunpack.c.l.b16 %v995
        %v1087 = vunpack.c.h.b16 %v995
        %v1088 = vunpack.c.l.b16 %v996
        %v1089 = vunpack.c.l.b16 %v997
        %v1090 = vunpack.c.h.b16 %v997
        %v1091 = vunpack.c.l.b16 %v998
        %v1092 = vunpack.c.l.b16 %v999
        %v1093 = vunpack.c.h.b16 %v999
        %v1094 = vunpack.c.l.b16 %v1000
        %v1095 = vunpack.c.l.b16 %v1001
        %v1096 = vunpack.c.h.b16 %v1001
        %v1097 = vunpack.c.l.b16 %v1002
        %v1098 = vunpack.c.l.b16 %v1003
        %v1099 = vunpack.c.h.b16 %v1003
        %v1100 = vunpack.c.l.b16 %v1004
        %v1101 = vunpack.c.l.b16 %v1005
        %v1102 = vunpack.c.h.b16 %v1005
        %v1103 = vunpack.c.l.b16 %v1006
        %v1104 = vpack.c.b16 %v1059, %v1056
        %v1105 = vpack.c.b16 %v1060, %v1057
        %v1106 = vpack.c.b16 %v1061, %v1058
        %v1107 = vpack.c.b16 %v1065, %v1062
        %v1108 = vpack.c.b16 %v1066, %v1063
        %v1109 = vpack.c.b16 %v1067, %v1064
        %v1110 = vpack.c.b16 %v1071, %v1068
        %v1111 = vpack.c.b16 %v1072, %v1069
        %v1112 = vpack.c.b16 %v1073, %v1070
        %v1113 = vpack.c.b16 %v1077, %v1074
        %v1114 = vpack.c.b16 %v1078, %v1075
        %v1115 = vpack.c.b16 %v1079, %v1076
        %v1116 = vpack.c.b16 %v1083, %v1080
        %v1117 = vpack.c.b16 %v1084, %v1081
        %v1118 = vpack.c.b16 %v1085, %v1082
        %v1119 = vpack.c.b16 %v1089, %v1086
        %v1120 = vpack.c.b16 %v1090, %v1087
        %v1121 = vpack.c.b16 %v1091, %v1088
        %v1122 = vpack.c.b16 %v1095, %v1092
        %v1123 = vpack.c.b16 %v1096, %v1093
        %v1124 = vpack.c.b16 %v1097, %v1094
        %v1125 = vpack.c.b16 %v1101, %v1098
        %v1126 = vpack.c.b16 %v1102, %v1099
        %v1127 = vpack.c.b16 %v1103, %v1100
        %1152 = vmatprep.subr.bf16.mxu0 %v1105
        %1153 = vmatpush1.bf16.msra.mxu0 %v1104
        %1154 = vmatprep.subr.bf16.mxu0 %v1108
        %1155 = vmatpush1.bf16.msra.mxu0 %v1107
        %1156 = vmatprep.subr.bf16.mxu0 %v1111
        %1157 = vmatpush1.bf16.msra.mxu0 %v1110
        %1158 = vmatprep.subr.bf16.mxu0 %v1114
        %1159 = vmatpush1.bf16.msra.mxu0 %v1113
        %1160 = vmatprep.subr.bf16.mxu0 %v1117
        %1161 = vmatpush1.bf16.msra.mxu0 %v1116
        %1162 = vmatprep.subr.bf16.mxu0 %v1120
        %1163 = vmatpush1.bf16.msra.mxu0 %v1119
        %1164 = vmatprep.subr.bf16.mxu0 %v1123
        %1165 = vmatpush1.bf16.msra.mxu0 %v1122
        %1166 = vmatprep.subr.bf16.mxu0 %v1126
        %1167 = vmatpush1.bf16.msra.mxu0 %v1125
        %1168 = vmatprep.subr.bf16.mxu0 0
        %1169 = vmatpush1.bf16.msra.mxu0 0
        %1170 = vmatprep.subr.bf16.mxu0 0
        %1171 = vmatpush1.bf16.msra.mxu0 0
        %1172 = vmatprep.subr.bf16.mxu0 0
        %1173 = vmatpush1.bf16.msra.mxu0 0
        %1174 = vmatprep.subr.bf16.mxu0 0
        %1175 = vmatpush1.bf16.msra.mxu0 0
        %1176 = vmatprep.subr.bf16.mxu0 0
        %1177 = vmatpush1.bf16.msra.mxu0 0
        %1178 = vmatprep.subr.bf16.mxu0 0
        %1179 = vmatpush1.bf16.msra.mxu0 0
        %1180 = vmatprep.subr.bf16.mxu0 0
        %1181 = vmatpush1.bf16.msra.mxu0 0
        %1182 = vmatprep.subr.bf16.mxu0 0
        %1183 = vmatpush1.bf16.msra.mxu0 0
        %1184 = vmatprep.mubr.bf16.mxu0 0
        %1185 = vmatmul.mubr.bf16.gmra.mrb[0].mxu0 %v967
        %v1186 = vpop.f32.mrb[0].mxu0
        %v1187 = vadd.f32 %v1012, %v1186
        %v1188 = vpop.f32.mrb[0].mxu0
        %v1189 = vadd.f32 %v1016, %v1188
        %v1190 = vpop.f32.mrb[0].mxu0
        %v1191 = vadd.f32 %v1012, %v1190
        %v1192 = vpop.f32.mrb[0].mxu0
        %v1193 = vadd.f32 %v1016, %v1192
        %1194 = vmatprep.mubr.bf16.mxu0 0
        %1195 = vmatmul.mubr.bf16.gmra.mrb[0].mxu0 %v968
        %v1196 = vpop.f32.mrb[0].mxu0
        %v1197 = vadd.f32 %v1012, %v1196
        %v1198 = vpop.f32.mrb[0].mxu0
        %v1199 = vadd.f32 %v1016, %v1198
        %v1200 = vpop.f32.mrb[0].mxu0
        %v1201 = vadd.f32 %v1012, %v1200
        %v1202 = vpop.f32.mrb[0].mxu0
        %v1203 = vadd.f32 %v1016, %v1202
        %1204 = vmatprep.mubr.bf16.mxu0 0
        %1205 = vmatmul.mubr.bf16.gmra.mrb[0].mxu0 %v969
        %v1206 = vpop.f32.mrb[0].mxu0
        %v1207 = vadd.f32 %v1012, %v1206
        %v1208 = vpop.f32.mrb[0].mxu0
        %v1209 = vadd.f32 %v1016, %v1208
        %v1210 = vpop.f32.mrb[0].mxu0
        %v1211 = vadd.f32 %v1012, %v1210
        %v1212 = vpop.f32.mrb[0].mxu0
        %v1213 = vadd.f32 %v1016, %v1212
        %1214 = vmatprep.mubr.bf16.mxu0 0
        %1215 = vmatmul.mubr.bf16.gmra.mrb[0].mxu0 %v970
        %v1216 = vpop.f32.mrb[0].mxu0
        %v1217 = vadd.f32 %v1012, %v1216
        %v1218 = vpop.f32.mrb[0].mxu0
        %v1219 = vadd.f32 %v1016, %v1218
        %v1220 = vpop.f32.mrb[0].mxu0
        %v1221 = vadd.f32 %v1012, %v1220
        %v1222 = vpop.f32.mrb[0].mxu0
        %v1223 = vadd.f32 %v1016, %v1222
        %1224 = vmatprep.mubr.bf16.mxu0 0
        %1225 = vmatmul.mubr.bf16.gmra.mrb[0].mxu0 %v971
        %v1226 = vpop.f32.mrb[0].mxu0
        %v1227 = vadd.f32 %v1012, %v1226
        %v1228 = vpop.f32.mrb[0].mxu0
        %v1229 = vadd.f32 %v1016, %v1228
        %v1230 = vpop.f32.mrb[0].mxu0
        %v1231 = vadd.f32 %v1012, %v1230
        %v1232 = vpop.f32.mrb[0].mxu0
        %v1233 = vadd.f32 %v1016, %v1232
        %1234 = vmatprep.mubr.bf16.mxu0 0
        %1235 = vmatmul.mubr.bf16.gmra.mrb[0].mxu0 %v972
        %v1236 = vpop.f32.mrb[0].mxu0
        %v1237 = vadd.f32 %v1012, %v1236
        %v1238 = vpop.f32.mrb[0].mxu0
        %v1239 = vadd.f32 %v1016, %v1238
        %v1240 = vpop.f32.mrb[0].mxu0
        %v1241 = vadd.f32 %v1012, %v1240
        %v1242 = vpop.f32.mrb[0].mxu0
        %v1243 = vadd.f32 %v1016, %v1242
        %1244 = vmatprep.mubr.bf16.mxu0 0
        %1245 = vmatmul.mubr.bf16.gmra.mrb[0].mxu0 %v973
        %v1246 = vpop.f32.mrb[0].mxu0
        %v1247 = vadd.f32 %v1012, %v1246
        %v1248 = vpop.f32.mrb[0].mxu0
        %v1249 = vadd.f32 %v1016, %v1248
        %v1250 = vpop.f32.mrb[0].mxu0
        %v1251 = vadd.f32 %v1012, %v1250
        %v1252 = vpop.f32.mrb[0].mxu0
        %v1253 = vadd.f32 %v1016, %v1252
        %1254 = vmatprep.mubr.bf16.mxu0 0
        %1255 = vmatmul.mubr.bf16.gmra.mrb[0].mxu0 %v974
        %v1256 = vpop.f32.mrb[0].mxu0
        %v1257 = vadd.f32 %v1012, %v1256
        %v1258 = vpop.f32.mrb[0].mxu0
        %v1259 = vadd.f32 %v1016, %v1258
        %v1260 = vpop.f32.mrb[0].mxu0
        %v1261 = vadd.f32 %v1012, %v1260
        %v1262 = vpop.f32.mrb[0].mxu0
        %v1263 = vadd.f32 %v1016, %v1262
        %1264 = vdwg.mxu0
        %1265 = vmatprep.subr.bf16.mxu0 0
        %1266 = vmatpush1.bf16.msra.mxu0 %v1106
        %1267 = vmatprep.subr.bf16.mxu0 0
        %1268 = vmatpush1.bf16.msra.mxu0 %v1109
        %1269 = vmatprep.subr.bf16.mxu0 0
        %1270 = vmatpush1.bf16.msra.mxu0 %v1112
        %1271 = vmatprep.subr.bf16.mxu0 0
        %1272 = vmatpush1.bf16.msra.mxu0 %v1115
        %1273 = vmatprep.subr.bf16.mxu0 0
        %1274 = vmatpush1.bf16.msra.mxu0 %v1118
        %1275 = vmatprep.subr.bf16.mxu0 0
        %1276 = vmatpush1.bf16.msra.mxu0 %v1121
        %1277 = vmatprep.subr.bf16.mxu0 0
        %1278 = vmatpush1.bf16.msra.mxu0 %v1124
        %1279 = vmatprep.subr.bf16.mxu0 0
        %1280 = vmatpush1.bf16.msra.mxu0 %v1127
        %1281 = vmatprep.subr.bf16.mxu0 0
        %1282 = vmatpush1.bf16.msra.mxu0 0
        %1283 = vmatprep.subr.bf16.mxu0 0
        %1284 = vmatpush1.bf16.msra.mxu0 0
        %1285 = vmatprep.subr.bf16.mxu0 0
        %1286 = vmatpush1.bf16.msra.mxu0 0
        %1287 = vmatprep.subr.bf16.mxu0 0
        %1288 = vmatpush1.bf16.msra.mxu0 0
        %1289 = vmatprep.subr.bf16.mxu0 0
        %1290 = vmatpush1.bf16.msra.mxu0 0
        %1291 = vmatprep.subr.bf16.mxu0 0
        %1292 = vmatpush1.bf16.msra.mxu0 0
        %1293 = vmatprep.subr.bf16.mxu0 0
        %1294 = vmatpush1.bf16.msra.mxu0 0
        %1295 = vmatprep.subr.bf16.mxu0 0
        %1296 = vmatpush1.bf16.msra.mxu0 0
        %1297 = vmatprep.mubr.bf16.mxu0 0
        %1298 = vmatmul.mubr.bf16.gmra.mrb[0].mxu0 %v967
        %v1299 = vpop.f32.mrb[0].mxu0
        %v1300 = vadd.f32 %v1020, %v1299
        %v1301 = vpop.f32.mrb[0].mxu0
        %v1302 = vpop.f32.mrb[0].mxu0
        %v1303 = vadd.f32 %v1020, %v1302
        %v1304 = vpop.f32.mrb[0].mxu0
        %1305 = vmatprep.mubr.bf16.mxu0 0
        %1306 = vmatmul.mubr.bf16.gmra.mrb[0].mxu0 %v968
        %v1307 = vpop.f32.mrb[0].mxu0
        %v1308 = vadd.f32 %v1020, %v1307
        %v1309 = vpop.f32.mrb[0].mxu0
        %v1310 = vpop.f32.mrb[0].mxu0
        %v1311 = vadd.f32 %v1020, %v1310
        %v1312 = vpop.f32.mrb[0].mxu0
        %1313 = vmatprep.mubr.bf16.mxu0 0
        %1314 = vmatmul.mubr.bf16.gmra.mrb[0].mxu0 %v969
        %v1315 = vpop.f32.mrb[0].mxu0
        %v1316 = vadd.f32 %v1020, %v1315
        %v1317 = vpop.f32.mrb[0].mxu0
        %v1318 = vpop.f32.mrb[0].mxu0
        %v1319 = vadd.f32 %v1020, %v1318
        %v1320 = vpop.f32.mrb[0].mxu0
        %1321 = vmatprep.mubr.bf16.mxu0 0
        %1322 = vmatmul.mubr.bf16.gmra.mrb[0].mxu0 %v970
        %v1323 = vpop.f32.mrb[0].mxu0
        %v1324 = vadd.f32 %v1020, %v1323
        %v1325 = vpop.f32.mrb[0].mxu0
        %v1326 = vpop.f32.mrb[0].mxu0
        %v1327 = vadd.f32 %v1020, %v1326
        %v1328 = vpop.f32.mrb[0].mxu0
        %1329 = vmatprep.mubr.bf16.mxu0 0
        %1330 = vmatmul.mubr.bf16.gmra.mrb[0].mxu0 %v971
        %v1331 = vpop.f32.mrb[0].mxu0
        %v1332 = vadd.f32 %v1020, %v1331
        %v1333 = vpop.f32.mrb[0].mxu0
        %v1334 = vpop.f32.mrb[0].mxu0
        %v1335 = vadd.f32 %v1020, %v1334
        %v1336 = vpop.f32.mrb[0].mxu0
        %1337 = vmatprep.mubr.bf16.mxu0 0
        %1338 = vmatmul.mubr.bf16.gmra.mrb[0].mxu0 %v972
        %v1339 = vpop.f32.mrb[0].mxu0
        %v1340 = vadd.f32 %v1020, %v1339
        %v1341 = vpop.f32.mrb[0].mxu0
        %v1342 = vpop.f32.mrb[0].mxu0
        %v1343 = vadd.f32 %v1020, %v1342
        %v1344 = vpop.f32.mrb[0].mxu0
        %1345 = vmatprep.mubr.bf16.mxu0 0
        %1346 = vmatmul.mubr.bf16.gmra.mrb[0].mxu0 %v973
        %v1347 = vpop.f32.mrb[0].mxu0
        %v1348 = vadd.f32 %v1020, %v1347
        %v1349 = vpop.f32.mrb[0].mxu0
        %v1350 = vpop.f32.mrb[0].mxu0
        %v1351 = vadd.f32 %v1020, %v1350
        %v1352 = vpop.f32.mrb[0].mxu0
        %1353 = vmatprep.mubr.bf16.mxu0 0
        %1354 = vmatmul.mubr.bf16.gmra.mrb[0].mxu0 %v974
        %v1355 = vpop.f32.mrb[0].mxu0
        %v1356 = vadd.f32 %v1020, %v1355
        %v1357 = vpop.f32.mrb[0].mxu0
        %v1358 = vpop.f32.mrb[0].mxu0
        %v1359 = vadd.f32 %v1020, %v1358
        %v1360 = vpop.f32.mrb[0].mxu0
        %1361 = vdwg.mxu0
        %v1362 = vld [vmem:[%s570] sm:$0xf]
        %v1363 = vld [vmem:[%s570 + $0x4] sm:$0xf]
        %v1364 = vld [vmem:[%s570 + $0x8] sm:$0xf]
        %v1365 = vld [vmem:[%s570 + $0xc] sm:$0xf]
        %v1366 = vld [vmem:[%s570 + $0x10] sm:$0xf]
        %v1367 = vld [vmem:[%s570 + $0x14] sm:$0xf]
        %v1368 = vld [vmem:[%s570 + $0x18] sm:$0xf]
        %v1369 = vld [vmem:[%s570 + $0x1c] sm:$0xf]
        %v1370 = vld [vmem:[%s570 + $0x20] sm:$0xf]
        %v1371 = vld [vmem:[%s570 + $0x24] sm:$0xf]
        %v1372 = vld [vmem:[%s570 + $0x28] sm:$0xf]
        %v1373 = vld [vmem:[%s570 + $0x2c] sm:$0xf]
        %v1374 = vld [vmem:[%s570 + $0x30] sm:$0xf]
        %v1375 = vld [vmem:[%s570 + $0x34] sm:$0xf]
        %v1376 = vld [vmem:[%s570 + $0x38] sm:$0xf]
        %v1377 = vld [vmem:[%s570 + $0x3c] sm:$0xf]
        %v1378 = vpack.c.bf16 %v1191, %v1187
        %v1379 = vpack.c.bf16 %v1201, %v1197
        %v1380 = vpack.c.bf16 %v1211, %v1207
        %v1381 = vpack.c.bf16 %v1221, %v1217
        %v1382 = vpack.c.bf16 %v1193, %v1189
        %v1383 = vpack.c.bf16 %v1203, %v1199
        %v1384 = vpack.c.bf16 %v1213, %v1209
        %v1385 = vpack.c.bf16 %v1223, %v1219
        %v1386 = vpack.c.bf16 %v1303, %v1300
        %v1387 = vpack.c.bf16 %v1311, %v1308
        %v1388 = vpack.c.bf16 %v1319, %v1316
        %v1389 = vpack.c.bf16 %v1327, %v1324
        %vm1390 = vcmask 261120
        %v1392 = vsel %vm1390, %v1378, 0
        %v1395 = vsel %vm1390, %v1379, 0
        %v1398 = vsel %vm1390, %v1380, 0
        %v1401 = vsel %vm1390, %v1381, 0
        %v1404 = vsel %vm1390, %v1382, 0
        %v1407 = vsel %vm1390, %v1383, 0
        %v1410 = vsel %vm1390, %v1384, 0
        %v1413 = vsel %vm1390, %v1385, 0
        %1415 = vmatprep.subr.bf16.mxu0 0
        %1416 = vmatpush1.bf16.xpose.msra.mxu0 %v1404
        %1417 = vmatprep.subr.bf16.mxu0 0
        %1418 = vmatpush1.bf16.xpose.msra.mxu0 %v1407
        %1419 = vmatprep.subr.bf16.mxu0 0
        %1420 = vmatpush1.bf16.xpose.msra.mxu0 %v1410
        %1421 = vmatprep.subr.bf16.mxu0 0
        %1422 = vmatpush1.bf16.xpose.msra.mxu0 %v1413
        %1423 = vmatprep.subr.bf16.mxu0 0
        %1424 = vmatpush1.bf16.xpose.msra.mxu0 0
        %1425 = vmatprep.subr.bf16.mxu0 0
        %1426 = vmatpush1.bf16.xpose.msra.mxu0 0
        %1427 = vmatprep.subr.bf16.mxu0 0
        %1428 = vmatpush1.bf16.xpose.msra.mxu0 0
        %1429 = vmatprep.subr.bf16.mxu0 0
        %1430 = vmatpush1.bf16.xpose.msra.mxu0 0
        %1431 = vmatprep.subr.bf16.mxu0 0
        %1432 = vmatpush1.bf16.xpose.msra.mxu0 0
        %1433 = vmatprep.subr.bf16.mxu0 0
        %1434 = vmatpush1.bf16.xpose.msra.mxu0 0
        %1435 = vmatprep.subr.bf16.mxu0 0
        %1436 = vmatpush1.bf16.xpose.msra.mxu0 0
        %1437 = vmatprep.subr.bf16.mxu0 0
        %1438 = vmatpush1.bf16.xpose.msra.mxu0 0
        %1439 = vmatprep.subr.bf16.mxu0 0
        %1440 = vmatpush1.bf16.xpose.msra.mxu0 0
        %1441 = vmatprep.subr.bf16.mxu0 0
        %1442 = vmatpush1.bf16.xpose.msra.mxu0 0
        %1443 = vmatprep.subr.bf16.mxu0 0
        %1444 = vmatpush1.bf16.xpose.msra.mxu0 0
        %1445 = vmatprep.subr.bf16.mxu0 0
        %1446 = vmatpush1.bf16.xpose.msra.mxu0 0
        %1447 = vmatprep.mubr.bf16.mxu0 0
        %1448 = vmatmul.mubr.bf16.gmra.mrb[0].mxu0 %v1392
        %v1449 = vpop.f32.mrb[0].mxu0
        %v1450 = vadd.f32 0.0, %v1449
        %v1451 = vpop.f32.mrb[0].mxu0
        %v1452 = vpop.f32.mrb[0].mxu0
        %v1453 = vadd.f32 0.0, %v1452
        %v1454 = vpop.f32.mrb[0].mxu0
        %1455 = vmatprep.mubr.bf16.mxu0 0
        %1456 = vmatmul.mubr.bf16.gmra.mrb[0].mxu0 %v1395
        %v1457 = vpop.f32.mrb[0].mxu0
        %v1458 = vadd.f32 0.0, %v1457
        %v1459 = vpop.f32.mrb[0].mxu0
        %v1460 = vpop.f32.mrb[0].mxu0
        %v1461 = vadd.f32 0.0, %v1460
        %v1462 = vpop.f32.mrb[0].mxu0
        %1463 = vmatprep.mubr.bf16.mxu0 0
        %1464 = vmatmul.mubr.bf16.gmra.mrb[0].mxu0 %v1398
        %v1465 = vpop.f32.mrb[0].mxu0
        %v1466 = vadd.f32 0.0, %v1465
        %v1467 = vpop.f32.mrb[0].mxu0
        %v1468 = vpop.f32.mrb[0].mxu0
        %v1469 = vadd.f32 0.0, %v1468
        %v1470 = vpop.f32.mrb[0].mxu0
        %1471 = vmatprep.mubr.bf16.mxu0 0
        %1472 = vmatmul.mubr.bf16.gmra.mrb[0].mxu0 %v1401
        %v1473 = vpop.f32.mrb[0].mxu0
        %v1474 = vadd.f32 0.0, %v1473
        %v1475 = vpop.f32.mrb[0].mxu0
        %v1476 = vpop.f32.mrb[0].mxu0
        %v1477 = vadd.f32 0.0, %v1476
        %v1478 = vpop.f32.mrb[0].mxu0
        %1479 = vdwg.mxu0
        %v1480 = vmul.f32 %v1450, 0.17677669
        %v1481 = vmul.f32 %v1453, 0.17677669
        %v1482 = vmul.f32 %v1458, 0.17677669
        %v1483 = vmul.f32 %v1461, 0.17677669
        %v1484 = vmul.f32 %v1466, 0.17677669
        %v1485 = vmul.f32 %v1469, 0.17677669
        %v1486 = vmul.f32 %v1474, 0.17677669
        %v1487 = vmul.f32 %v1477, 0.17677669
        %vm1488 = vcmask 523264
        %v1489 = vsel %vm1488, %v1480, -inf
        %1490 = vmax.xlane.f32.xlu0 %v1489
        %v1491 = vpop.xlane.xlu0 %1490
        %v1492 = vsel %vm1488, %v1481, -inf
        %1493 = vmax.xlane.f32.xlu0 %v1492
        %v1494 = vpop.xlane.xlu0 %1493
        %v1495 = vsel %vm1488, %v1482, -inf
        %1496 = vmax.xlane.f32.xlu0 %v1495
        %v1497 = vpop.xlane.xlu0 %1496
        %v1498 = vsel %vm1488, %v1483, -inf
        %1499 = vmax.xlane.f32.xlu0 %v1498
        %v1500 = vpop.xlane.xlu0 %1499
        %v1501 = vsel %vm1488, %v1484, -inf
        %1502 = vmax.xlane.f32.xlu0 %v1501
        %v1503 = vpop.xlane.xlu0 %1502
        %v1504 = vsel %vm1488, %v1485, -inf
        %1505 = vmax.xlane.f32.xlu0 %v1504
        %v1506 = vpop.xlane.xlu0 %1505
        %v1507 = vsel %vm1488, %v1486, -inf
        %1508 = vmax.xlane.f32.xlu0 %v1507
        %v1509 = vpop.xlane.xlu0 %1508
        %v1510 = vsel %vm1488, %v1487, -inf
        %1511 = vmax.xlane.f32.xlu0 %v1510
        %v1512 = vpop.xlane.xlu0 %1511
        %v1513 = vsub.f32 %v1480, %v1491
        %v1514 = vsub.f32 %v1481, %v1494
        %v1515 = vsub.f32 %v1482, %v1497
        %v1516 = vsub.f32 %v1483, %v1500
        %v1517 = vsub.f32 %v1484, %v1503
        %v1518 = vsub.f32 %v1485, %v1506
        %v1519 = vsub.f32 %v1486, %v1509
        %v1520 = vsub.f32 %v1487, %v1512
        %v1521 = vmul.f32 %v1513, 1.442695
        %v1522 = vpow.pop %v1521
        %v1523 = vmul.f32 %v1514, 1.442695
        %v1524 = vpow.pop %v1523
        %v1525 = vmul.f32 %v1515, 1.442695
        %v1526 = vpow.pop %v1525
        %v1527 = vmul.f32 %v1516, 1.442695
        %v1528 = vpow.pop %v1527
        %v1529 = vmul.f32 %v1517, 1.442695
        %v1530 = vpow.pop %v1529
        %v1531 = vmul.f32 %v1518, 1.442695
        %v1532 = vpow.pop %v1531
        %v1533 = vmul.f32 %v1519, 1.442695
        %v1534 = vpow.pop %v1533
        %v1535 = vmul.f32 %v1520, 1.442695
        %v1536 = vpow.pop %v1535
        %v1537 = vsel %vm1488, %v1522, 0.0
        %1538 = vadd.xlane.f32.xlu0 %v1537
        %v1539 = vpop.xlane.xlu0 %1538
        %v1540 = vsel %vm1488, %v1524, 0.0
        %1541 = vadd.xlane.f32.xlu0 %v1540
        %v1542 = vpop.xlane.xlu0 %1541
        %v1543 = vsel %vm1488, %v1526, 0.0
        %1544 = vadd.xlane.f32.xlu0 %v1543
        %v1545 = vpop.xlane.xlu0 %1544
        %v1546 = vsel %vm1488, %v1528, 0.0
        %1547 = vadd.xlane.f32.xlu0 %v1546
        %v1548 = vpop.xlane.xlu0 %1547
        %v1549 = vsel %vm1488, %v1530, 0.0
        %1550 = vadd.xlane.f32.xlu0 %v1549
        %v1551 = vpop.xlane.xlu0 %1550
        %v1552 = vsel %vm1488, %v1532, 0.0
        %1553 = vadd.xlane.f32.xlu0 %v1552
        %v1554 = vpop.xlane.xlu0 %1553
        %v1555 = vsel %vm1488, %v1534, 0.0
        %1556 = vadd.xlane.f32.xlu0 %v1555
        %v1557 = vpop.xlane.xlu0 %1556
        %v1558 = vsel %vm1488, %v1536, 0.0
        %1559 = vadd.xlane.f32.xlu0 %v1558
        %v1560 = vpop.xlane.xlu0 %1559
        %v1561 = vpack.c.bf16 %v1524, %v1522
        %v1562 = vpack.c.bf16 %v1528, %v1526
        %v1563 = vpack.c.bf16 %v1532, %v1530
        %v1564 = vpack.c.bf16 %v1536, %v1534
        %v1566 = vsel %vm1488, %v1561, 0
        %v1569 = vsel %vm1488, %v1562, 0
        %v1572 = vsel %vm1488, %v1563, 0
        %v1575 = vsel %vm1488, %v1564, 0
        %1577 = vmatprep.subr.bf16.mxu0 0
        %1578 = vmatpush1.bf16.msra.mxu0 %v1386
        %1579 = vmatprep.subr.bf16.mxu0 0
        %1580 = vmatpush1.bf16.msra.mxu0 %v1387
        %1581 = vmatprep.subr.bf16.mxu0 0
        %1582 = vmatpush1.bf16.msra.mxu0 %v1388
        %1583 = vmatprep.subr.bf16.mxu0 0
        %1584 = vmatpush1.bf16.msra.mxu0 %v1389
        %1585 = vmatprep.subr.bf16.mxu0 0
        %1586 = vmatpush1.bf16.msra.mxu0 0
        %1587 = vmatprep.subr.bf16.mxu0 0
        %1588 = vmatpush1.bf16.msra.mxu0 0
        %1589 = vmatprep.subr.bf16.mxu0 0
        %1590 = vmatpush1.bf16.msra.mxu0 0
        %1591 = vmatprep.subr.bf16.mxu0 0
        %1592 = vmatpush1.bf16.msra.mxu0 0
        %1593 = vmatprep.subr.bf16.mxu0 0
        %1594 = vmatpush1.bf16.msra.mxu0 0
        %1595 = vmatprep.subr.bf16.mxu0 0
        %1596 = vmatpush1.bf16.msra.mxu0 0
        %1597 = vmatprep.subr.bf16.mxu0 0
        %1598 = vmatpush1.bf16.msra.mxu0 0
        %1599 = vmatprep.subr.bf16.mxu0 0
        %1600 = vmatpush1.bf16.msra.mxu0 0
        %1601 = vmatprep.subr.bf16.mxu0 0
        %1602 = vmatpush1.bf16.msra.mxu0 0
        %1603 = vmatprep.subr.bf16.mxu0 0
        %1604 = vmatpush1.bf16.msra.mxu0 0
        %1605 = vmatprep.subr.bf16.mxu0 0
        %1606 = vmatpush1.bf16.msra.mxu0 0
        %1607 = vmatprep.subr.bf16.mxu0 0
        %1608 = vmatpush1.bf16.msra.mxu0 0
        %1609 = vmatprep.mubr.bf16.mxu0 0
        %1610 = vmatmul.mubr.bf16.gmra.mrb[0].mxu0 %v1566
        %v1611 = vpop.f32.mrb[0].mxu0
        %v1612 = vadd.f32 0.0, %v1611
        %v1613 = vpop.f32.mrb[0].mxu0
        %v1614 = vpop.f32.mrb[0].mxu0
        %v1615 = vadd.f32 0.0, %v1614
        %v1616 = vpop.f32.mrb[0].mxu0
        %1617 = vmatprep.mubr.bf16.mxu0 0
        %1618 = vmatmul.mubr.bf16.gmra.mrb[0].mxu0 %v1569
        %v1619 = vpop.f32.mrb[0].mxu0
        %v1620 = vadd.f32 0.0, %v1619
        %v1621 = vpop.f32.mrb[0].mxu0
        %v1622 = vpop.f32.mrb[0].mxu0
        %v1623 = vadd.f32 0.0, %v1622
        %v1624 = vpop.f32.mrb[0].mxu0
        %1625 = vmatprep.mubr.bf16.mxu0 0
        %1626 = vmatmul.mubr.bf16.gmra.mrb[0].mxu0 %v1572
        %v1627 = vpop.f32.mrb[0].mxu0
        %v1628 = vadd.f32 0.0, %v1627
        %v1629 = vpop.f32.mrb[0].mxu0
        %v1630 = vpop.f32.mrb[0].mxu0
        %v1631 = vadd.f32 0.0, %v1630
        %v1632 = vpop.f32.mrb[0].mxu0
        %1633 = vmatprep.mubr.bf16.mxu0 0
        %1634 = vmatmul.mubr.bf16.gmra.mrb[0].mxu0 %v1575
        %v1635 = vpop.f32.mrb[0].mxu0
        %v1636 = vadd.f32 0.0, %v1635
        %v1637 = vpop.f32.mrb[0].mxu0
        %v1638 = vpop.f32.mrb[0].mxu0
        %v1639 = vadd.f32 0.0, %v1638
        %v1640 = vpop.f32.mrb[0].mxu0
        %1641 = vdwg.mxu0
        %v1642 = vrcp.pop %v1539
        %v1643 = vrcp.pop %v1542
        %v1644 = vrcp.pop %v1545
        %v1645 = vrcp.pop %v1548
        %v1646 = vrcp.pop %v1551
        %v1647 = vrcp.pop %v1554
        %v1648 = vrcp.pop %v1557
        %v1649 = vrcp.pop %v1560
        %v1650 = vmul.f32 %v1612, %v1642
        %v1651 = vmul.f32 %v1615, %v1643
        %v1652 = vmul.f32 %v1620, %v1644
        %v1653 = vmul.f32 %v1623, %v1645
        %v1654 = vmul.f32 %v1628, %v1646
        %v1655 = vmul.f32 %v1631, %v1647
        %v1656 = vmul.f32 %v1636, %v1648
        %v1657 = vmul.f32 %v1639, %v1649
        %v1658 = vpack.c.bf16 %v1651, %v1650
        %v1659 = vpack.c.bf16 %v1653, %v1652
        %v1660 = vpack.c.bf16 %v1655, %v1654
        %v1661 = vpack.c.bf16 %v1657, %v1656
        %1666 = vrot.lane.b32.xlu0 %v1378, 96
        %v1667 = vpop.permute.xlu0 %1666
        %1668 = vrot.lane.b32.xlu0 %v1379, 96
        %v1669 = vpop.permute.xlu0 %1668
        %1670 = vrot.lane.b32.xlu0 %v1380, 96
        %v1671 = vpop.permute.xlu0 %1670
        %1672 = vrot.lane.b32.xlu0 %v1381, 96
        %v1673 = vpop.permute.xlu0 %1672
        %1678 = vrot.lane.b32.xlu0 %v1382, 96
        %v1679 = vpop.permute.xlu0 %1678
        %1680 = vrot.lane.b32.xlu0 %v1383, 96
        %v1681 = vpop.permute.xlu0 %1680
        %1682 = vrot.lane.b32.xlu0 %v1384, 96
        %v1683 = vpop.permute.xlu0 %1682
        %1684 = vrot.lane.b32.xlu0 %v1385, 96
        %v1685 = vpop.permute.xlu0 %1684
        %v1687 = vsel %vm1390, %v1667, 0
        %v1690 = vsel %vm1390, %v1669, 0
        %v1693 = vsel %vm1390, %v1671, 0
        %v1696 = vsel %vm1390, %v1673, 0
        %v1699 = vsel %vm1390, %v1679, 0
        %v1702 = vsel %vm1390, %v1681, 0
        %v1705 = vsel %vm1390, %v1683, 0
        %v1708 = vsel %vm1390, %v1685, 0
        %1710 = vmatprep.subr.bf16.mxu0 0
        %1711 = vmatpush1.bf16.xpose.msra.mxu0 %v1699
        %1712 = vmatprep.subr.bf16.mxu0 0
        %1713 = vmatpush1.bf16.xpose.msra.mxu0 %v1702
        %1714 = vmatprep.subr.bf16.mxu0 0
        %1715 = vmatpush1.bf16.xpose.msra.mxu0 %v1705
        %1716 = vmatprep.subr.bf16.mxu0 0
        %1717 = vmatpush1.bf16.xpose.msra.mxu0 %v1708
        %1718 = vmatprep.subr.bf16.mxu0 0
        %1719 = vmatpush1.bf16.xpose.msra.mxu0 0
        %1720 = vmatprep.subr.bf16.mxu0 0
        %1721 = vmatpush1.bf16.xpose.msra.mxu0 0
        %1722 = vmatprep.subr.bf16.mxu0 0
        %1723 = vmatpush1.bf16.xpose.msra.mxu0 0
        %1724 = vmatprep.subr.bf16.mxu0 0
        %1725 = vmatpush1.bf16.xpose.msra.mxu0 0
        %1726 = vmatprep.subr.bf16.mxu0 0
        %1727 = vmatpush1.bf16.xpose.msra.mxu0 0
        %1728 = vmatprep.subr.bf16.mxu0 0
        %1729 = vmatpush1.bf16.xpose.msra.mxu0 0
        %1730 = vmatprep.subr.bf16.mxu0 0
        %1731 = vmatpush1.bf16.xpose.msra.mxu0 0
        %1732 = vmatprep.subr.bf16.mxu0 0
        %1733 = vmatpush1.bf16.xpose.msra.mxu0 0
        %1734 = vmatprep.subr.bf16.mxu0 0
        %1735 = vmatpush1.bf16.xpose.msra.mxu0 0
        %1736 = vmatprep.subr.bf16.mxu0 0
        %1737 = vmatpush1.bf16.xpose.msra.mxu0 0
        %1738 = vmatprep.subr.bf16.mxu0 0
        %1739 = vmatpush1.bf16.xpose.msra.mxu0 0
        %1740 = vmatprep.subr.bf16.mxu0 0
        %1741 = vmatpush1.bf16.xpose.msra.mxu0 0
        %1742 = vmatprep.mubr.bf16.mxu0 0
        %1743 = vmatmul.mubr.bf16.gmra.mrb[0].mxu0 %v1687
        %v1744 = vpop.f32.mrb[0].mxu0
        %v1745 = vadd.f32 0.0, %v1744
        %v1746 = vpop.f32.mrb[0].mxu0
        %v1747 = vpop.f32.mrb[0].mxu0
        %v1748 = vadd.f32 0.0, %v1747
        %v1749 = vpop.f32.mrb[0].mxu0
        %1750 = vmatprep.mubr.bf16.mxu0 0
        %1751 = vmatmul.mubr.bf16.gmra.mrb[0].mxu0 %v1690
        %v1752 = vpop.f32.mrb[0].mxu0
        %v1753 = vadd.f32 0.0, %v1752
        %v1754 = vpop.f32.mrb[0].mxu0
        %v1755 = vpop.f32.mrb[0].mxu0
        %v1756 = vadd.f32 0.0, %v1755
        %v1757 = vpop.f32.mrb[0].mxu0
        %1758 = vmatprep.mubr.bf16.mxu0 0
        %1759 = vmatmul.mubr.bf16.gmra.mrb[0].mxu0 %v1693
        %v1760 = vpop.f32.mrb[0].mxu0
        %v1761 = vadd.f32 0.0, %v1760
        %v1762 = vpop.f32.mrb[0].mxu0
        %v1763 = vpop.f32.mrb[0].mxu0
        %v1764 = vadd.f32 0.0, %v1763
        %v1765 = vpop.f32.mrb[0].mxu0
        %1766 = vmatprep.mubr.bf16.mxu0 0
        %1767 = vmatmul.mubr.bf16.gmra.mrb[0].mxu0 %v1696
        %v1768 = vpop.f32.mrb[0].mxu0
        %v1769 = vadd.f32 0.0, %v1768
        %v1770 = vpop.f32.mrb[0].mxu0
        %v1771 = vpop.f32.mrb[0].mxu0
        %v1772 = vadd.f32 0.0, %v1771
        %v1773 = vpop.f32.mrb[0].mxu0
        %1774 = vdwg.mxu0
        %v1775 = vmul.f32 %v1745, 0.17677669
        %v1776 = vmul.f32 %v1748, 0.17677669
        %v1777 = vmul.f32 %v1753, 0.17677669
        %v1778 = vmul.f32 %v1756, 0.17677669
        %v1779 = vmul.f32 %v1761, 0.17677669
        %v1780 = vmul.f32 %v1764, 0.17677669
        %v1781 = vmul.f32 %v1769, 0.17677669
        %v1782 = vmul.f32 %v1772, 0.17677669
        %v1783 = vsel %vm1488, %v1775, -inf
        %1784 = vmax.xlane.f32.xlu0 %v1783
        %v1785 = vpop.xlane.xlu0 %1784
        %v1786 = vsel %vm1488, %v1776, -inf
        %1787 = vmax.xlane.f32.xlu0 %v1786
        %v1788 = vpop.xlane.xlu0 %1787
        %v1789 = vsel %vm1488, %v1777, -inf
        %1790 = vmax.xlane.f32.xlu0 %v1789
        %v1791 = vpop.xlane.xlu0 %1790
        %v1792 = vsel %vm1488, %v1778, -inf
        %1793 = vmax.xlane.f32.xlu0 %v1792
        %v1794 = vpop.xlane.xlu0 %1793
        %v1795 = vsel %vm1488, %v1779, -inf
        %1796 = vmax.xlane.f32.xlu0 %v1795
        %v1797 = vpop.xlane.xlu0 %1796
        %v1798 = vsel %vm1488, %v1780, -inf
        %1799 = vmax.xlane.f32.xlu0 %v1798
        %v1800 = vpop.xlane.xlu0 %1799
        %v1801 = vsel %vm1488, %v1781, -inf
        %1802 = vmax.xlane.f32.xlu0 %v1801
        %v1803 = vpop.xlane.xlu0 %1802
        %v1804 = vsel %vm1488, %v1782, -inf
        %1805 = vmax.xlane.f32.xlu0 %v1804
        %v1806 = vpop.xlane.xlu0 %1805
        %v1807 = vsub.f32 %v1775, %v1785
        %v1808 = vsub.f32 %v1776, %v1788
        %v1809 = vsub.f32 %v1777, %v1791
        %v1810 = vsub.f32 %v1778, %v1794
        %v1811 = vsub.f32 %v1779, %v1797
        %v1812 = vsub.f32 %v1780, %v1800
        %v1813 = vsub.f32 %v1781, %v1803
        %v1814 = vsub.f32 %v1782, %v1806
        %v1815 = vmul.f32 %v1807, 1.442695
        %v1816 = vpow.pop %v1815
        %v1817 = vmul.f32 %v1808, 1.442695
        %v1818 = vpow.pop %v1817
        %v1819 = vmul.f32 %v1809, 1.442695
        %v1820 = vpow.pop %v1819
        %v1821 = vmul.f32 %v1810, 1.442695
        %v1822 = vpow.pop %v1821
        %v1823 = vmul.f32 %v1811, 1.442695
        %v1824 = vpow.pop %v1823
        %v1825 = vmul.f32 %v1812, 1.442695
        %v1826 = vpow.pop %v1825
        %v1827 = vmul.f32 %v1813, 1.442695
        %v1828 = vpow.pop %v1827
        %v1829 = vmul.f32 %v1814, 1.442695
        %v1830 = vpow.pop %v1829
        %v1831 = vsel %vm1488, %v1816, 0.0
        %1832 = vadd.xlane.f32.xlu0 %v1831
        %v1833 = vpop.xlane.xlu0 %1832
        %v1834 = vsel %vm1488, %v1818, 0.0
        %1835 = vadd.xlane.f32.xlu0 %v1834
        %v1836 = vpop.xlane.xlu0 %1835
        %v1837 = vsel %vm1488, %v1820, 0.0
        %1838 = vadd.xlane.f32.xlu0 %v1837
        %v1839 = vpop.xlane.xlu0 %1838
        %v1840 = vsel %vm1488, %v1822, 0.0
        %1841 = vadd.xlane.f32.xlu0 %v1840
        %v1842 = vpop.xlane.xlu0 %1841
        %v1843 = vsel %vm1488, %v1824, 0.0
        %1844 = vadd.xlane.f32.xlu0 %v1843
        %v1845 = vpop.xlane.xlu0 %1844
        %v1846 = vsel %vm1488, %v1826, 0.0
        %1847 = vadd.xlane.f32.xlu0 %v1846
        %v1848 = vpop.xlane.xlu0 %1847
        %v1849 = vsel %vm1488, %v1828, 0.0
        %1850 = vadd.xlane.f32.xlu0 %v1849
        %v1851 = vpop.xlane.xlu0 %1850
        %v1852 = vsel %vm1488, %v1830, 0.0
        %1853 = vadd.xlane.f32.xlu0 %v1852
        %v1854 = vpop.xlane.xlu0 %1853
        %v1855 = vpack.c.bf16 %v1818, %v1816
        %v1856 = vpack.c.bf16 %v1822, %v1820
        %v1857 = vpack.c.bf16 %v1826, %v1824
        %v1858 = vpack.c.bf16 %v1830, %v1828
        %1863 = vrot.lane.b32.xlu0 %v1386, 96
        %v1864 = vpop.permute.xlu0 %1863
        %1865 = vrot.lane.b32.xlu0 %v1387, 96
        %v1866 = vpop.permute.xlu0 %1865
        %1867 = vrot.lane.b32.xlu0 %v1388, 96
        %v1868 = vpop.permute.xlu0 %1867
        %1869 = vrot.lane.b32.xlu0 %v1389, 96
        %v1870 = vpop.permute.xlu0 %1869
        %v1876 = vsel %vm1488, %v1855, 0
        %v1879 = vsel %vm1488, %v1856, 0
        %v1882 = vsel %vm1488, %v1857, 0
        %v1885 = vsel %vm1488, %v1858, 0
        %1887 = vmatprep.subr.bf16.mxu0 0
        %1888 = vmatpush1.bf16.msra.mxu0 %v1864
        %1889 = vmatprep.subr.bf16.mxu0 0
        %1890 = vmatpush1.bf16.msra.mxu0 %v1866
        %1891 = vmatprep.subr.bf16.mxu0 0
        %1892 = vmatpush1.bf16.msra.mxu0 %v1868
        %1893 = vmatprep.subr.bf16.mxu0 0
        %1894 = vmatpush1.bf16.msra.mxu0 %v1870
        %1895 = vmatprep.subr.bf16.mxu0 0
        %1896 = vmatpush1.bf16.msra.mxu0 0
        %1897 = vmatprep.subr.bf16.mxu0 0
        %1898 = vmatpush1.bf16.msra.mxu0 0
        %1899 = vmatprep.subr.bf16.mxu0 0
        %1900 = vmatpush1.bf16.msra.mxu0 0
        %1901 = vmatprep.subr.bf16.mxu0 0
        %1902 = vmatpush1.bf16.msra.mxu0 0
        %1903 = vmatprep.subr.bf16.mxu0 0
        %1904 = vmatpush1.bf16.msra.mxu0 0
        %1905 = vmatprep.subr.bf16.mxu0 0
        %1906 = vmatpush1.bf16.msra.mxu0 0
        %1907 = vmatprep.subr.bf16.mxu0 0
        %1908 = vmatpush1.bf16.msra.mxu0 0
        %1909 = vmatprep.subr.bf16.mxu0 0
        %1910 = vmatpush1.bf16.msra.mxu0 0
        %1911 = vmatprep.subr.bf16.mxu0 0
        %1912 = vmatpush1.bf16.msra.mxu0 0
        %1913 = vmatprep.subr.bf16.mxu0 0
        %1914 = vmatpush1.bf16.msra.mxu0 0
        %1915 = vmatprep.subr.bf16.mxu0 0
        %1916 = vmatpush1.bf16.msra.mxu0 0
        %1917 = vmatprep.subr.bf16.mxu0 0
        %1918 = vmatpush1.bf16.msra.mxu0 0
        %1919 = vmatprep.mubr.bf16.mxu0 0
        %1920 = vmatmul.mubr.bf16.gmra.mrb[0].mxu0 %v1876
        %v1921 = vpop.f32.mrb[0].mxu0
        %v1922 = vadd.f32 0.0, %v1921
        %v1923 = vpop.f32.mrb[0].mxu0
        %v1924 = vpop.f32.mrb[0].mxu0
        %v1925 = vadd.f32 0.0, %v1924
        %v1926 = vpop.f32.mrb[0].mxu0
        %1927 = vmatprep.mubr.bf16.mxu0 0
        %1928 = vmatmul.mubr.bf16.gmra.mrb[0].mxu0 %v1879
        %v1929 = vpop.f32.mrb[0].mxu0
        %v1930 = vadd.f32 0.0, %v1929
        %v1931 = vpop.f32.mrb[0].mxu0
        %v1932 = vpop.f32.mrb[0].mxu0
        %v1933 = vadd.f32 0.0, %v1932
        %v1934 = vpop.f32.mrb[0].mxu0
        %1935 = vmatprep.mubr.bf16.mxu0 0
        %1936 = vmatmul.mubr.bf16.gmra.mrb[0].mxu0 %v1882
        %v1937 = vpop.f32.mrb[0].mxu0
        %v1938 = vadd.f32 0.0, %v1937
        %v1939 = vpop.f32.mrb[0].mxu0
        %v1940 = vpop.f32.mrb[0].mxu0
        %v1941 = vadd.f32 0.0, %v1940
        %v1942 = vpop.f32.mrb[0].mxu0
        %1943 = vmatprep.mubr.bf16.mxu0 0
        %1944 = vmatmul.mubr.bf16.gmra.mrb[0].mxu0 %v1885
        %v1945 = vpop.f32.mrb[0].mxu0
        %v1946 = vadd.f32 0.0, %v1945
        %v1947 = vpop.f32.mrb[0].mxu0
        %v1948 = vpop.f32.mrb[0].mxu0
        %v1949 = vadd.f32 0.0, %v1948
        %v1950 = vpop.f32.mrb[0].mxu0
        %1951 = vdwg.mxu0
        %v1952 = vrcp.pop %v1833
        %v1953 = vrcp.pop %v1836
        %v1954 = vrcp.pop %v1839
        %v1955 = vrcp.pop %v1842
        %v1956 = vrcp.pop %v1845
        %v1957 = vrcp.pop %v1848
        %v1958 = vrcp.pop %v1851
        %v1959 = vrcp.pop %v1854
        %v1960 = vmul.f32 %v1922, %v1952
        %v1961 = vmul.f32 %v1925, %v1953
        %v1962 = vmul.f32 %v1930, %v1954
        %v1963 = vmul.f32 %v1933, %v1955
        %v1964 = vmul.f32 %v1938, %v1956
        %v1965 = vmul.f32 %v1941, %v1957
        %v1966 = vmul.f32 %v1946, %v1958
        %v1967 = vmul.f32 %v1949, %v1959
        %v1968 = vpack.c.bf16 %v1961, %v1960
        %v1969 = vpack.c.bf16 %v1963, %v1962
        %v1970 = vpack.c.bf16 %v1965, %v1964
        %v1971 = vpack.c.bf16 %v1967, %v1966
        %v1976 = vunpack.c.l.b16 %v1366
        %v1977 = vunpack.c.l.b16 %v1367
        %v1978 = vunpack.c.l.b16 %v1368
        %v1979 = vunpack.c.l.b16 %v1369
        %v1980 = vpack.c.b16 %v1977, %v1976
        %v1981 = vpack.c.b16 %v1979, %v1978
        %v1985 = vsel %vm1390, %v1968, 0
        %v1988 = vsel %vm1390, %v1969, 0
        %v1991 = vsel %vm1390, %v1970, 0
        %v1994 = vsel %vm1390, %v1971, 0
        %1996 = vmatprep.subr.bf16.mxu0 0
        %1997 = vmatpush1.bf16.msra.mxu0 %v1980
        %1998 = vmatprep.subr.bf16.mxu0 0
        %1999 = vmatpush1.bf16.msra.mxu0 %v1981
        %2000 = vmatprep.subr.bf16.mxu0 0
        %2001 = vmatpush1.bf16.msra.mxu0 0
        %2002 = vmatprep.subr.bf16.mxu0 0
        %2003 = vmatpush1.bf16.msra.mxu0 0
        %2004 = vmatprep.subr.bf16.mxu0 0
        %2005 = vmatpush1.bf16.msra.mxu0 0
        %2006 = vmatprep.subr.bf16.mxu0 0
        %2007 = vmatpush1.bf16.msra.mxu0 0
        %2008 = vmatprep.subr.bf16.mxu0 0
        %2009 = vmatpush1.bf16.msra.mxu0 0
        %2010 = vmatprep.subr.bf16.mxu0 0
        %2011 = vmatpush1.bf16.msra.mxu0 0
        %2012 = vmatprep.subr.bf16.mxu0 0
        %2013 = vmatpush1.bf16.msra.mxu0 0
        %2014 = vmatprep.subr.bf16.mxu0 0
        %2015 = vmatpush1.bf16.msra.mxu0 0
        %2016 = vmatprep.subr.bf16.mxu0 0
        %2017 = vmatpush1.bf16.msra.mxu0 0
        %2018 = vmatprep.subr.bf16.mxu0 0
        %2019 = vmatpush1.bf16.msra.mxu0 0
        %2020 = vmatprep.subr.bf16.mxu0 0
        %2021 = vmatpush1.bf16.msra.mxu0 0
        %2022 = vmatprep.subr.bf16.mxu0 0
        %2023 = vmatpush1.bf16.msra.mxu0 0
        %2024 = vmatprep.subr.bf16.mxu0 0
        %2025 = vmatpush1.bf16.msra.mxu0 0
        %2026 = vmatprep.subr.bf16.mxu0 0
        %2027 = vmatpush1.bf16.msra.mxu0 0
        %2028 = vmatprep.mubr.bf16.mxu0 0
        %2029 = vmatmul.mubr.bf16.gmra.mrb[0].mxu0 %v1985
        %v2030 = vpop.f32.mrb[0].mxu0
        %v2031 = vadd.f32 0.0, %v2030
        %v2032 = vpop.f32.mrb[0].mxu0
        %v2033 = vpop.f32.mrb[0].mxu0
        %v2034 = vadd.f32 0.0, %v2033
        %v2035 = vpop.f32.mrb[0].mxu0
        %2036 = vmatprep.mubr.bf16.mxu0 0
        %2037 = vmatmul.mubr.bf16.gmra.mrb[0].mxu0 %v1988
        %v2038 = vpop.f32.mrb[0].mxu0
        %v2039 = vadd.f32 0.0, %v2038
        %v2040 = vpop.f32.mrb[0].mxu0
        %v2041 = vpop.f32.mrb[0].mxu0
        %v2042 = vadd.f32 0.0, %v2041
        %v2043 = vpop.f32.mrb[0].mxu0
        %2044 = vmatprep.mubr.bf16.mxu0 0
        %2045 = vmatmul.mubr.bf16.gmra.mrb[0].mxu0 %v1991
        %v2046 = vpop.f32.mrb[0].mxu0
        %v2047 = vadd.f32 0.0, %v2046
        %v2048 = vpop.f32.mrb[0].mxu0
        %v2049 = vpop.f32.mrb[0].mxu0
        %v2050 = vadd.f32 0.0, %v2049
        %v2051 = vpop.f32.mrb[0].mxu0
        %2052 = vmatprep.mubr.bf16.mxu0 0
        %2053 = vmatmul.mubr.bf16.gmra.mrb[0].mxu0 %v1994
        %v2054 = vpop.f32.mrb[0].mxu0
        %v2055 = vadd.f32 0.0, %v2054
        %v2056 = vpop.f32.mrb[0].mxu0
        %v2057 = vpop.f32.mrb[0].mxu0
        %v2058 = vadd.f32 0.0, %v2057
        %v2059 = vpop.f32.mrb[0].mxu0
        %2060 = vdwg.mxu0
        %v2065 = vunpack.c.l.b16 %v1362
        %v2066 = vunpack.c.l.b16 %v1363
        %v2067 = vunpack.c.l.b16 %v1364
        %v2068 = vunpack.c.l.b16 %v1365
        %v2069 = vpack.c.b16 %v2066, %v2065
        %v2070 = vpack.c.b16 %v2068, %v2067
        %v2074 = vsel %vm1390, %v1658, 0
        %v2077 = vsel %vm1390, %v1659, 0
        %v2080 = vsel %vm1390, %v1660, 0
        %v2083 = vsel %vm1390, %v1661, 0
        %2085 = vmatprep.subr.bf16.mxu0 0
        %2086 = vmatpush1.bf16.msra.mxu0 %v2069
        %2087 = vmatprep.subr.bf16.mxu0 0
        %2088 = vmatpush1.bf16.msra.mxu0 %v2070
        %2089 = vmatprep.subr.bf16.mxu0 0
        %2090 = vmatpush1.bf16.msra.mxu0 0
        %2091 = vmatprep.subr.bf16.mxu0 0
        %2092 = vmatpush1.bf16.msra.mxu0 0
        %2093 = vmatprep.subr.bf16.mxu0 0
        %2094 = vmatpush1.bf16.msra.mxu0 0
        %2095 = vmatprep.subr.bf16.mxu0 0
        %2096 = vmatpush1.bf16.msra.mxu0 0
        %2097 = vmatprep.subr.bf16.mxu0 0
        %2098 = vmatpush1.bf16.msra.mxu0 0
        %2099 = vmatprep.subr.bf16.mxu0 0
        %2100 = vmatpush1.bf16.msra.mxu0 0
        %2101 = vmatprep.subr.bf16.mxu0 0
        %2102 = vmatpush1.bf16.msra.mxu0 0
        %2103 = vmatprep.subr.bf16.mxu0 0
        %2104 = vmatpush1.bf16.msra.mxu0 0
        %2105 = vmatprep.subr.bf16.mxu0 0
        %2106 = vmatpush1.bf16.msra.mxu0 0
        %2107 = vmatprep.subr.bf16.mxu0 0
        %2108 = vmatpush1.bf16.msra.mxu0 0
        %2109 = vmatprep.subr.bf16.mxu0 0
        %2110 = vmatpush1.bf16.msra.mxu0 0
        %2111 = vmatprep.subr.bf16.mxu0 0
        %2112 = vmatpush1.bf16.msra.mxu0 0
        %2113 = vmatprep.subr.bf16.mxu0 0
        %2114 = vmatpush1.bf16.msra.mxu0 0
        %2115 = vmatprep.subr.bf16.mxu0 0
        %2116 = vmatpush1.bf16.msra.mxu0 0
        %2117 = vmatprep.mubr.bf16.mxu0 0
        %2118 = vmatmul.mubr.bf16.gmra.mrb[0].mxu0 %v2074
        %v2119 = vpop.f32.mrb[0].mxu0
        %v2120 = vadd.f32 %v2031, %v2119
        %v2121 = vpop.f32.mrb[0].mxu0
        %v2122 = vpop.f32.mrb[0].mxu0
        %v2123 = vadd.f32 %v2034, %v2122
        %v2124 = vpop.f32.mrb[0].mxu0
        %2125 = vmatprep.mubr.bf16.mxu0 0
        %2126 = vmatmul.mubr.bf16.gmra.mrb[0].mxu0 %v2077
        %v2127 = vpop.f32.mrb[0].mxu0
        %v2128 = vadd.f32 %v2039, %v2127
        %v2129 = vpop.f32.mrb[0].mxu0
        %v2130 = vpop.f32.mrb[0].mxu0
        %v2131 = vadd.f32 %v2042, %v2130
        %v2132 = vpop.f32.mrb[0].mxu0
        %2133 = vmatprep.mubr.bf16.mxu0 0
        %2134 = vmatmul.mubr.bf16.gmra.mrb[0].mxu0 %v2080
        %v2135 = vpop.f32.mrb[0].mxu0
        %v2136 = vadd.f32 %v2047, %v2135
        %v2137 = vpop.f32.mrb[0].mxu0
        %v2138 = vpop.f32.mrb[0].mxu0
        %v2139 = vadd.f32 %v2050, %v2138
        %v2140 = vpop.f32.mrb[0].mxu0
        %2141 = vmatprep.mubr.bf16.mxu0 0
        %2142 = vmatmul.mubr.bf16.gmra.mrb[0].mxu0 %v2083
        %v2143 = vpop.f32.mrb[0].mxu0
        %v2144 = vadd.f32 %v2055, %v2143
        %v2145 = vpop.f32.mrb[0].mxu0
        %v2146 = vpop.f32.mrb[0].mxu0
        %v2147 = vadd.f32 %v2058, %v2146
        %v2148 = vpop.f32.mrb[0].mxu0
        %2149 = vdwg.mxu0
        %2150 = vrot.lane.b32.xlu0 %v1378, 64
        %v2151 = vpop.permute.xlu0 %2150
        %2152 = vrot.lane.b32.xlu0 %v1379, 64
        %v2153 = vpop.permute.xlu0 %2152
        %2154 = vrot.lane.b32.xlu0 %v1380, 64
        %v2155 = vpop.permute.xlu0 %2154
        %2156 = vrot.lane.b32.xlu0 %v1381, 64
        %v2157 = vpop.permute.xlu0 %2156
        %2158 = vrot.lane.b32.xlu0 %v1382, 64
        %v2159 = vpop.permute.xlu0 %2158
        %2160 = vrot.lane.b32.xlu0 %v1383, 64
        %v2161 = vpop.permute.xlu0 %2160
        %2162 = vrot.lane.b32.xlu0 %v1384, 64
        %v2163 = vpop.permute.xlu0 %2162
        %2164 = vrot.lane.b32.xlu0 %v1385, 64
        %v2165 = vpop.permute.xlu0 %2164
        %v2167 = vsel %vm1390, %v2151, 0
        %v2170 = vsel %vm1390, %v2153, 0
        %v2173 = vsel %vm1390, %v2155, 0
        %v2176 = vsel %vm1390, %v2157, 0
        %v2179 = vsel %vm1390, %v2159, 0
        %v2182 = vsel %vm1390, %v2161, 0
        %v2185 = vsel %vm1390, %v2163, 0
        %v2188 = vsel %vm1390, %v2165, 0
        %2190 = vmatprep.subr.bf16.mxu0 0
        %2191 = vmatpush1.bf16.xpose.msra.mxu0 %v2179
        %2192 = vmatprep.subr.bf16.mxu0 0
        %2193 = vmatpush1.bf16.xpose.msra.mxu0 %v2182
        %2194 = vmatprep.subr.bf16.mxu0 0
        %2195 = vmatpush1.bf16.xpose.msra.mxu0 %v2185
        %2196 = vmatprep.subr.bf16.mxu0 0
        %2197 = vmatpush1.bf16.xpose.msra.mxu0 %v2188
        %2198 = vmatprep.subr.bf16.mxu0 0
        %2199 = vmatpush1.bf16.xpose.msra.mxu0 0
        %2200 = vmatprep.subr.bf16.mxu0 0
        %2201 = vmatpush1.bf16.xpose.msra.mxu0 0
        %2202 = vmatprep.subr.bf16.mxu0 0
        %2203 = vmatpush1.bf16.xpose.msra.mxu0 0
        %2204 = vmatprep.subr.bf16.mxu0 0
        %2205 = vmatpush1.bf16.xpose.msra.mxu0 0
        %2206 = vmatprep.subr.bf16.mxu0 0
        %2207 = vmatpush1.bf16.xpose.msra.mxu0 0
        %2208 = vmatprep.subr.bf16.mxu0 0
        %2209 = vmatpush1.bf16.xpose.msra.mxu0 0
        %2210 = vmatprep.subr.bf16.mxu0 0
        %2211 = vmatpush1.bf16.xpose.msra.mxu0 0
        %2212 = vmatprep.subr.bf16.mxu0 0
        %2213 = vmatpush1.bf16.xpose.msra.mxu0 0
        %2214 = vmatprep.subr.bf16.mxu0 0
        %2215 = vmatpush1.bf16.xpose.msra.mxu0 0
        %2216 = vmatprep.subr.bf16.mxu0 0
        %2217 = vmatpush1.bf16.xpose.msra.mxu0 0
        %2218 = vmatprep.subr.bf16.mxu0 0
        %2219 = vmatpush1.bf16.xpose.msra.mxu0 0
        %2220 = vmatprep.subr.bf16.mxu0 0
        %2221 = vmatpush1.bf16.xpose.msra.mxu0 0
        %2222 = vmatprep.mubr.bf16.mxu0 0
        %2223 = vmatmul.mubr.bf16.gmra.mrb[0].mxu0 %v2167
        %v2224 = vpop.f32.mrb[0].mxu0
        %v2225 = vadd.f32 0.0, %v2224
        %v2226 = vpop.f32.mrb[0].mxu0
        %v2227 = vpop.f32.mrb[0].mxu0
        %v2228 = vadd.f32 0.0, %v2227
        %v2229 = vpop.f32.mrb[0].mxu0
        %2230 = vmatprep.mubr.bf16.mxu0 0
        %2231 = vmatmul.mubr.bf16.gmra.mrb[0].mxu0 %v2170
        %v2232 = vpop.f32.mrb[0].mxu0
        %v2233 = vadd.f32 0.0, %v2232
        %v2234 = vpop.f32.mrb[0].mxu0
        %v2235 = vpop.f32.mrb[0].mxu0
        %v2236 = vadd.f32 0.0, %v2235
        %v2237 = vpop.f32.mrb[0].mxu0
        %2238 = vmatprep.mubr.bf16.mxu0 0
        %2239 = vmatmul.mubr.bf16.gmra.mrb[0].mxu0 %v2173
        %v2240 = vpop.f32.mrb[0].mxu0
        %v2241 = vadd.f32 0.0, %v2240
        %v2242 = vpop.f32.mrb[0].mxu0
        %v2243 = vpop.f32.mrb[0].mxu0
        %v2244 = vadd.f32 0.0, %v2243
        %v2245 = vpop.f32.mrb[0].mxu0
        %2246 = vmatprep.mubr.bf16.mxu0 0
        %2247 = vmatmul.mubr.bf16.gmra.mrb[0].mxu0 %v2176
        %v2248 = vpop.f32.mrb[0].mxu0
        %v2249 = vadd.f32 0.0, %v2248
        %v2250 = vpop.f32.mrb[0].mxu0
        %v2251 = vpop.f32.mrb[0].mxu0
        %v2252 = vadd.f32 0.0, %v2251
        %v2253 = vpop.f32.mrb[0].mxu0
        %2254 = vdwg.mxu0
        %v2255 = vmul.f32 %v2225, 0.17677669
        %v2256 = vmul.f32 %v2228, 0.17677669
        %v2257 = vmul.f32 %v2233, 0.17677669
        %v2258 = vmul.f32 %v2236, 0.17677669
        %v2259 = vmul.f32 %v2241, 0.17677669
        %v2260 = vmul.f32 %v2244, 0.17677669
        %v2261 = vmul.f32 %v2249, 0.17677669
        %v2262 = vmul.f32 %v2252, 0.17677669
        %v2263 = vsel %vm1488, %v2255, -inf
        %2264 = vmax.xlane.f32.xlu0 %v2263
        %v2265 = vpop.xlane.xlu0 %2264
        %v2266 = vsel %vm1488, %v2256, -inf
        %2267 = vmax.xlane.f32.xlu0 %v2266
        %v2268 = vpop.xlane.xlu0 %2267
        %v2269 = vsel %vm1488, %v2257, -inf
        %2270 = vmax.xlane.f32.xlu0 %v2269
        %v2271 = vpop.xlane.xlu0 %2270
        %v2272 = vsel %vm1488, %v2258, -inf
        %2273 = vmax.xlane.f32.xlu0 %v2272
        %v2274 = vpop.xlane.xlu0 %2273
        %v2275 = vsel %vm1488, %v2259, -inf
        %2276 = vmax.xlane.f32.xlu0 %v2275
        %v2277 = vpop.xlane.xlu0 %2276
        %v2278 = vsel %vm1488, %v2260, -inf
        %2279 = vmax.xlane.f32.xlu0 %v2278
        %v2280 = vpop.xlane.xlu0 %2279
        %v2281 = vsel %vm1488, %v2261, -inf
        %2282 = vmax.xlane.f32.xlu0 %v2281
        %v2283 = vpop.xlane.xlu0 %2282
        %v2284 = vsel %vm1488, %v2262, -inf
        %2285 = vmax.xlane.f32.xlu0 %v2284
        %v2286 = vpop.xlane.xlu0 %2285
        %v2287 = vsub.f32 %v2255, %v2265
        %v2288 = vsub.f32 %v2256, %v2268
        %v2289 = vsub.f32 %v2257, %v2271
        %v2290 = vsub.f32 %v2258, %v2274
        %v2291 = vsub.f32 %v2259, %v2277
        %v2292 = vsub.f32 %v2260, %v2280
        %v2293 = vsub.f32 %v2261, %v2283
        %v2294 = vsub.f32 %v2262, %v2286
        %v2295 = vmul.f32 %v2287, 1.442695
        %v2296 = vpow.pop %v2295
        %v2297 = vmul.f32 %v2288, 1.442695
        %v2298 = vpow.pop %v2297
        %v2299 = vmul.f32 %v2289, 1.442695
        %v2300 = vpow.pop %v2299
        %v2301 = vmul.f32 %v2290, 1.442695
        %v2302 = vpow.pop %v2301
        %v2303 = vmul.f32 %v2291, 1.442695
        %v2304 = vpow.pop %v2303
        %v2305 = vmul.f32 %v2292, 1.442695
        %v2306 = vpow.pop %v2305
        %v2307 = vmul.f32 %v2293, 1.442695
        %v2308 = vpow.pop %v2307
        %v2309 = vmul.f32 %v2294, 1.442695
        %v2310 = vpow.pop %v2309
        %v2311 = vsel %vm1488, %v2296, 0.0
        %2312 = vadd.xlane.f32.xlu0 %v2311
        %v2313 = vpop.xlane.xlu0 %2312
        %v2314 = vsel %vm1488, %v2298, 0.0
        %2315 = vadd.xlane.f32.xlu0 %v2314
        %v2316 = vpop.xlane.xlu0 %2315
        %v2317 = vsel %vm1488, %v2300, 0.0
        %2318 = vadd.xlane.f32.xlu0 %v2317
        %v2319 = vpop.xlane.xlu0 %2318
        %v2320 = vsel %vm1488, %v2302, 0.0
        %2321 = vadd.xlane.f32.xlu0 %v2320
        %v2322 = vpop.xlane.xlu0 %2321
        %v2323 = vsel %vm1488, %v2304, 0.0
        %2324 = vadd.xlane.f32.xlu0 %v2323
        %v2325 = vpop.xlane.xlu0 %2324
        %v2326 = vsel %vm1488, %v2306, 0.0
        %2327 = vadd.xlane.f32.xlu0 %v2326
        %v2328 = vpop.xlane.xlu0 %2327
        %v2329 = vsel %vm1488, %v2308, 0.0
        %2330 = vadd.xlane.f32.xlu0 %v2329
        %v2331 = vpop.xlane.xlu0 %2330
        %v2332 = vsel %vm1488, %v2310, 0.0
        %2333 = vadd.xlane.f32.xlu0 %v2332
        %v2334 = vpop.xlane.xlu0 %2333
        %v2335 = vpack.c.bf16 %v2298, %v2296
        %v2336 = vpack.c.bf16 %v2302, %v2300
        %v2337 = vpack.c.bf16 %v2306, %v2304
        %v2338 = vpack.c.bf16 %v2310, %v2308
        %2339 = vrot.lane.b32.xlu0 %v1386, 64
        %v2340 = vpop.permute.xlu0 %2339
        %2341 = vrot.lane.b32.xlu0 %v1387, 64
        %v2342 = vpop.permute.xlu0 %2341
        %2343 = vrot.lane.b32.xlu0 %v1388, 64
        %v2344 = vpop.permute.xlu0 %2343
        %2345 = vrot.lane.b32.xlu0 %v1389, 64
        %v2346 = vpop.permute.xlu0 %2345
        %v2352 = vsel %vm1488, %v2335, 0
        %v2355 = vsel %vm1488, %v2336, 0
        %v2358 = vsel %vm1488, %v2337, 0
        %v2361 = vsel %vm1488, %v2338, 0
        %2363 = vmatprep.subr.bf16.mxu0 0
        %2364 = vmatpush1.bf16.msra.mxu0 %v2340
        %2365 = vmatprep.subr.bf16.mxu0 0
        %2366 = vmatpush1.bf16.msra.mxu0 %v2342
        %2367 = vmatprep.subr.bf16.mxu0 0
        %2368 = vmatpush1.bf16.msra.mxu0 %v2344
        %2369 = vmatprep.subr.bf16.mxu0 0
        %2370 = vmatpush1.bf16.msra.mxu0 %v2346
        %2371 = vmatprep.subr.bf16.mxu0 0
        %2372 = vmatpush1.bf16.msra.mxu0 0
        %2373 = vmatprep.subr.bf16.mxu0 0
        %2374 = vmatpush1.bf16.msra.mxu0 0
        %2375 = vmatprep.subr.bf16.mxu0 0
        %2376 = vmatpush1.bf16.msra.mxu0 0
        %2377 = vmatprep.subr.bf16.mxu0 0
        %2378 = vmatpush1.bf16.msra.mxu0 0
        %2379 = vmatprep.subr.bf16.mxu0 0
        %2380 = vmatpush1.bf16.msra.mxu0 0
        %2381 = vmatprep.subr.bf16.mxu0 0
        %2382 = vmatpush1.bf16.msra.mxu0 0
        %2383 = vmatprep.subr.bf16.mxu0 0
        %2384 = vmatpush1.bf16.msra.mxu0 0
        %2385 = vmatprep.subr.bf16.mxu0 0
        %2386 = vmatpush1.bf16.msra.mxu0 0
        %2387 = vmatprep.subr.bf16.mxu0 0
        %2388 = vmatpush1.bf16.msra.mxu0 0
        %2389 = vmatprep.subr.bf16.mxu0 0
        %2390 = vmatpush1.bf16.msra.mxu0 0
        %2391 = vmatprep.subr.bf16.mxu0 0
        %2392 = vmatpush1.bf16.msra.mxu0 0
        %2393 = vmatprep.subr.bf16.mxu0 0
        %2394 = vmatpush1.bf16.msra.mxu0 0
        %2395 = vmatprep.mubr.bf16.mxu0 0
        %2396 = vmatmul.mubr.bf16.gmra.mrb[0].mxu0 %v2352
        %v2397 = vpop.f32.mrb[0].mxu0
        %v2398 = vadd.f32 0.0, %v2397
        %v2399 = vpop.f32.mrb[0].mxu0
        %v2400 = vpop.f32.mrb[0].mxu0
        %v2401 = vadd.f32 0.0, %v2400
        %v2402 = vpop.f32.mrb[0].mxu0
        %2403 = vmatprep.mubr.bf16.mxu0 0
        %2404 = vmatmul.mubr.bf16.gmra.mrb[0].mxu0 %v2355
        %v2405 = vpop.f32.mrb[0].mxu0
        %v2406 = vadd.f32 0.0, %v2405
        %v2407 = vpop.f32.mrb[0].mxu0
        %v2408 = vpop.f32.mrb[0].mxu0
        %v2409 = vadd.f32 0.0, %v2408
        %v2410 = vpop.f32.mrb[0].mxu0
        %2411 = vmatprep.mubr.bf16.mxu0 0
        %2412 = vmatmul.mubr.bf16.gmra.mrb[0].mxu0 %v2358
        %v2413 = vpop.f32.mrb[0].mxu0
        %v2414 = vadd.f32 0.0, %v2413
        %v2415 = vpop.f32.mrb[0].mxu0
        %v2416 = vpop.f32.mrb[0].mxu0
        %v2417 = vadd.f32 0.0, %v2416
        %v2418 = vpop.f32.mrb[0].mxu0
        %2419 = vmatprep.mubr.bf16.mxu0 0
        %2420 = vmatmul.mubr.bf16.gmra.mrb[0].mxu0 %v2361
        %v2421 = vpop.f32.mrb[0].mxu0
        %v2422 = vadd.f32 0.0, %v2421
        %v2423 = vpop.f32.mrb[0].mxu0
        %v2424 = vpop.f32.mrb[0].mxu0
        %v2425 = vadd.f32 0.0, %v2424
        %v2426 = vpop.f32.mrb[0].mxu0
        %2427 = vdwg.mxu0
        %v2428 = vrcp.pop %v2313
        %v2429 = vrcp.pop %v2316
        %v2430 = vrcp.pop %v2319
        %v2431 = vrcp.pop %v2322
        %v2432 = vrcp.pop %v2325
        %v2433 = vrcp.pop %v2328
        %v2434 = vrcp.pop %v2331
        %v2435 = vrcp.pop %v2334
        %v2436 = vmul.f32 %v2398, %v2428
        %v2437 = vmul.f32 %v2401, %v2429
        %v2438 = vmul.f32 %v2406, %v2430
        %v2439 = vmul.f32 %v2409, %v2431
        %v2440 = vmul.f32 %v2414, %v2432
        %v2441 = vmul.f32 %v2417, %v2433
        %v2442 = vmul.f32 %v2422, %v2434
        %v2443 = vmul.f32 %v2425, %v2435
        %v2444 = vpack.c.bf16 %v2437, %v2436
        %v2445 = vpack.c.bf16 %v2439, %v2438
        %v2446 = vpack.c.bf16 %v2441, %v2440
        %v2447 = vpack.c.bf16 %v2443, %v2442
        %v2452 = vunpack.c.l.b16 %v1370
        %v2453 = vunpack.c.l.b16 %v1371
        %v2454 = vunpack.c.l.b16 %v1372
        %v2455 = vunpack.c.l.b16 %v1373
        %v2456 = vpack.c.b16 %v2453, %v2452
        %v2457 = vpack.c.b16 %v2455, %v2454
        %v2461 = vsel %vm1390, %v2444, 0
        %v2464 = vsel %vm1390, %v2445, 0
        %v2467 = vsel %vm1390, %v2446, 0
        %v2470 = vsel %vm1390, %v2447, 0
        %2472 = vmatprep.subr.bf16.mxu0 0
        %2473 = vmatpush1.bf16.msra.mxu0 %v2456
        %2474 = vmatprep.subr.bf16.mxu0 0
        %2475 = vmatpush1.bf16.msra.mxu0 %v2457
        %2476 = vmatprep.subr.bf16.mxu0 0
        %2477 = vmatpush1.bf16.msra.mxu0 0
        %2478 = vmatprep.subr.bf16.mxu0 0
        %2479 = vmatpush1.bf16.msra.mxu0 0
        %2480 = vmatprep.subr.bf16.mxu0 0
        %2481 = vmatpush1.bf16.msra.mxu0 0
        %2482 = vmatprep.subr.bf16.mxu0 0
        %2483 = vmatpush1.bf16.msra.mxu0 0
        %2484 = vmatprep.subr.bf16.mxu0 0
        %2485 = vmatpush1.bf16.msra.mxu0 0
        %2486 = vmatprep.subr.bf16.mxu0 0
        %2487 = vmatpush1.bf16.msra.mxu0 0
        %2488 = vmatprep.subr.bf16.mxu0 0
        %2489 = vmatpush1.bf16.msra.mxu0 0
        %2490 = vmatprep.subr.bf16.mxu0 0
        %2491 = vmatpush1.bf16.msra.mxu0 0
        %2492 = vmatprep.subr.bf16.mxu0 0
        %2493 = vmatpush1.bf16.msra.mxu0 0
        %2494 = vmatprep.subr.bf16.mxu0 0
        %2495 = vmatpush1.bf16.msra.mxu0 0
        %2496 = vmatprep.subr.bf16.mxu0 0
        %2497 = vmatpush1.bf16.msra.mxu0 0
        %2498 = vmatprep.subr.bf16.mxu0 0
        %2499 = vmatpush1.bf16.msra.mxu0 0
        %2500 = vmatprep.subr.bf16.mxu0 0
        %2501 = vmatpush1.bf16.msra.mxu0 0
        %2502 = vmatprep.subr.bf16.mxu0 0
        %2503 = vmatpush1.bf16.msra.mxu0 0
        %2504 = vmatprep.mubr.bf16.mxu0 0
        %2505 = vmatmul.mubr.bf16.gmra.mrb[0].mxu0 %v2461
        %v2506 = vpop.f32.mrb[0].mxu0
        %v2507 = vadd.f32 0.0, %v2506
        %v2508 = vpop.f32.mrb[0].mxu0
        %v2509 = vpop.f32.mrb[0].mxu0
        %v2510 = vadd.f32 0.0, %v2509
        %v2511 = vpop.f32.mrb[0].mxu0
        %2512 = vmatprep.mubr.bf16.mxu0 0
        %2513 = vmatmul.mubr.bf16.gmra.mrb[0].mxu0 %v2464
        %v2514 = vpop.f32.mrb[0].mxu0
        %v2515 = vadd.f32 0.0, %v2514
        %v2516 = vpop.f32.mrb[0].mxu0
        %v2517 = vpop.f32.mrb[0].mxu0
        %v2518 = vadd.f32 0.0, %v2517
        %v2519 = vpop.f32.mrb[0].mxu0
        %2520 = vmatprep.mubr.bf16.mxu0 0
        %2521 = vmatmul.mubr.bf16.gmra.mrb[0].mxu0 %v2467
        %v2522 = vpop.f32.mrb[0].mxu0
        %v2523 = vadd.f32 0.0, %v2522
        %v2524 = vpop.f32.mrb[0].mxu0
        %v2525 = vpop.f32.mrb[0].mxu0
        %v2526 = vadd.f32 0.0, %v2525
        %v2527 = vpop.f32.mrb[0].mxu0
        %2528 = vmatprep.mubr.bf16.mxu0 0
        %2529 = vmatmul.mubr.bf16.gmra.mrb[0].mxu0 %v2470
        %v2530 = vpop.f32.mrb[0].mxu0
        %v2531 = vadd.f32 0.0, %v2530
        %v2532 = vpop.f32.mrb[0].mxu0
        %v2533 = vpop.f32.mrb[0].mxu0
        %v2534 = vadd.f32 0.0, %v2533
        %v2535 = vpop.f32.mrb[0].mxu0
        %2536 = vdwg.mxu0
        %v2537 = vadd.f32 %v2120, %v2507
        %v2538 = vadd.f32 %v2123, %v2510
        %v2539 = vadd.f32 %v2128, %v2515
        %v2540 = vadd.f32 %v2131, %v2518
        %v2541 = vadd.f32 %v2136, %v2523
        %v2542 = vadd.f32 %v2139, %v2526
        %v2543 = vadd.f32 %v2144, %v2531
        %v2544 = vadd.f32 %v2147, %v2534
        %2545 = vrot.lane.b32.xlu0 %v1378, 32
        %v2546 = vpop.permute.xlu0 %2545
        %2547 = vrot.lane.b32.xlu0 %v1379, 32
        %v2548 = vpop.permute.xlu0 %2547
        %2549 = vrot.lane.b32.xlu0 %v1380, 32
        %v2550 = vpop.permute.xlu0 %2549
        %2551 = vrot.lane.b32.xlu0 %v1381, 32
        %v2552 = vpop.permute.xlu0 %2551
        %2553 = vrot.lane.b32.xlu0 %v1382, 32
        %v2554 = vpop.permute.xlu0 %2553
        %2555 = vrot.lane.b32.xlu0 %v1383, 32
        %v2556 = vpop.permute.xlu0 %2555
        %2557 = vrot.lane.b32.xlu0 %v1384, 32
        %v2558 = vpop.permute.xlu0 %2557
        %2559 = vrot.lane.b32.xlu0 %v1385, 32
        %v2560 = vpop.permute.xlu0 %2559
        %v2562 = vsel %vm1390, %v2546, 0
        %v2565 = vsel %vm1390, %v2548, 0
        %v2568 = vsel %vm1390, %v2550, 0
        %v2571 = vsel %vm1390, %v2552, 0
        %v2574 = vsel %vm1390, %v2554, 0
        %v2577 = vsel %vm1390, %v2556, 0
        %v2580 = vsel %vm1390, %v2558, 0
        %v2583 = vsel %vm1390, %v2560, 0
        %2585 = vmatprep.subr.bf16.mxu0 0
        %2586 = vmatpush1.bf16.xpose.msra.mxu0 %v2574
        %2587 = vmatprep.subr.bf16.mxu0 0
        %2588 = vmatpush1.bf16.xpose.msra.mxu0 %v2577
        %2589 = vmatprep.subr.bf16.mxu0 0
        %2590 = vmatpush1.bf16.xpose.msra.mxu0 %v2580
        %2591 = vmatprep.subr.bf16.mxu0 0
        %2592 = vmatpush1.bf16.xpose.msra.mxu0 %v2583
        %2593 = vmatprep.subr.bf16.mxu0 0
        %2594 = vmatpush1.bf16.xpose.msra.mxu0 0
        %2595 = vmatprep.subr.bf16.mxu0 0
        %2596 = vmatpush1.bf16.xpose.msra.mxu0 0
        %2597 = vmatprep.subr.bf16.mxu0 0
        %2598 = vmatpush1.bf16.xpose.msra.mxu0 0
        %2599 = vmatprep.subr.bf16.mxu0 0
        %2600 = vmatpush1.bf16.xpose.msra.mxu0 0
        %2601 = vmatprep.subr.bf16.mxu0 0
        %2602 = vmatpush1.bf16.xpose.msra.mxu0 0
        %2603 = vmatprep.subr.bf16.mxu0 0
        %2604 = vmatpush1.bf16.xpose.msra.mxu0 0
        %2605 = vmatprep.subr.bf16.mxu0 0
        %2606 = vmatpush1.bf16.xpose.msra.mxu0 0
        %2607 = vmatprep.subr.bf16.mxu0 0
        %2608 = vmatpush1.bf16.xpose.msra.mxu0 0
        %2609 = vmatprep.subr.bf16.mxu0 0
        %2610 = vmatpush1.bf16.xpose.msra.mxu0 0
        %2611 = vmatprep.subr.bf16.mxu0 0
        %2612 = vmatpush1.bf16.xpose.msra.mxu0 0
        %2613 = vmatprep.subr.bf16.mxu0 0
        %2614 = vmatpush1.bf16.xpose.msra.mxu0 0
        %2615 = vmatprep.subr.bf16.mxu0 0
        %2616 = vmatpush1.bf16.xpose.msra.mxu0 0
        %2617 = vmatprep.mubr.bf16.mxu0 0
        %2618 = vmatmul.mubr.bf16.gmra.mrb[0].mxu0 %v2562
        %v2619 = vpop.f32.mrb[0].mxu0
        %v2620 = vadd.f32 0.0, %v2619
        %v2621 = vpop.f32.mrb[0].mxu0
        %v2622 = vpop.f32.mrb[0].mxu0
        %v2623 = vadd.f32 0.0, %v2622
        %v2624 = vpop.f32.mrb[0].mxu0
        %2625 = vmatprep.mubr.bf16.mxu0 0
        %2626 = vmatmul.mubr.bf16.gmra.mrb[0].mxu0 %v2565
        %v2627 = vpop.f32.mrb[0].mxu0
        %v2628 = vadd.f32 0.0, %v2627
        %v2629 = vpop.f32.mrb[0].mxu0
        %v2630 = vpop.f32.mrb[0].mxu0
        %v2631 = vadd.f32 0.0, %v2630
        %v2632 = vpop.f32.mrb[0].mxu0
        %2633 = vmatprep.mubr.bf16.mxu0 0
        %2634 = vmatmul.mubr.bf16.gmra.mrb[0].mxu0 %v2568
        %v2635 = vpop.f32.mrb[0].mxu0
        %v2636 = vadd.f32 0.0, %v2635
        %v2637 = vpop.f32.mrb[0].mxu0
        %v2638 = vpop.f32.mrb[0].mxu0
        %v2639 = vadd.f32 0.0, %v2638
        %v2640 = vpop.f32.mrb[0].mxu0
        %2641 = vmatprep.mubr.bf16.mxu0 0
        %2642 = vmatmul.mubr.bf16.gmra.mrb[0].mxu0 %v2571
        %v2643 = vpop.f32.mrb[0].mxu0
        %v2644 = vadd.f32 0.0, %v2643
        %v2645 = vpop.f32.mrb[0].mxu0
        %v2646 = vpop.f32.mrb[0].mxu0
        %v2647 = vadd.f32 0.0, %v2646
        %v2648 = vpop.f32.mrb[0].mxu0
        %2649 = vdwg.mxu0
        %v2650 = vmul.f32 %v2620, 0.17677669
        %v2651 = vmul.f32 %v2623, 0.17677669
        %v2652 = vmul.f32 %v2628, 0.17677669
        %v2653 = vmul.f32 %v2631, 0.17677669
        %v2654 = vmul.f32 %v2636, 0.17677669
        %v2655 = vmul.f32 %v2639, 0.17677669
        %v2656 = vmul.f32 %v2644, 0.17677669
        %v2657 = vmul.f32 %v2647, 0.17677669
        %v2658 = vsel %vm1488, %v2650, -inf
        %2659 = vmax.xlane.f32.xlu0 %v2658
        %v2660 = vpop.xlane.xlu0 %2659
        %v2661 = vsel %vm1488, %v2651, -inf
        %2662 = vmax.xlane.f32.xlu0 %v2661
        %v2663 = vpop.xlane.xlu0 %2662
        %v2664 = vsel %vm1488, %v2652, -inf
        %2665 = vmax.xlane.f32.xlu0 %v2664
        %v2666 = vpop.xlane.xlu0 %2665
        %v2667 = vsel %vm1488, %v2653, -inf
        %2668 = vmax.xlane.f32.xlu0 %v2667
        %v2669 = vpop.xlane.xlu0 %2668
        %v2670 = vsel %vm1488, %v2654, -inf
        %2671 = vmax.xlane.f32.xlu0 %v2670
        %v2672 = vpop.xlane.xlu0 %2671
        %v2673 = vsel %vm1488, %v2655, -inf
        %2674 = vmax.xlane.f32.xlu0 %v2673
        %v2675 = vpop.xlane.xlu0 %2674
        %v2676 = vsel %vm1488, %v2656, -inf
        %2677 = vmax.xlane.f32.xlu0 %v2676
        %v2678 = vpop.xlane.xlu0 %2677
        %v2679 = vsel %vm1488, %v2657, -inf
        %2680 = vmax.xlane.f32.xlu0 %v2679
        %v2681 = vpop.xlane.xlu0 %2680
        %v2682 = vsub.f32 %v2650, %v2660
        %v2683 = vsub.f32 %v2651, %v2663
        %v2684 = vsub.f32 %v2652, %v2666
        %v2685 = vsub.f32 %v2653, %v2669
        %v2686 = vsub.f32 %v2654, %v2672
        %v2687 = vsub.f32 %v2655, %v2675
        %v2688 = vsub.f32 %v2656, %v2678
        %v2689 = vsub.f32 %v2657, %v2681
        %v2690 = vmul.f32 %v2682, 1.442695
        %v2691 = vpow.pop %v2690
        %v2692 = vmul.f32 %v2683, 1.442695
        %v2693 = vpow.pop %v2692
        %v2694 = vmul.f32 %v2684, 1.442695
        %v2695 = vpow.pop %v2694
        %v2696 = vmul.f32 %v2685, 1.442695
        %v2697 = vpow.pop %v2696
        %v2698 = vmul.f32 %v2686, 1.442695
        %v2699 = vpow.pop %v2698
        %v2700 = vmul.f32 %v2687, 1.442695
        %v2701 = vpow.pop %v2700
        %v2702 = vmul.f32 %v2688, 1.442695
        %v2703 = vpow.pop %v2702
        %v2704 = vmul.f32 %v2689, 1.442695
        %v2705 = vpow.pop %v2704
        %v2706 = vsel %vm1488, %v2691, 0.0
        %2707 = vadd.xlane.f32.xlu0 %v2706
        %v2708 = vpop.xlane.xlu0 %2707
        %v2709 = vsel %vm1488, %v2693, 0.0
        %2710 = vadd.xlane.f32.xlu0 %v2709
        %v2711 = vpop.xlane.xlu0 %2710
        %v2712 = vsel %vm1488, %v2695, 0.0
        %2713 = vadd.xlane.f32.xlu0 %v2712
        %v2714 = vpop.xlane.xlu0 %2713
        %v2715 = vsel %vm1488, %v2697, 0.0
        %2716 = vadd.xlane.f32.xlu0 %v2715
        %v2717 = vpop.xlane.xlu0 %2716
        %v2718 = vsel %vm1488, %v2699, 0.0
        %2719 = vadd.xlane.f32.xlu0 %v2718
        %v2720 = vpop.xlane.xlu0 %2719
        %v2721 = vsel %vm1488, %v2701, 0.0
        %2722 = vadd.xlane.f32.xlu0 %v2721
        %v2723 = vpop.xlane.xlu0 %2722
        %v2724 = vsel %vm1488, %v2703, 0.0
        %2725 = vadd.xlane.f32.xlu0 %v2724
        %v2726 = vpop.xlane.xlu0 %2725
        %v2727 = vsel %vm1488, %v2705, 0.0
        %2728 = vadd.xlane.f32.xlu0 %v2727
        %v2729 = vpop.xlane.xlu0 %2728
        %v2730 = vpack.c.bf16 %v2693, %v2691
        %v2731 = vpack.c.bf16 %v2697, %v2695
        %v2732 = vpack.c.bf16 %v2701, %v2699
        %v2733 = vpack.c.bf16 %v2705, %v2703
        %2734 = vrot.lane.b32.xlu0 %v1386, 32
        %v2735 = vpop.permute.xlu0 %2734
        %2736 = vrot.lane.b32.xlu0 %v1387, 32
        %v2737 = vpop.permute.xlu0 %2736
        %2738 = vrot.lane.b32.xlu0 %v1388, 32
        %v2739 = vpop.permute.xlu0 %2738
        %2740 = vrot.lane.b32.xlu0 %v1389, 32
        %v2741 = vpop.permute.xlu0 %2740
        %v2747 = vsel %vm1488, %v2730, 0
        %v2750 = vsel %vm1488, %v2731, 0
        %v2753 = vsel %vm1488, %v2732, 0
        %v2756 = vsel %vm1488, %v2733, 0
        %2758 = vmatprep.subr.bf16.mxu0 0
        %2759 = vmatpush1.bf16.msra.mxu0 %v2735
        %2760 = vmatprep.subr.bf16.mxu0 0
        %2761 = vmatpush1.bf16.msra.mxu0 %v2737
        %2762 = vmatprep.subr.bf16.mxu0 0
        %2763 = vmatpush1.bf16.msra.mxu0 %v2739
        %2764 = vmatprep.subr.bf16.mxu0 0
        %2765 = vmatpush1.bf16.msra.mxu0 %v2741
        %2766 = vmatprep.subr.bf16.mxu0 0
        %2767 = vmatpush1.bf16.msra.mxu0 0
        %2768 = vmatprep.subr.bf16.mxu0 0
        %2769 = vmatpush1.bf16.msra.mxu0 0
        %2770 = vmatprep.subr.bf16.mxu0 0
        %2771 = vmatpush1.bf16.msra.mxu0 0
        %2772 = vmatprep.subr.bf16.mxu0 0
        %2773 = vmatpush1.bf16.msra.mxu0 0
        %2774 = vmatprep.subr.bf16.mxu0 0
        %2775 = vmatpush1.bf16.msra.mxu0 0
        %2776 = vmatprep.subr.bf16.mxu0 0
        %2777 = vmatpush1.bf16.msra.mxu0 0
        %2778 = vmatprep.subr.bf16.mxu0 0
        %2779 = vmatpush1.bf16.msra.mxu0 0
        %2780 = vmatprep.subr.bf16.mxu0 0
        %2781 = vmatpush1.bf16.msra.mxu0 0
        %2782 = vmatprep.subr.bf16.mxu0 0
        %2783 = vmatpush1.bf16.msra.mxu0 0
        %2784 = vmatprep.subr.bf16.mxu0 0
        %2785 = vmatpush1.bf16.msra.mxu0 0
        %2786 = vmatprep.subr.bf16.mxu0 0
        %2787 = vmatpush1.bf16.msra.mxu0 0
        %2788 = vmatprep.subr.bf16.mxu0 0
        %2789 = vmatpush1.bf16.msra.mxu0 0
        %2790 = vmatprep.mubr.bf16.mxu0 0
        %2791 = vmatmul.mubr.bf16.gmra.mrb[0].mxu0 %v2747
        %v2792 = vpop.f32.mrb[0].mxu0
        %v2793 = vadd.f32 0.0, %v2792
        %v2794 = vpop.f32.mrb[0].mxu0
        %v2795 = vpop.f32.mrb[0].mxu0
        %v2796 = vadd.f32 0.0, %v2795
        %v2797 = vpop.f32.mrb[0].mxu0
        %2798 = vmatprep.mubr.bf16.mxu0 0
        %2799 = vmatmul.mubr.bf16.gmra.mrb[0].mxu0 %v2750
        %v2800 = vpop.f32.mrb[0].mxu0
        %v2801 = vadd.f32 0.0, %v2800
        %v2802 = vpop.f32.mrb[0].mxu0
        %v2803 = vpop.f32.mrb[0].mxu0
        %v2804 = vadd.f32 0.0, %v2803
        %v2805 = vpop.f32.mrb[0].mxu0
        %2806 = vmatprep.mubr.bf16.mxu0 0
        %2807 = vmatmul.mubr.bf16.gmra.mrb[0].mxu0 %v2753
        %v2808 = vpop.f32.mrb[0].mxu0
        %v2809 = vadd.f32 0.0, %v2808
        %v2810 = vpop.f32.mrb[0].mxu0
        %v2811 = vpop.f32.mrb[0].mxu0
        %v2812 = vadd.f32 0.0, %v2811
        %v2813 = vpop.f32.mrb[0].mxu0
        %2814 = vmatprep.mubr.bf16.mxu0 0
        %2815 = vmatmul.mubr.bf16.gmra.mrb[0].mxu0 %v2756
        %v2816 = vpop.f32.mrb[0].mxu0
        %v2817 = vadd.f32 0.0, %v2816
        %v2818 = vpop.f32.mrb[0].mxu0
        %v2819 = vpop.f32.mrb[0].mxu0
        %v2820 = vadd.f32 0.0, %v2819
        %v2821 = vpop.f32.mrb[0].mxu0
        %2822 = vdwg.mxu0
        %v2823 = vrcp.pop %v2708
        %v2824 = vrcp.pop %v2711
        %v2825 = vrcp.pop %v2714
        %v2826 = vrcp.pop %v2717
        %v2827 = vrcp.pop %v2720
        %v2828 = vrcp.pop %v2723
        %v2829 = vrcp.pop %v2726
        %v2830 = vrcp.pop %v2729
        %v2831 = vmul.f32 %v2793, %v2823
        %v2832 = vmul.f32 %v2796, %v2824
        %v2833 = vmul.f32 %v2801, %v2825
        %v2834 = vmul.f32 %v2804, %v2826
        %v2835 = vmul.f32 %v2809, %v2827
        %v2836 = vmul.f32 %v2812, %v2828
        %v2837 = vmul.f32 %v2817, %v2829
        %v2838 = vmul.f32 %v2820, %v2830
        %v2839 = vpack.c.bf16 %v2832, %v2831
        %v2840 = vpack.c.bf16 %v2834, %v2833
        %v2841 = vpack.c.bf16 %v2836, %v2835
        %v2842 = vpack.c.bf16 %v2838, %v2837
        %v2847 = vunpack.c.l.b16 %v1374
        %v2848 = vunpack.c.l.b16 %v1375
        %v2849 = vunpack.c.l.b16 %v1376
        %v2850 = vunpack.c.l.b16 %v1377
        %v2851 = vpack.c.b16 %v2848, %v2847
        %v2852 = vpack.c.b16 %v2850, %v2849
        %v2856 = vsel %vm1390, %v2839, 0
        %v2859 = vsel %vm1390, %v2840, 0
        %v2862 = vsel %vm1390, %v2841, 0
        %v2865 = vsel %vm1390, %v2842, 0
        %2867 = vmatprep.subr.bf16.mxu0 0
        %2868 = vmatpush1.bf16.msra.mxu0 %v2851
        %2869 = vmatprep.subr.bf16.mxu0 0
        %2870 = vmatpush1.bf16.msra.mxu0 %v2852
        %2871 = vmatprep.subr.bf16.mxu0 0
        %2872 = vmatpush1.bf16.msra.mxu0 0
        %2873 = vmatprep.subr.bf16.mxu0 0
        %2874 = vmatpush1.bf16.msra.mxu0 0
        %2875 = vmatprep.subr.bf16.mxu0 0
        %2876 = vmatpush1.bf16.msra.mxu0 0
        %2877 = vmatprep.subr.bf16.mxu0 0
        %2878 = vmatpush1.bf16.msra.mxu0 0
        %2879 = vmatprep.subr.bf16.mxu0 0
        %2880 = vmatpush1.bf16.msra.mxu0 0
        %2881 = vmatprep.subr.bf16.mxu0 0
        %2882 = vmatpush1.bf16.msra.mxu0 0
        %2883 = vmatprep.subr.bf16.mxu0 0
        %2884 = vmatpush1.bf16.msra.mxu0 0
        %2885 = vmatprep.subr.bf16.mxu0 0
        %2886 = vmatpush1.bf16.msra.mxu0 0
        %2887 = vmatprep.subr.bf16.mxu0 0
        %2888 = vmatpush1.bf16.msra.mxu0 0
        %2889 = vmatprep.subr.bf16.mxu0 0
        %2890 = vmatpush1.bf16.msra.mxu0 0
        %2891 = vmatprep.subr.bf16.mxu0 0
        %2892 = vmatpush1.bf16.msra.mxu0 0
        %2893 = vmatprep.subr.bf16.mxu0 0
        %2894 = vmatpush1.bf16.msra.mxu0 0
        %2895 = vmatprep.subr.bf16.mxu0 0
        %2896 = vmatpush1.bf16.msra.mxu0 0
        %2897 = vmatprep.subr.bf16.mxu0 0
        %2898 = vmatpush1.bf16.msra.mxu0 0
        %2899 = vmatprep.mubr.bf16.mxu0 0
        %2900 = vmatmul.mubr.bf16.gmra.mrb[0].mxu0 %v2856
        %v2901 = vpop.f32.mrb[0].mxu0
        %v2902 = vadd.f32 0.0, %v2901
        %v2903 = vpop.f32.mrb[0].mxu0
        %v2904 = vpop.f32.mrb[0].mxu0
        %v2905 = vadd.f32 0.0, %v2904
        %v2906 = vpop.f32.mrb[0].mxu0
        %2907 = vmatprep.mubr.bf16.mxu0 0
        %2908 = vmatmul.mubr.bf16.gmra.mrb[0].mxu0 %v2859
        %v2909 = vpop.f32.mrb[0].mxu0
        %v2910 = vadd.f32 0.0, %v2909
        %v2911 = vpop.f32.mrb[0].mxu0
        %v2912 = vpop.f32.mrb[0].mxu0
        %v2913 = vadd.f32 0.0, %v2912
        %v2914 = vpop.f32.mrb[0].mxu0
        %2915 = vmatprep.mubr.bf16.mxu0 0
        %2916 = vmatmul.mubr.bf16.gmra.mrb[0].mxu0 %v2862
        %v2917 = vpop.f32.mrb[0].mxu0
        %v2918 = vadd.f32 0.0, %v2917
        %v2919 = vpop.f32.mrb[0].mxu0
        %v2920 = vpop.f32.mrb[0].mxu0
        %v2921 = vadd.f32 0.0, %v2920
        %v2922 = vpop.f32.mrb[0].mxu0
        %2923 = vmatprep.mubr.bf16.mxu0 0
        %2924 = vmatmul.mubr.bf16.gmra.mrb[0].mxu0 %v2865
        %v2925 = vpop.f32.mrb[0].mxu0
        %v2926 = vadd.f32 0.0, %v2925
        %v2927 = vpop.f32.mrb[0].mxu0
        %v2928 = vpop.f32.mrb[0].mxu0
        %v2929 = vadd.f32 0.0, %v2928
        %v2930 = vpop.f32.mrb[0].mxu0
        %2931 = vdwg.mxu0
        %v2932 = vadd.f32 %v2537, %v2902
        %v2933 = vadd.f32 %v2538, %v2905
        %v2934 = vadd.f32 %v2539, %v2910
        %v2935 = vadd.f32 %v2540, %v2913
        %v2936 = vadd.f32 %v2541, %v2918
        %v2937 = vadd.f32 %v2542, %v2921
        %v2938 = vadd.f32 %v2543, %v2926
        %v2939 = vadd.f32 %v2544, %v2929
        %v2940 = vadd.f32 %v728, %v2932
        %v2941 = vadd.f32 %v729, %v2933
        %v2942 = vadd.f32 %v730, %v2934
        %v2943 = vadd.f32 %v731, %v2935
        %v2944 = vadd.f32 %v732, %v2936
        %v2945 = vadd.f32 %v733, %v2937
        %v2946 = vadd.f32 %v734, %v2938
        %v2947 = vadd.f32 %v735, %v2939
        %v2948 = vld [vmem:[%s678] sm:$0x1]
        %v2950 = vlaneseq
        %v2951 = vshrl.u32 %v2950, 7
        %v2952 = vsub.s32 0, %v2951
        %v2953 = vrot.slane %v2948, %v2952
        %v2955 = vadd.f32 %v2940, %v2953
        %v2956 = vadd.f32 %v2941, %v2953
        %v2957 = vadd.f32 %v2942, %v2953
        %v2958 = vadd.f32 %v2943, %v2953
        %v2959 = vadd.f32 %v2944, %v2953
        %v2960 = vadd.f32 %v2945, %v2953
        %v2961 = vadd.f32 %v2946, %v2953
        %v2962 = vadd.f32 %v2947, %v2953
        %2963 = vst [vmem:[#allocation11] sm:$0xff] %v2955
        %2964 = vst [vmem:[#allocation11 + $0x8] sm:$0xff] %v2956
        %2965 = vst [vmem:[#allocation11 + $0x10] sm:$0xff] %v2957
        %2966 = vst [vmem:[#allocation11 + $0x18] sm:$0xff] %v2958
        %2967 = vst [vmem:[#allocation11 + $0x20] sm:$0xff] %v2959
        %2968 = vst [vmem:[#allocation11 + $0x28] sm:$0xff] %v2960
        %2969 = vst [vmem:[#allocation11 + $0x30] sm:$0xff] %v2961
        %2970 = vst [vmem:[#allocation11 + $0x38] sm:$0xff] %v2962
        %v2971 = vpack.c.bf16 %v1231, %v1227
        %v2972 = vpack.c.bf16 %v1241, %v1237
        %v2973 = vpack.c.bf16 %v1251, %v1247
        %v2974 = vpack.c.bf16 %v1261, %v1257
        %v2975 = vpack.c.bf16 %v1233, %v1229
        %v2976 = vpack.c.bf16 %v1243, %v1239
        %v2977 = vpack.c.bf16 %v1253, %v1249
        %v2978 = vpack.c.bf16 %v1263, %v1259
        %v2979 = vpack.c.bf16 %v1335, %v1332
        %v2980 = vpack.c.bf16 %v1343, %v1340
        %v2981 = vpack.c.bf16 %v1351, %v1348
        %v2982 = vpack.c.bf16 %v1359, %v1356
        %v2984 = vsel %vm1390, %v2971, 0
        %v2987 = vsel %vm1390, %v2972, 0
        %v2990 = vsel %vm1390, %v2973, 0
        %v2993 = vsel %vm1390, %v2974, 0
        %v2996 = vsel %vm1390, %v2975, 0
        %v2999 = vsel %vm1390, %v2976, 0
        %v3002 = vsel %vm1390, %v2977, 0
        %v3005 = vsel %vm1390, %v2978, 0
        %3007 = vmatprep.subr.bf16.mxu0 0
        %3008 = vmatpush1.bf16.xpose.msra.mxu0 %v2996
        %3009 = vmatprep.subr.bf16.mxu0 0
        %3010 = vmatpush1.bf16.xpose.msra.mxu0 %v2999
        %3011 = vmatprep.subr.bf16.mxu0 0
        %3012 = vmatpush1.bf16.xpose.msra.mxu0 %v3002
        %3013 = vmatprep.subr.bf16.mxu0 0
        %3014 = vmatpush1.bf16.xpose.msra.mxu0 %v3005
        %3015 = vmatprep.subr.bf16.mxu0 0
        %3016 = vmatpush1.bf16.xpose.msra.mxu0 0
        %3017 = vmatprep.subr.bf16.mxu0 0
        %3018 = vmatpush1.bf16.xpose.msra.mxu0 0
        %3019 = vmatprep.subr.bf16.mxu0 0
        %3020 = vmatpush1.bf16.xpose.msra.mxu0 0
        %3021 = vmatprep.subr.bf16.mxu0 0
        %3022 = vmatpush1.bf16.xpose.msra.mxu0 0
        %3023 = vmatprep.subr.bf16.mxu0 0
        %3024 = vmatpush1.bf16.xpose.msra.mxu0 0
        %3025 = vmatprep.subr.bf16.mxu0 0
        %3026 = vmatpush1.bf16.xpose.msra.mxu0 0
        %3027 = vmatprep.subr.bf16.mxu0 0
        %3028 = vmatpush1.bf16.xpose.msra.mxu0 0
        %3029 = vmatprep.subr.bf16.mxu0 0
        %3030 = vmatpush1.bf16.xpose.msra.mxu0 0
        %3031 = vmatprep.subr.bf16.mxu0 0
        %3032 = vmatpush1.bf16.xpose.msra.mxu0 0
        %3033 = vmatprep.subr.bf16.mxu0 0
        %3034 = vmatpush1.bf16.xpose.msra.mxu0 0
        %3035 = vmatprep.subr.bf16.mxu0 0
        %3036 = vmatpush1.bf16.xpose.msra.mxu0 0
        %3037 = vmatprep.subr.bf16.mxu0 0
        %3038 = vmatpush1.bf16.xpose.msra.mxu0 0
        %3039 = vmatprep.mubr.bf16.mxu0 0
        %3040 = vmatmul.mubr.bf16.gmra.mrb[0].mxu0 %v2984
        %v3041 = vpop.f32.mrb[0].mxu0
        %v3042 = vadd.f32 0.0, %v3041
        %v3043 = vpop.f32.mrb[0].mxu0
        %v3044 = vpop.f32.mrb[0].mxu0
        %v3045 = vadd.f32 0.0, %v3044
        %v3046 = vpop.f32.mrb[0].mxu0
        %3047 = vmatprep.mubr.bf16.mxu0 0
        %3048 = vmatmul.mubr.bf16.gmra.mrb[0].mxu0 %v2987
        %v3049 = vpop.f32.mrb[0].mxu0
        %v3050 = vadd.f32 0.0, %v3049
        %v3051 = vpop.f32.mrb[0].mxu0
        %v3052 = vpop.f32.mrb[0].mxu0
        %v3053 = vadd.f32 0.0, %v3052
        %v3054 = vpop.f32.mrb[0].mxu0
        %3055 = vmatprep.mubr.bf16.mxu0 0
        %3056 = vmatmul.mubr.bf16.gmra.mrb[0].mxu0 %v2990
        %v3057 = vpop.f32.mrb[0].mxu0
        %v3058 = vadd.f32 0.0, %v3057
        %v3059 = vpop.f32.mrb[0].mxu0
        %v3060 = vpop.f32.mrb[0].mxu0
        %v3061 = vadd.f32 0.0, %v3060
        %v3062 = vpop.f32.mrb[0].mxu0
        %3063 = vmatprep.mubr.bf16.mxu0 0
        %3064 = vmatmul.mubr.bf16.gmra.mrb[0].mxu0 %v2993
        %v3065 = vpop.f32.mrb[0].mxu0
        %v3066 = vadd.f32 0.0, %v3065
        %v3067 = vpop.f32.mrb[0].mxu0
        %v3068 = vpop.f32.mrb[0].mxu0
        %v3069 = vadd.f32 0.0, %v3068
        %v3070 = vpop.f32.mrb[0].mxu0
        %3071 = vdwg.mxu0
        %v3072 = vmul.f32 %v3042, 0.17677669
        %v3073 = vmul.f32 %v3045, 0.17677669
        %v3074 = vmul.f32 %v3050, 0.17677669
        %v3075 = vmul.f32 %v3053, 0.17677669
        %v3076 = vmul.f32 %v3058, 0.17677669
        %v3077 = vmul.f32 %v3061, 0.17677669
        %v3078 = vmul.f32 %v3066, 0.17677669
        %v3079 = vmul.f32 %v3069, 0.17677669
        %v3080 = vsel %vm1488, %v3072, -inf
        %3081 = vmax.xlane.f32.xlu0 %v3080
        %v3082 = vpop.xlane.xlu0 %3081
        %v3083 = vsel %vm1488, %v3073, -inf
        %3084 = vmax.xlane.f32.xlu0 %v3083
        %v3085 = vpop.xlane.xlu0 %3084
        %v3086 = vsel %vm1488, %v3074, -inf
        %3087 = vmax.xlane.f32.xlu0 %v3086
        %v3088 = vpop.xlane.xlu0 %3087
        %v3089 = vsel %vm1488, %v3075, -inf
        %3090 = vmax.xlane.f32.xlu0 %v3089
        %v3091 = vpop.xlane.xlu0 %3090
        %v3092 = vsel %vm1488, %v3076, -inf
        %3093 = vmax.xlane.f32.xlu0 %v3092
        %v3094 = vpop.xlane.xlu0 %3093
        %v3095 = vsel %vm1488, %v3077, -inf
        %3096 = vmax.xlane.f32.xlu0 %v3095
        %v3097 = vpop.xlane.xlu0 %3096
        %v3098 = vsel %vm1488, %v3078, -inf
        %3099 = vmax.xlane.f32.xlu0 %v3098
        %v3100 = vpop.xlane.xlu0 %3099
        %v3101 = vsel %vm1488, %v3079, -inf
        %3102 = vmax.xlane.f32.xlu0 %v3101
        %v3103 = vpop.xlane.xlu0 %3102
        %v3104 = vsub.f32 %v3072, %v3082
        %v3105 = vsub.f32 %v3073, %v3085
        %v3106 = vsub.f32 %v3074, %v3088
        %v3107 = vsub.f32 %v3075, %v3091
        %v3108 = vsub.f32 %v3076, %v3094
        %v3109 = vsub.f32 %v3077, %v3097
        %v3110 = vsub.f32 %v3078, %v3100
        %v3111 = vsub.f32 %v3079, %v3103
        %v3112 = vmul.f32 %v3104, 1.442695
        %v3113 = vpow.pop %v3112
        %v3114 = vmul.f32 %v3105, 1.442695
        %v3115 = vpow.pop %v3114
        %v3116 = vmul.f32 %v3106, 1.442695
        %v3117 = vpow.pop %v3116
        %v3118 = vmul.f32 %v3107, 1.442695
        %v3119 = vpow.pop %v3118
        %v3120 = vmul.f32 %v3108, 1.442695
        %v3121 = vpow.pop %v3120
        %v3122 = vmul.f32 %v3109, 1.442695
        %v3123 = vpow.pop %v3122
        %v3124 = vmul.f32 %v3110, 1.442695
        %v3125 = vpow.pop %v3124
        %v3126 = vmul.f32 %v3111, 1.442695
        %v3127 = vpow.pop %v3126
        %v3128 = vsel %vm1488, %v3113, 0.0
        %3129 = vadd.xlane.f32.xlu0 %v3128
        %v3130 = vpop.xlane.xlu0 %3129
        %v3131 = vsel %vm1488, %v3115, 0.0
        %3132 = vadd.xlane.f32.xlu0 %v3131
        %v3133 = vpop.xlane.xlu0 %3132
        %v3134 = vsel %vm1488, %v3117, 0.0
        %3135 = vadd.xlane.f32.xlu0 %v3134
        %v3136 = vpop.xlane.xlu0 %3135
        %v3137 = vsel %vm1488, %v3119, 0.0
        %3138 = vadd.xlane.f32.xlu0 %v3137
        %v3139 = vpop.xlane.xlu0 %3138
        %v3140 = vsel %vm1488, %v3121, 0.0
        %3141 = vadd.xlane.f32.xlu0 %v3140
        %v3142 = vpop.xlane.xlu0 %3141
        %v3143 = vsel %vm1488, %v3123, 0.0
        %3144 = vadd.xlane.f32.xlu0 %v3143
        %v3145 = vpop.xlane.xlu0 %3144
        %v3146 = vsel %vm1488, %v3125, 0.0
        %3147 = vadd.xlane.f32.xlu0 %v3146
        %v3148 = vpop.xlane.xlu0 %3147
        %v3149 = vsel %vm1488, %v3127, 0.0
        %3150 = vadd.xlane.f32.xlu0 %v3149
        %v3151 = vpop.xlane.xlu0 %3150
        %v3152 = vpack.c.bf16 %v3115, %v3113
        %v3153 = vpack.c.bf16 %v3119, %v3117
        %v3154 = vpack.c.bf16 %v3123, %v3121
        %v3155 = vpack.c.bf16 %v3127, %v3125
        %v3157 = vsel %vm1488, %v3152, 0
        %v3160 = vsel %vm1488, %v3153, 0
        %v3163 = vsel %vm1488, %v3154, 0
        %v3166 = vsel %vm1488, %v3155, 0
        %3168 = vmatprep.subr.bf16.mxu0 0
        %3169 = vmatpush1.bf16.msra.mxu0 %v2979
        %3170 = vmatprep.subr.bf16.mxu0 0
        %3171 = vmatpush1.bf16.msra.mxu0 %v2980
        %3172 = vmatprep.subr.bf16.mxu0 0
        %3173 = vmatpush1.bf16.msra.mxu0 %v2981
        %3174 = vmatprep.subr.bf16.mxu0 0
        %3175 = vmatpush1.bf16.msra.mxu0 %v2982
        %3176 = vmatprep.subr.bf16.mxu0 0
        %3177 = vmatpush1.bf16.msra.mxu0 0
        %3178 = vmatprep.subr.bf16.mxu0 0
        %3179 = vmatpush1.bf16.msra.mxu0 0
        %3180 = vmatprep.subr.bf16.mxu0 0
        %3181 = vmatpush1.bf16.msra.mxu0 0
        %3182 = vmatprep.subr.bf16.mxu0 0
        %3183 = vmatpush1.bf16.msra.mxu0 0
        %3184 = vmatprep.subr.bf16.mxu0 0
        %3185 = vmatpush1.bf16.msra.mxu0 0
        %3186 = vmatprep.subr.bf16.mxu0 0
        %3187 = vmatpush1.bf16.msra.mxu0 0
        %3188 = vmatprep.subr.bf16.mxu0 0
        %3189 = vmatpush1.bf16.msra.mxu0 0
        %3190 = vmatprep.subr.bf16.mxu0 0
        %3191 = vmatpush1.bf16.msra.mxu0 0
        %3192 = vmatprep.subr.bf16.mxu0 0
        %3193 = vmatpush1.bf16.msra.mxu0 0
        %3194 = vmatprep.subr.bf16.mxu0 0
        %3195 = vmatpush1.bf16.msra.mxu0 0
        %3196 = vmatprep.subr.bf16.mxu0 0
        %3197 = vmatpush1.bf16.msra.mxu0 0
        %3198 = vmatprep.subr.bf16.mxu0 0
        %3199 = vmatpush1.bf16.msra.mxu0 0
        %3200 = vmatprep.mubr.bf16.mxu0 0
        %3201 = vmatmul.mubr.bf16.gmra.mrb[0].mxu0 %v3157
        %v3202 = vpop.f32.mrb[0].mxu0
        %v3203 = vadd.f32 0.0, %v3202
        %v3204 = vpop.f32.mrb[0].mxu0
        %v3205 = vpop.f32.mrb[0].mxu0
        %v3206 = vadd.f32 0.0, %v3205
        %v3207 = vpop.f32.mrb[0].mxu0
        %3208 = vmatprep.mubr.bf16.mxu0 0
        %3209 = vmatmul.mubr.bf16.gmra.mrb[0].mxu0 %v3160
        %v3210 = vpop.f32.mrb[0].mxu0
        %v3211 = vadd.f32 0.0, %v3210
        %v3212 = vpop.f32.mrb[0].mxu0
        %v3213 = vpop.f32.mrb[0].mxu0
        %v3214 = vadd.f32 0.0, %v3213
        %v3215 = vpop.f32.mrb[0].mxu0
        %3216 = vmatprep.mubr.bf16.mxu0 0
        %3217 = vmatmul.mubr.bf16.gmra.mrb[0].mxu0 %v3163
        %v3218 = vpop.f32.mrb[0].mxu0
        %v3219 = vadd.f32 0.0, %v3218
        %v3220 = vpop.f32.mrb[0].mxu0
        %v3221 = vpop.f32.mrb[0].mxu0
        %v3222 = vadd.f32 0.0, %v3221
        %v3223 = vpop.f32.mrb[0].mxu0
        %3224 = vmatprep.mubr.bf16.mxu0 0
        %3225 = vmatmul.mubr.bf16.gmra.mrb[0].mxu0 %v3166
        %v3226 = vpop.f32.mrb[0].mxu0
        %v3227 = vadd.f32 0.0, %v3226
        %v3228 = vpop.f32.mrb[0].mxu0
        %v3229 = vpop.f32.mrb[0].mxu0
        %v3230 = vadd.f32 0.0, %v3229
        %v3231 = vpop.f32.mrb[0].mxu0
        %3232 = vdwg.mxu0
        %v3233 = vrcp.pop %v3130
        %v3234 = vrcp.pop %v3133
        %v3235 = vrcp.pop %v3136
        %v3236 = vrcp.pop %v3139
        %v3237 = vrcp.pop %v3142
        %v3238 = vrcp.pop %v3145
        %v3239 = vrcp.pop %v3148
        %v3240 = vrcp.pop %v3151
        %v3241 = vmul.f32 %v3203, %v3233
        %v3242 = vmul.f32 %v3206, %v3234
        %v3243 = vmul.f32 %v3211, %v3235
        %v3244 = vmul.f32 %v3214, %v3236
        %v3245 = vmul.f32 %v3219, %v3237
        %v3246 = vmul.f32 %v3222, %v3238
        %v3247 = vmul.f32 %v3227, %v3239
        %v3248 = vmul.f32 %v3230, %v3240
        %v3249 = vpack.c.bf16 %v3242, %v3241
        %v3250 = vpack.c.bf16 %v3244, %v3243
        %v3251 = vpack.c.bf16 %v3246, %v3245
        %v3252 = vpack.c.bf16 %v3248, %v3247
        %3257 = vrot.lane.b32.xlu0 %v2971, 96
        %v3258 = vpop.permute.xlu0 %3257
        %3259 = vrot.lane.b32.xlu0 %v2972, 96
        %v3260 = vpop.permute.xlu0 %3259
        %3261 = vrot.lane.b32.xlu0 %v2973, 96
        %v3262 = vpop.permute.xlu0 %3261
        %3263 = vrot.lane.b32.xlu0 %v2974, 96
        %v3264 = vpop.permute.xlu0 %3263
        %3269 = vrot.lane.b32.xlu0 %v2975, 96
        %v3270 = vpop.permute.xlu0 %3269
        %3271 = vrot.lane.b32.xlu0 %v2976, 96
        %v3272 = vpop.permute.xlu0 %3271
        %3273 = vrot.lane.b32.xlu0 %v2977, 96
        %v3274 = vpop.permute.xlu0 %3273
        %3275 = vrot.lane.b32.xlu0 %v2978, 96
        %v3276 = vpop.permute.xlu0 %3275
        %v3278 = vsel %vm1390, %v3258, 0
        %v3281 = vsel %vm1390, %v3260, 0
        %v3284 = vsel %vm1390, %v3262, 0
        %v3287 = vsel %vm1390, %v3264, 0
        %v3290 = vsel %vm1390, %v3270, 0
        %v3293 = vsel %vm1390, %v3272, 0
        %v3296 = vsel %vm1390, %v3274, 0
        %v3299 = vsel %vm1390, %v3276, 0
        %3301 = vmatprep.subr.bf16.mxu0 0
        %3302 = vmatpush1.bf16.xpose.msra.mxu0 %v3290
        %3303 = vmatprep.subr.bf16.mxu0 0
        %3304 = vmatpush1.bf16.xpose.msra.mxu0 %v3293
        %3305 = vmatprep.subr.bf16.mxu0 0
        %3306 = vmatpush1.bf16.xpose.msra.mxu0 %v3296
        %3307 = vmatprep.subr.bf16.mxu0 0
        %3308 = vmatpush1.bf16.xpose.msra.mxu0 %v3299
        %3309 = vmatprep.subr.bf16.mxu0 0
        %3310 = vmatpush1.bf16.xpose.msra.mxu0 0
        %3311 = vmatprep.subr.bf16.mxu0 0
        %3312 = vmatpush1.bf16.xpose.msra.mxu0 0
        %3313 = vmatprep.subr.bf16.mxu0 0
        %3314 = vmatpush1.bf16.xpose.msra.mxu0 0
        %3315 = vmatprep.subr.bf16.mxu0 0
        %3316 = vmatpush1.bf16.xpose.msra.mxu0 0
        %3317 = vmatprep.subr.bf16.mxu0 0
        %3318 = vmatpush1.bf16.xpose.msra.mxu0 0
        %3319 = vmatprep.subr.bf16.mxu0 0
        %3320 = vmatpush1.bf16.xpose.msra.mxu0 0
        %3321 = vmatprep.subr.bf16.mxu0 0
        %3322 = vmatpush1.bf16.xpose.msra.mxu0 0
        %3323 = vmatprep.subr.bf16.mxu0 0
        %3324 = vmatpush1.bf16.xpose.msra.mxu0 0
        %3325 = vmatprep.subr.bf16.mxu0 0
        %3326 = vmatpush1.bf16.xpose.msra.mxu0 0
        %3327 = vmatprep.subr.bf16.mxu0 0
        %3328 = vmatpush1.bf16.xpose.msra.mxu0 0
        %3329 = vmatprep.subr.bf16.mxu0 0
        %3330 = vmatpush1.bf16.xpose.msra.mxu0 0
        %3331 = vmatprep.subr.bf16.mxu0 0
        %3332 = vmatpush1.bf16.xpose.msra.mxu0 0
        %3333 = vmatprep.mubr.bf16.mxu0 0
        %3334 = vmatmul.mubr.bf16.gmra.mrb[0].mxu0 %v3278
        %v3335 = vpop.f32.mrb[0].mxu0
        %v3336 = vadd.f32 0.0, %v3335
        %v3337 = vpop.f32.mrb[0].mxu0
        %v3338 = vpop.f32.mrb[0].mxu0
        %v3339 = vadd.f32 0.0, %v3338
        %v3340 = vpop.f32.mrb[0].mxu0
        %3341 = vmatprep.mubr.bf16.mxu0 0
        %3342 = vmatmul.mubr.bf16.gmra.mrb[0].mxu0 %v3281
        %v3343 = vpop.f32.mrb[0].mxu0
        %v3344 = vadd.f32 0.0, %v3343
        %v3345 = vpop.f32.mrb[0].mxu0
        %v3346 = vpop.f32.mrb[0].mxu0
        %v3347 = vadd.f32 0.0, %v3346
        %v3348 = vpop.f32.mrb[0].mxu0
        %3349 = vmatprep.mubr.bf16.mxu0 0
        %3350 = vmatmul.mubr.bf16.gmra.mrb[0].mxu0 %v3284
        %v3351 = vpop.f32.mrb[0].mxu0
        %v3352 = vadd.f32 0.0, %v3351
        %v3353 = vpop.f32.mrb[0].mxu0
        %v3354 = vpop.f32.mrb[0].mxu0
        %v3355 = vadd.f32 0.0, %v3354
        %v3356 = vpop.f32.mrb[0].mxu0
        %3357 = vmatprep.mubr.bf16.mxu0 0
        %3358 = vmatmul.mubr.bf16.gmra.mrb[0].mxu0 %v3287
        %v3359 = vpop.f32.mrb[0].mxu0
        %v3360 = vadd.f32 0.0, %v3359
        %v3361 = vpop.f32.mrb[0].mxu0
        %v3362 = vpop.f32.mrb[0].mxu0
        %v3363 = vadd.f32 0.0, %v3362
        %v3364 = vpop.f32.mrb[0].mxu0
        %3365 = vdwg.mxu0
        %v3366 = vmul.f32 %v3336, 0.17677669
        %v3367 = vmul.f32 %v3339, 0.17677669
        %v3368 = vmul.f32 %v3344, 0.17677669
        %v3369 = vmul.f32 %v3347, 0.17677669
        %v3370 = vmul.f32 %v3352, 0.17677669
        %v3371 = vmul.f32 %v3355, 0.17677669
        %v3372 = vmul.f32 %v3360, 0.17677669
        %v3373 = vmul.f32 %v3363, 0.17677669
        %v3374 = vsel %vm1488, %v3366, -inf
        %3375 = vmax.xlane.f32.xlu0 %v3374
        %v3376 = vpop.xlane.xlu0 %3375
        %v3377 = vsel %vm1488, %v3367, -inf
        %3378 = vmax.xlane.f32.xlu0 %v3377
        %v3379 = vpop.xlane.xlu0 %3378
        %v3380 = vsel %vm1488, %v3368, -inf
        %3381 = vmax.xlane.f32.xlu0 %v3380
        %v3382 = vpop.xlane.xlu0 %3381
        %v3383 = vsel %vm1488, %v3369, -inf
        %3384 = vmax.xlane.f32.xlu0 %v3383
        %v3385 = vpop.xlane.xlu0 %3384
        %v3386 = vsel %vm1488, %v3370, -inf
        %3387 = vmax.xlane.f32.xlu0 %v3386
        %v3388 = vpop.xlane.xlu0 %3387
        %v3389 = vsel %vm1488, %v3371, -inf
        %3390 = vmax.xlane.f32.xlu0 %v3389
        %v3391 = vpop.xlane.xlu0 %3390
        %v3392 = vsel %vm1488, %v3372, -inf
        %3393 = vmax.xlane.f32.xlu0 %v3392
        %v3394 = vpop.xlane.xlu0 %3393
        %v3395 = vsel %vm1488, %v3373, -inf
        %3396 = vmax.xlane.f32.xlu0 %v3395
        %v3397 = vpop.xlane.xlu0 %3396
        %v3398 = vsub.f32 %v3366, %v3376
        %v3399 = vsub.f32 %v3367, %v3379
        %v3400 = vsub.f32 %v3368, %v3382
        %v3401 = vsub.f32 %v3369, %v3385
        %v3402 = vsub.f32 %v3370, %v3388
        %v3403 = vsub.f32 %v3371, %v3391
        %v3404 = vsub.f32 %v3372, %v3394
        %v3405 = vsub.f32 %v3373, %v3397
        %v3406 = vmul.f32 %v3398, 1.442695
        %v3407 = vpow.pop %v3406
        %v3408 = vmul.f32 %v3399, 1.442695
        %v3409 = vpow.pop %v3408
        %v3410 = vmul.f32 %v3400, 1.442695
        %v3411 = vpow.pop %v3410
        %v3412 = vmul.f32 %v3401, 1.442695
        %v3413 = vpow.pop %v3412
        %v3414 = vmul.f32 %v3402, 1.442695
        %v3415 = vpow.pop %v3414
        %v3416 = vmul.f32 %v3403, 1.442695
        %v3417 = vpow.pop %v3416
        %v3418 = vmul.f32 %v3404, 1.442695
        %v3419 = vpow.pop %v3418
        %v3420 = vmul.f32 %v3405, 1.442695
        %v3421 = vpow.pop %v3420
        %v3422 = vsel %vm1488, %v3407, 0.0
        %3423 = vadd.xlane.f32.xlu0 %v3422
        %v3424 = vpop.xlane.xlu0 %3423
        %v3425 = vsel %vm1488, %v3409, 0.0
        %3426 = vadd.xlane.f32.xlu0 %v3425
        %v3427 = vpop.xlane.xlu0 %3426
        %v3428 = vsel %vm1488, %v3411, 0.0
        %3429 = vadd.xlane.f32.xlu0 %v3428
        %v3430 = vpop.xlane.xlu0 %3429
        %v3431 = vsel %vm1488, %v3413, 0.0
        %3432 = vadd.xlane.f32.xlu0 %v3431
        %v3433 = vpop.xlane.xlu0 %3432
        %v3434 = vsel %vm1488, %v3415, 0.0
        %3435 = vadd.xlane.f32.xlu0 %v3434
        %v3436 = vpop.xlane.xlu0 %3435
        %v3437 = vsel %vm1488, %v3417, 0.0
        %3438 = vadd.xlane.f32.xlu0 %v3437
        %v3439 = vpop.xlane.xlu0 %3438
        %v3440 = vsel %vm1488, %v3419, 0.0
        %3441 = vadd.xlane.f32.xlu0 %v3440
        %v3442 = vpop.xlane.xlu0 %3441
        %v3443 = vsel %vm1488, %v3421, 0.0
        %3444 = vadd.xlane.f32.xlu0 %v3443
        %v3445 = vpop.xlane.xlu0 %3444
        %v3446 = vpack.c.bf16 %v3409, %v3407
        %v3447 = vpack.c.bf16 %v3413, %v3411
        %v3448 = vpack.c.bf16 %v3417, %v3415
        %v3449 = vpack.c.bf16 %v3421, %v3419
        %3454 = vrot.lane.b32.xlu0 %v2979, 96
        %v3455 = vpop.permute.xlu0 %3454
        %3456 = vrot.lane.b32.xlu0 %v2980, 96
        %v3457 = vpop.permute.xlu0 %3456
        %3458 = vrot.lane.b32.xlu0 %v2981, 96
        %v3459 = vpop.permute.xlu0 %3458
        %3460 = vrot.lane.b32.xlu0 %v2982, 96
        %v3461 = vpop.permute.xlu0 %3460
        %v3467 = vsel %vm1488, %v3446, 0
        %v3470 = vsel %vm1488, %v3447, 0
        %v3473 = vsel %vm1488, %v3448, 0
        %v3476 = vsel %vm1488, %v3449, 0
        %3478 = vmatprep.subr.bf16.mxu0 0
        %3479 = vmatpush1.bf16.msra.mxu0 %v3455
        %3480 = vmatprep.subr.bf16.mxu0 0
        %3481 = vmatpush1.bf16.msra.mxu0 %v3457
        %3482 = vmatprep.subr.bf16.mxu0 0
        %3483 = vmatpush1.bf16.msra.mxu0 %v3459
        %3484 = vmatprep.subr.bf16.mxu0 0
        %3485 = vmatpush1.bf16.msra.mxu0 %v3461
        %3486 = vmatprep.subr.bf16.mxu0 0
        %3487 = vmatpush1.bf16.msra.mxu0 0
        %3488 = vmatprep.subr.bf16.mxu0 0
        %3489 = vmatpush1.bf16.msra.mxu0 0
        %3490 = vmatprep.subr.bf16.mxu0 0
        %3491 = vmatpush1.bf16.msra.mxu0 0
        %3492 = vmatprep.subr.bf16.mxu0 0
        %3493 = vmatpush1.bf16.msra.mxu0 0
        %3494 = vmatprep.subr.bf16.mxu0 0
        %3495 = vmatpush1.bf16.msra.mxu0 0
        %3496 = vmatprep.subr.bf16.mxu0 0
        %3497 = vmatpush1.bf16.msra.mxu0 0
        %3498 = vmatprep.subr.bf16.mxu0 0
        %3499 = vmatpush1.bf16.msra.mxu0 0
        %3500 = vmatprep.subr.bf16.mxu0 0
        %3501 = vmatpush1.bf16.msra.mxu0 0
        %3502 = vmatprep.subr.bf16.mxu0 0
        %3503 = vmatpush1.bf16.msra.mxu0 0
        %3504 = vmatprep.subr.bf16.mxu0 0
        %3505 = vmatpush1.bf16.msra.mxu0 0
        %3506 = vmatprep.subr.bf16.mxu0 0
        %3507 = vmatpush1.bf16.msra.mxu0 0
        %3508 = vmatprep.subr.bf16.mxu0 0
        %3509 = vmatpush1.bf16.msra.mxu0 0
        %3510 = vmatprep.mubr.bf16.mxu0 0
        %3511 = vmatmul.mubr.bf16.gmra.mrb[0].mxu0 %v3467
        %v3512 = vpop.f32.mrb[0].mxu0
        %v3513 = vadd.f32 0.0, %v3512
        %v3514 = vpop.f32.mrb[0].mxu0
        %v3515 = vpop.f32.mrb[0].mxu0
        %v3516 = vadd.f32 0.0, %v3515
        %v3517 = vpop.f32.mrb[0].mxu0
        %3518 = vmatprep.mubr.bf16.mxu0 0
        %3519 = vmatmul.mubr.bf16.gmra.mrb[0].mxu0 %v3470
        %v3520 = vpop.f32.mrb[0].mxu0
        %v3521 = vadd.f32 0.0, %v3520
        %v3522 = vpop.f32.mrb[0].mxu0
        %v3523 = vpop.f32.mrb[0].mxu0
        %v3524 = vadd.f32 0.0, %v3523
        %v3525 = vpop.f32.mrb[0].mxu0
        %3526 = vmatprep.mubr.bf16.mxu0 0
        %3527 = vmatmul.mubr.bf16.gmra.mrb[0].mxu0 %v3473
        %v3528 = vpop.f32.mrb[0].mxu0
        %v3529 = vadd.f32 0.0, %v3528
        %v3530 = vpop.f32.mrb[0].mxu0
        %v3531 = vpop.f32.mrb[0].mxu0
        %v3532 = vadd.f32 0.0, %v3531
        %v3533 = vpop.f32.mrb[0].mxu0
        %3534 = vmatprep.mubr.bf16.mxu0 0
        %3535 = vmatmul.mubr.bf16.gmra.mrb[0].mxu0 %v3476
        %v3536 = vpop.f32.mrb[0].mxu0
        %v3537 = vadd.f32 0.0, %v3536
        %v3538 = vpop.f32.mrb[0].mxu0
        %v3539 = vpop.f32.mrb[0].mxu0
        %v3540 = vadd.f32 0.0, %v3539
        %v3541 = vpop.f32.mrb[0].mxu0
        %3542 = vdwg.mxu0
        %v3543 = vrcp.pop %v3424
        %v3544 = vrcp.pop %v3427
        %v3545 = vrcp.pop %v3430
        %v3546 = vrcp.pop %v3433
        %v3547 = vrcp.pop %v3436
        %v3548 = vrcp.pop %v3439
        %v3549 = vrcp.pop %v3442
        %v3550 = vrcp.pop %v3445
        %v3551 = vmul.f32 %v3513, %v3543
        %v3552 = vmul.f32 %v3516, %v3544
        %v3553 = vmul.f32 %v3521, %v3545
        %v3554 = vmul.f32 %v3524, %v3546
        %v3555 = vmul.f32 %v3529, %v3547
        %v3556 = vmul.f32 %v3532, %v3548
        %v3557 = vmul.f32 %v3537, %v3549
        %v3558 = vmul.f32 %v3540, %v3550
        %v3559 = vpack.c.bf16 %v3552, %v3551
        %v3560 = vpack.c.bf16 %v3554, %v3553
        %v3561 = vpack.c.bf16 %v3556, %v3555
        %v3562 = vpack.c.bf16 %v3558, %v3557
        %v3564 = vsel %vm1390, %v3559, 0
        %v3567 = vsel %vm1390, %v3560, 0
        %v3570 = vsel %vm1390, %v3561, 0
        %v3573 = vsel %vm1390, %v3562, 0
        %3575 = vmatprep.subr.bf16.mxu0 0
        %3576 = vmatpush1.bf16.msra.mxu0 %v1980
        %3577 = vmatprep.subr.bf16.mxu0 0
        %3578 = vmatpush1.bf16.msra.mxu0 %v1981
        %3579 = vmatprep.subr.bf16.mxu0 0
        %3580 = vmatpush1.bf16.msra.mxu0 0
        %3581 = vmatprep.subr.bf16.mxu0 0
        %3582 = vmatpush1.bf16.msra.mxu0 0
        %3583 = vmatprep.subr.bf16.mxu0 0
        %3584 = vmatpush1.bf16.msra.mxu0 0
        %3585 = vmatprep.subr.bf16.mxu0 0
        %3586 = vmatpush1.bf16.msra.mxu0 0
        %3587 = vmatprep.subr.bf16.mxu0 0
        %3588 = vmatpush1.bf16.msra.mxu0 0
        %3589 = vmatprep.subr.bf16.mxu0 0
        %3590 = vmatpush1.bf16.msra.mxu0 0
        %3591 = vmatprep.subr.bf16.mxu0 0
        %3592 = vmatpush1.bf16.msra.mxu0 0
        %3593 = vmatprep.subr.bf16.mxu0 0
        %3594 = vmatpush1.bf16.msra.mxu0 0
        %3595 = vmatprep.subr.bf16.mxu0 0
        %3596 = vmatpush1.bf16.msra.mxu0 0
        %3597 = vmatprep.subr.bf16.mxu0 0
        %3598 = vmatpush1.bf16.msra.mxu0 0
        %3599 = vmatprep.subr.bf16.mxu0 0
        %3600 = vmatpush1.bf16.msra.mxu0 0
        %3601 = vmatprep.subr.bf16.mxu0 0
        %3602 = vmatpush1.bf16.msra.mxu0 0
        %3603 = vmatprep.subr.bf16.mxu0 0
        %3604 = vmatpush1.bf16.msra.mxu0 0
        %3605 = vmatprep.subr.bf16.mxu0 0
        %3606 = vmatpush1.bf16.msra.mxu0 0
        %3607 = vmatprep.mubr.bf16.mxu0 0
        %3608 = vmatmul.mubr.bf16.gmra.mrb[0].mxu0 %v3564
        %v3609 = vpop.f32.mrb[0].mxu0
        %v3610 = vadd.f32 0.0, %v3609
        %v3611 = vpop.f32.mrb[0].mxu0
        %v3612 = vpop.f32.mrb[0].mxu0
        %v3613 = vadd.f32 0.0, %v3612
        %v3614 = vpop.f32.mrb[0].mxu0
        %3615 = vmatprep.mubr.bf16.mxu0 0
        %3616 = vmatmul.mubr.bf16.gmra.mrb[0].mxu0 %v3567
        %v3617 = vpop.f32.mrb[0].mxu0
        %v3618 = vadd.f32 0.0, %v3617
        %v3619 = vpop.f32.mrb[0].mxu0
        %v3620 = vpop.f32.mrb[0].mxu0
        %v3621 = vadd.f32 0.0, %v3620
        %v3622 = vpop.f32.mrb[0].mxu0
        %3623 = vmatprep.mubr.bf16.mxu0 0
        %3624 = vmatmul.mubr.bf16.gmra.mrb[0].mxu0 %v3570
        %v3625 = vpop.f32.mrb[0].mxu0
        %v3626 = vadd.f32 0.0, %v3625
        %v3627 = vpop.f32.mrb[0].mxu0
        %v3628 = vpop.f32.mrb[0].mxu0
        %v3629 = vadd.f32 0.0, %v3628
        %v3630 = vpop.f32.mrb[0].mxu0
        %3631 = vmatprep.mubr.bf16.mxu0 0
        %3632 = vmatmul.mubr.bf16.gmra.mrb[0].mxu0 %v3573
        %v3633 = vpop.f32.mrb[0].mxu0
        %v3634 = vadd.f32 0.0, %v3633
        %v3635 = vpop.f32.mrb[0].mxu0
        %v3636 = vpop.f32.mrb[0].mxu0
        %v3637 = vadd.f32 0.0, %v3636
        %v3638 = vpop.f32.mrb[0].mxu0
        %3639 = vdwg.mxu0
        %v3641 = vsel %vm1390, %v3249, 0
        %v3644 = vsel %vm1390, %v3250, 0
        %v3647 = vsel %vm1390, %v3251, 0
        %v3650 = vsel %vm1390, %v3252, 0
        %3652 = vmatprep.subr.bf16.mxu0 0
        %3653 = vmatpush1.bf16.msra.mxu0 %v2069
        %3654 = vmatprep.subr.bf16.mxu0 0
        %3655 = vmatpush1.bf16.msra.mxu0 %v2070
        %3656 = vmatprep.subr.bf16.mxu0 0
        %3657 = vmatpush1.bf16.msra.mxu0 0
        %3658 = vmatprep.subr.bf16.mxu0 0
        %3659 = vmatpush1.bf16.msra.mxu0 0
        %3660 = vmatprep.subr.bf16.mxu0 0
        %3661 = vmatpush1.bf16.msra.mxu0 0
        %3662 = vmatprep.subr.bf16.mxu0 0
        %3663 = vmatpush1.bf16.msra.mxu0 0
        %3664 = vmatprep.subr.bf16.mxu0 0
        %3665 = vmatpush1.bf16.msra.mxu0 0
        %3666 = vmatprep.subr.bf16.mxu0 0
        %3667 = vmatpush1.bf16.msra.mxu0 0
        %3668 = vmatprep.subr.bf16.mxu0 0
        %3669 = vmatpush1.bf16.msra.mxu0 0
        %3670 = vmatprep.subr.bf16.mxu0 0
        %3671 = vmatpush1.bf16.msra.mxu0 0
        %3672 = vmatprep.subr.bf16.mxu0 0
        %3673 = vmatpush1.bf16.msra.mxu0 0
        %3674 = vmatprep.subr.bf16.mxu0 0
        %3675 = vmatpush1.bf16.msra.mxu0 0
        %3676 = vmatprep.subr.bf16.mxu0 0
        %3677 = vmatpush1.bf16.msra.mxu0 0
        %3678 = vmatprep.subr.bf16.mxu0 0
        %3679 = vmatpush1.bf16.msra.mxu0 0
        %3680 = vmatprep.subr.bf16.mxu0 0
        %3681 = vmatpush1.bf16.msra.mxu0 0
        %3682 = vmatprep.subr.bf16.mxu0 0
        %3683 = vmatpush1.bf16.msra.mxu0 0
        %3684 = vmatprep.mubr.bf16.mxu0 0
        %3685 = vmatmul.mubr.bf16.gmra.mrb[0].mxu0 %v3641
        %v3686 = vpop.f32.mrb[0].mxu0
        %v3687 = vadd.f32 %v3610, %v3686
        %v3688 = vpop.f32.mrb[0].mxu0
        %v3689 = vpop.f32.mrb[0].mxu0
        %v3690 = vadd.f32 %v3613, %v3689
        %v3691 = vpop.f32.mrb[0].mxu0
        %3692 = vmatprep.mubr.bf16.mxu0 0
        %3693 = vmatmul.mubr.bf16.gmra.mrb[0].mxu0 %v3644
        %v3694 = vpop.f32.mrb[0].mxu0
        %v3695 = vadd.f32 %v3618, %v3694
        %v3696 = vpop.f32.mrb[0].mxu0
        %v3697 = vpop.f32.mrb[0].mxu0
        %v3698 = vadd.f32 %v3621, %v3697
        %v3699 = vpop.f32.mrb[0].mxu0
        %3700 = vmatprep.mubr.bf16.mxu0 0
        %3701 = vmatmul.mubr.bf16.gmra.mrb[0].mxu0 %v3647
        %v3702 = vpop.f32.mrb[0].mxu0
        %v3703 = vadd.f32 %v3626, %v3702
        %v3704 = vpop.f32.mrb[0].mxu0
        %v3705 = vpop.f32.mrb[0].mxu0
        %v3706 = vadd.f32 %v3629, %v3705
        %v3707 = vpop.f32.mrb[0].mxu0
        %3708 = vmatprep.mubr.bf16.mxu0 0
        %3709 = vmatmul.mubr.bf16.gmra.mrb[0].mxu0 %v3650
        %v3710 = vpop.f32.mrb[0].mxu0
        %v3711 = vadd.f32 %v3634, %v3710
        %v3712 = vpop.f32.mrb[0].mxu0
        %v3713 = vpop.f32.mrb[0].mxu0
        %v3714 = vadd.f32 %v3637, %v3713
        %v3715 = vpop.f32.mrb[0].mxu0
        %3716 = vdwg.mxu0
        %3717 = vrot.lane.b32.xlu0 %v2971, 64
        %v3718 = vpop.permute.xlu0 %3717
        %3719 = vrot.lane.b32.xlu0 %v2972, 64
        %v3720 = vpop.permute.xlu0 %3719
        %3721 = vrot.lane.b32.xlu0 %v2973, 64
        %v3722 = vpop.permute.xlu0 %3721
        %3723 = vrot.lane.b32.xlu0 %v2974, 64
        %v3724 = vpop.permute.xlu0 %3723
        %3725 = vrot.lane.b32.xlu0 %v2975, 64
        %v3726 = vpop.permute.xlu0 %3725
        %3727 = vrot.lane.b32.xlu0 %v2976, 64
        %v3728 = vpop.permute.xlu0 %3727
        %3729 = vrot.lane.b32.xlu0 %v2977, 64
        %v3730 = vpop.permute.xlu0 %3729
        %3731 = vrot.lane.b32.xlu0 %v2978, 64
        %v3732 = vpop.permute.xlu0 %3731
        %v3734 = vsel %vm1390, %v3718, 0
        %v3737 = vsel %vm1390, %v3720, 0
        %v3740 = vsel %vm1390, %v3722, 0
        %v3743 = vsel %vm1390, %v3724, 0
        %v3746 = vsel %vm1390, %v3726, 0
        %v3749 = vsel %vm1390, %v3728, 0
        %v3752 = vsel %vm1390, %v3730, 0
        %v3755 = vsel %vm1390, %v3732, 0
        %3757 = vmatprep.subr.bf16.mxu0 0
        %3758 = vmatpush1.bf16.xpose.msra.mxu0 %v3746
        %3759 = vmatprep.subr.bf16.mxu0 0
        %3760 = vmatpush1.bf16.xpose.msra.mxu0 %v3749
        %3761 = vmatprep.subr.bf16.mxu0 0
        %3762 = vmatpush1.bf16.xpose.msra.mxu0 %v3752
        %3763 = vmatprep.subr.bf16.mxu0 0
        %3764 = vmatpush1.bf16.xpose.msra.mxu0 %v3755
        %3765 = vmatprep.subr.bf16.mxu0 0
        %3766 = vmatpush1.bf16.xpose.msra.mxu0 0
        %3767 = vmatprep.subr.bf16.mxu0 0
        %3768 = vmatpush1.bf16.xpose.msra.mxu0 0
        %3769 = vmatprep.subr.bf16.mxu0 0
        %3770 = vmatpush1.bf16.xpose.msra.mxu0 0
        %3771 = vmatprep.subr.bf16.mxu0 0
        %3772 = vmatpush1.bf16.xpose.msra.mxu0 0
        %3773 = vmatprep.subr.bf16.mxu0 0
        %3774 = vmatpush1.bf16.xpose.msra.mxu0 0
        %3775 = vmatprep.subr.bf16.mxu0 0
        %3776 = vmatpush1.bf16.xpose.msra.mxu0 0
        %3777 = vmatprep.subr.bf16.mxu0 0
        %3778 = vmatpush1.bf16.xpose.msra.mxu0 0
        %3779 = vmatprep.subr.bf16.mxu0 0
        %3780 = vmatpush1.bf16.xpose.msra.mxu0 0
        %3781 = vmatprep.subr.bf16.mxu0 0
        %3782 = vmatpush1.bf16.xpose.msra.mxu0 0
        %3783 = vmatprep.subr.bf16.mxu0 0
        %3784 = vmatpush1.bf16.xpose.msra.mxu0 0
        %3785 = vmatprep.subr.bf16.mxu0 0
        %3786 = vmatpush1.bf16.xpose.msra.mxu0 0
        %3787 = vmatprep.subr.bf16.mxu0 0
        %3788 = vmatpush1.bf16.xpose.msra.mxu0 0
        %3789 = vmatprep.mubr.bf16.mxu0 0
        %3790 = vmatmul.mubr.bf16.gmra.mrb[0].mxu0 %v3734
        %v3791 = vpop.f32.mrb[0].mxu0
        %v3792 = vadd.f32 0.0, %v3791
        %v3793 = vpop.f32.mrb[0].mxu0
        %v3794 = vpop.f32.mrb[0].mxu0
        %v3795 = vadd.f32 0.0, %v3794
        %v3796 = vpop.f32.mrb[0].mxu0
        %3797 = vmatprep.mubr.bf16.mxu0 0
        %3798 = vmatmul.mubr.bf16.gmra.mrb[0].mxu0 %v3737
        %v3799 = vpop.f32.mrb[0].mxu0
        %v3800 = vadd.f32 0.0, %v3799
        %v3801 = vpop.f32.mrb[0].mxu0
        %v3802 = vpop.f32.mrb[0].mxu0
        %v3803 = vadd.f32 0.0, %v3802
        %v3804 = vpop.f32.mrb[0].mxu0
        %3805 = vmatprep.mubr.bf16.mxu0 0
        %3806 = vmatmul.mubr.bf16.gmra.mrb[0].mxu0 %v3740
        %v3807 = vpop.f32.mrb[0].mxu0
        %v3808 = vadd.f32 0.0, %v3807
        %v3809 = vpop.f32.mrb[0].mxu0
        %v3810 = vpop.f32.mrb[0].mxu0
        %v3811 = vadd.f32 0.0, %v3810
        %v3812 = vpop.f32.mrb[0].mxu0
        %3813 = vmatprep.mubr.bf16.mxu0 0
        %3814 = vmatmul.mubr.bf16.gmra.mrb[0].mxu0 %v3743
        %v3815 = vpop.f32.mrb[0].mxu0
        %v3816 = vadd.f32 0.0, %v3815
        %v3817 = vpop.f32.mrb[0].mxu0
        %v3818 = vpop.f32.mrb[0].mxu0
        %v3819 = vadd.f32 0.0, %v3818
        %v3820 = vpop.f32.mrb[0].mxu0
        %3821 = vdwg.mxu0
        %v3822 = vmul.f32 %v3792, 0.17677669
        %v3823 = vmul.f32 %v3795, 0.17677669
        %v3824 = vmul.f32 %v3800, 0.17677669
        %v3825 = vmul.f32 %v3803, 0.17677669
        %v3826 = vmul.f32 %v3808, 0.17677669
        %v3827 = vmul.f32 %v3811, 0.17677669
        %v3828 = vmul.f32 %v3816, 0.17677669
        %v3829 = vmul.f32 %v3819, 0.17677669
        %v3830 = vsel %vm1488, %v3822, -inf
        %3831 = vmax.xlane.f32.xlu0 %v3830
        %v3832 = vpop.xlane.xlu0 %3831
        %v3833 = vsel %vm1488, %v3823, -inf
        %3834 = vmax.xlane.f32.xlu0 %v3833
        %v3835 = vpop.xlane.xlu0 %3834
        %v3836 = vsel %vm1488, %v3824, -inf
        %3837 = vmax.xlane.f32.xlu0 %v3836
        %v3838 = vpop.xlane.xlu0 %3837
        %v3839 = vsel %vm1488, %v3825, -inf
        %3840 = vmax.xlane.f32.xlu0 %v3839
        %v3841 = vpop.xlane.xlu0 %3840
        %v3842 = vsel %vm1488, %v3826, -inf
        %3843 = vmax.xlane.f32.xlu0 %v3842
        %v3844 = vpop.xlane.xlu0 %3843
        %v3845 = vsel %vm1488, %v3827, -inf
        %3846 = vmax.xlane.f32.xlu0 %v3845
        %v3847 = vpop.xlane.xlu0 %3846
        %v3848 = vsel %vm1488, %v3828, -inf
        %3849 = vmax.xlane.f32.xlu0 %v3848
        %v3850 = vpop.xlane.xlu0 %3849
        %v3851 = vsel %vm1488, %v3829, -inf
        %3852 = vmax.xlane.f32.xlu0 %v3851
        %v3853 = vpop.xlane.xlu0 %3852
        %v3854 = vsub.f32 %v3822, %v3832
        %v3855 = vsub.f32 %v3823, %v3835
        %v3856 = vsub.f32 %v3824, %v3838
        %v3857 = vsub.f32 %v3825, %v3841
        %v3858 = vsub.f32 %v3826, %v3844
        %v3859 = vsub.f32 %v3827, %v3847
        %v3860 = vsub.f32 %v3828, %v3850
        %v3861 = vsub.f32 %v3829, %v3853
        %v3862 = vmul.f32 %v3854, 1.442695
        %v3863 = vpow.pop %v3862
        %v3864 = vmul.f32 %v3855, 1.442695
        %v3865 = vpow.pop %v3864
        %v3866 = vmul.f32 %v3856, 1.442695
        %v3867 = vpow.pop %v3866
        %v3868 = vmul.f32 %v3857, 1.442695
        %v3869 = vpow.pop %v3868
        %v3870 = vmul.f32 %v3858, 1.442695
        %v3871 = vpow.pop %v3870
        %v3872 = vmul.f32 %v3859, 1.442695
        %v3873 = vpow.pop %v3872
        %v3874 = vmul.f32 %v3860, 1.442695
        %v3875 = vpow.pop %v3874
        %v3876 = vmul.f32 %v3861, 1.442695
        %v3877 = vpow.pop %v3876
        %v3878 = vsel %vm1488, %v3863, 0.0
        %3879 = vadd.xlane.f32.xlu0 %v3878
        %v3880 = vpop.xlane.xlu0 %3879
        %v3881 = vsel %vm1488, %v3865, 0.0
        %3882 = vadd.xlane.f32.xlu0 %v3881
        %v3883 = vpop.xlane.xlu0 %3882
        %v3884 = vsel %vm1488, %v3867, 0.0
        %3885 = vadd.xlane.f32.xlu0 %v3884
        %v3886 = vpop.xlane.xlu0 %3885
        %v3887 = vsel %vm1488, %v3869, 0.0
        %3888 = vadd.xlane.f32.xlu0 %v3887
        %v3889 = vpop.xlane.xlu0 %3888
        %v3890 = vsel %vm1488, %v3871, 0.0
        %3891 = vadd.xlane.f32.xlu0 %v3890
        %v3892 = vpop.xlane.xlu0 %3891
        %v3893 = vsel %vm1488, %v3873, 0.0
        %3894 = vadd.xlane.f32.xlu0 %v3893
        %v3895 = vpop.xlane.xlu0 %3894
        %v3896 = vsel %vm1488, %v3875, 0.0
        %3897 = vadd.xlane.f32.xlu0 %v3896
        %v3898 = vpop.xlane.xlu0 %3897
        %v3899 = vsel %vm1488, %v3877, 0.0
        %3900 = vadd.xlane.f32.xlu0 %v3899
        %v3901 = vpop.xlane.xlu0 %3900
        %v3902 = vpack.c.bf16 %v3865, %v3863
        %v3903 = vpack.c.bf16 %v3869, %v3867
        %v3904 = vpack.c.bf16 %v3873, %v3871
        %v3905 = vpack.c.bf16 %v3877, %v3875
        %3906 = vrot.lane.b32.xlu0 %v2979, 64
        %v3907 = vpop.permute.xlu0 %3906
        %3908 = vrot.lane.b32.xlu0 %v2980, 64
        %v3909 = vpop.permute.xlu0 %3908
        %3910 = vrot.lane.b32.xlu0 %v2981, 64
        %v3911 = vpop.permute.xlu0 %3910
        %3912 = vrot.lane.b32.xlu0 %v2982, 64
        %v3913 = vpop.permute.xlu0 %3912
        %v3919 = vsel %vm1488, %v3902, 0
        %v3922 = vsel %vm1488, %v3903, 0
        %v3925 = vsel %vm1488, %v3904, 0
        %v3928 = vsel %vm1488, %v3905, 0
        %3930 = vmatprep.subr.bf16.mxu0 0
        %3931 = vmatpush1.bf16.msra.mxu0 %v3907
        %3932 = vmatprep.subr.bf16.mxu0 0
        %3933 = vmatpush1.bf16.msra.mxu0 %v3909
        %3934 = vmatprep.subr.bf16.mxu0 0
        %3935 = vmatpush1.bf16.msra.mxu0 %v3911
        %3936 = vmatprep.subr.bf16.mxu0 0
        %3937 = vmatpush1.bf16.msra.mxu0 %v3913
        %3938 = vmatprep.subr.bf16.mxu0 0
        %3939 = vmatpush1.bf16.msra.mxu0 0
        %3940 = vmatprep.subr.bf16.mxu0 0
        %3941 = vmatpush1.bf16.msra.mxu0 0
        %3942 = vmatprep.subr.bf16.mxu0 0
        %3943 = vmatpush1.bf16.msra.mxu0 0
        %3944 = vmatprep.subr.bf16.mxu0 0
        %3945 = vmatpush1.bf16.msra.mxu0 0
        %3946 = vmatprep.subr.bf16.mxu0 0
        %3947 = vmatpush1.bf16.msra.mxu0 0
        %3948 = vmatprep.subr.bf16.mxu0 0
        %3949 = vmatpush1.bf16.msra.mxu0 0
        %3950 = vmatprep.subr.bf16.mxu0 0
        %3951 = vmatpush1.bf16.msra.mxu0 0
        %3952 = vmatprep.subr.bf16.mxu0 0
        %3953 = vmatpush1.bf16.msra.mxu0 0
        %3954 = vmatprep.subr.bf16.mxu0 0
        %3955 = vmatpush1.bf16.msra.mxu0 0
        %3956 = vmatprep.subr.bf16.mxu0 0
        %3957 = vmatpush1.bf16.msra.mxu0 0
        %3958 = vmatprep.subr.bf16.mxu0 0
        %3959 = vmatpush1.bf16.msra.mxu0 0
        %3960 = vmatprep.subr.bf16.mxu0 0
        %3961 = vmatpush1.bf16.msra.mxu0 0
        %3962 = vmatprep.mubr.bf16.mxu0 0
        %3963 = vmatmul.mubr.bf16.gmra.mrb[0].mxu0 %v3919
        %v3964 = vpop.f32.mrb[0].mxu0
        %v3965 = vadd.f32 0.0, %v3964
        %v3966 = vpop.f32.mrb[0].mxu0
        %v3967 = vpop.f32.mrb[0].mxu0
        %v3968 = vadd.f32 0.0, %v3967
        %v3969 = vpop.f32.mrb[0].mxu0
        %3970 = vmatprep.mubr.bf16.mxu0 0
        %3971 = vmatmul.mubr.bf16.gmra.mrb[0].mxu0 %v3922
        %v3972 = vpop.f32.mrb[0].mxu0
        %v3973 = vadd.f32 0.0, %v3972
        %v3974 = vpop.f32.mrb[0].mxu0
        %v3975 = vpop.f32.mrb[0].mxu0
        %v3976 = vadd.f32 0.0, %v3975
        %v3977 = vpop.f32.mrb[0].mxu0
        %3978 = vmatprep.mubr.bf16.mxu0 0
        %3979 = vmatmul.mubr.bf16.gmra.mrb[0].mxu0 %v3925
        %v3980 = vpop.f32.mrb[0].mxu0
        %v3981 = vadd.f32 0.0, %v3980
        %v3982 = vpop.f32.mrb[0].mxu0
        %v3983 = vpop.f32.mrb[0].mxu0
        %v3984 = vadd.f32 0.0, %v3983
        %v3985 = vpop.f32.mrb[0].mxu0
        %3986 = vmatprep.mubr.bf16.mxu0 0
        %3987 = vmatmul.mubr.bf16.gmra.mrb[0].mxu0 %v3928
        %v3988 = vpop.f32.mrb[0].mxu0
        %v3989 = vadd.f32 0.0, %v3988
        %v3990 = vpop.f32.mrb[0].mxu0
        %v3991 = vpop.f32.mrb[0].mxu0
        %v3992 = vadd.f32 0.0, %v3991
        %v3993 = vpop.f32.mrb[0].mxu0
        %3994 = vdwg.mxu0
        %v3995 = vrcp.pop %v3880
        %v3996 = vrcp.pop %v3883
        %v3997 = vrcp.pop %v3886
        %v3998 = vrcp.pop %v3889
        %v3999 = vrcp.pop %v3892
        %v4000 = vrcp.pop %v3895
        %v4001 = vrcp.pop %v3898
        %v4002 = vrcp.pop %v3901
        %v4003 = vmul.f32 %v3965, %v3995
        %v4004 = vmul.f32 %v3968, %v3996
        %v4005 = vmul.f32 %v3973, %v3997
        %v4006 = vmul.f32 %v3976, %v3998
        %v4007 = vmul.f32 %v3981, %v3999
        %v4008 = vmul.f32 %v3984, %v4000
        %v4009 = vmul.f32 %v3989, %v4001
        %v4010 = vmul.f32 %v3992, %v4002
        %v4011 = vpack.c.bf16 %v4004, %v4003
        %v4012 = vpack.c.bf16 %v4006, %v4005
        %v4013 = vpack.c.bf16 %v4008, %v4007
        %v4014 = vpack.c.bf16 %v4010, %v4009
        %v4016 = vsel %vm1390, %v4011, 0
        %v4019 = vsel %vm1390, %v4012, 0
        %v4022 = vsel %vm1390, %v4013, 0
        %v4025 = vsel %vm1390, %v4014, 0
        %4027 = vmatprep.subr.bf16.mxu0 0
        %4028 = vmatpush1.bf16.msra.mxu0 %v2456
        %4029 = vmatprep.subr.bf16.mxu0 0
        %4030 = vmatpush1.bf16.msra.mxu0 %v2457
        %4031 = vmatprep.subr.bf16.mxu0 0
        %4032 = vmatpush1.bf16.msra.mxu0 0
        %4033 = vmatprep.subr.bf16.mxu0 0
        %4034 = vmatpush1.bf16.msra.mxu0 0
        %4035 = vmatprep.subr.bf16.mxu0 0
        %4036 = vmatpush1.bf16.msra.mxu0 0
        %4037 = vmatprep.subr.bf16.mxu0 0
        %4038 = vmatpush1.bf16.msra.mxu0 0
        %4039 = vmatprep.subr.bf16.mxu0 0
        %4040 = vmatpush1.bf16.msra.mxu0 0
        %4041 = vmatprep.subr.bf16.mxu0 0
        %4042 = vmatpush1.bf16.msra.mxu0 0
        %4043 = vmatprep.subr.bf16.mxu0 0
        %4044 = vmatpush1.bf16.msra.mxu0 0
        %4045 = vmatprep.subr.bf16.mxu0 0
        %4046 = vmatpush1.bf16.msra.mxu0 0
        %4047 = vmatprep.subr.bf16.mxu0 0
        %4048 = vmatpush1.bf16.msra.mxu0 0
        %4049 = vmatprep.subr.bf16.mxu0 0
        %4050 = vmatpush1.bf16.msra.mxu0 0
        %4051 = vmatprep.subr.bf16.mxu0 0
        %4052 = vmatpush1.bf16.msra.mxu0 0
        %4053 = vmatprep.subr.bf16.mxu0 0
        %4054 = vmatpush1.bf16.msra.mxu0 0
        %4055 = vmatprep.subr.bf16.mxu0 0
        %4056 = vmatpush1.bf16.msra.mxu0 0
        %4057 = vmatprep.subr.bf16.mxu0 0
        %4058 = vmatpush1.bf16.msra.mxu0 0
        %4059 = vmatprep.mubr.bf16.mxu0 0
        %4060 = vmatmul.mubr.bf16.gmra.mrb[0].mxu0 %v4016
        %v4061 = vpop.f32.mrb[0].mxu0
        %v4062 = vadd.f32 0.0, %v4061
        %v4063 = vpop.f32.mrb[0].mxu0
        %v4064 = vpop.f32.mrb[0].mxu0
        %v4065 = vadd.f32 0.0, %v4064
        %v4066 = vpop.f32.mrb[0].mxu0
        %4067 = vmatprep.mubr.bf16.mxu0 0
        %4068 = vmatmul.mubr.bf16.gmra.mrb[0].mxu0 %v4019
        %v4069 = vpop.f32.mrb[0].mxu0
        %v4070 = vadd.f32 0.0, %v4069
        %v4071 = vpop.f32.mrb[0].mxu0
        %v4072 = vpop.f32.mrb[0].mxu0
        %v4073 = vadd.f32 0.0, %v4072
        %v4074 = vpop.f32.mrb[0].mxu0
        %4075 = vmatprep.mubr.bf16.mxu0 0
        %4076 = vmatmul.mubr.bf16.gmra.mrb[0].mxu0 %v4022
        %v4077 = vpop.f32.mrb[0].mxu0
        %v4078 = vadd.f32 0.0, %v4077
        %v4079 = vpop.f32.mrb[0].mxu0
        %v4080 = vpop.f32.mrb[0].mxu0
        %v4081 = vadd.f32 0.0, %v4080
        %v4082 = vpop.f32.mrb[0].mxu0
        %4083 = vmatprep.mubr.bf16.mxu0 0
        %4084 = vmatmul.mubr.bf16.gmra.mrb[0].mxu0 %v4025
        %v4085 = vpop.f32.mrb[0].mxu0
        %v4086 = vadd.f32 0.0, %v4085
        %v4087 = vpop.f32.mrb[0].mxu0
        %v4088 = vpop.f32.mrb[0].mxu0
        %v4089 = vadd.f32 0.0, %v4088
        %v4090 = vpop.f32.mrb[0].mxu0
        %4091 = vdwg.mxu0
        %v4092 = vadd.f32 %v3687, %v4062
        %v4093 = vadd.f32 %v3690, %v4065
        %v4094 = vadd.f32 %v3695, %v4070
        %v4095 = vadd.f32 %v3698, %v4073
        %v4096 = vadd.f32 %v3703, %v4078
        %v4097 = vadd.f32 %v3706, %v4081
        %v4098 = vadd.f32 %v3711, %v4086
        %v4099 = vadd.f32 %v3714, %v4089
        %4100 = vrot.lane.b32.xlu0 %v2971, 32
        %v4101 = vpop.permute.xlu0 %4100
        %4102 = vrot.lane.b32.xlu0 %v2972, 32
        %v4103 = vpop.permute.xlu0 %4102
        %4104 = vrot.lane.b32.xlu0 %v2973, 32
        %v4105 = vpop.permute.xlu0 %4104
        %4106 = vrot.lane.b32.xlu0 %v2974, 32
        %v4107 = vpop.permute.xlu0 %4106
        %4108 = vrot.lane.b32.xlu0 %v2975, 32
        %v4109 = vpop.permute.xlu0 %4108
        %4110 = vrot.lane.b32.xlu0 %v2976, 32
        %v4111 = vpop.permute.xlu0 %4110
        %4112 = vrot.lane.b32.xlu0 %v2977, 32
        %v4113 = vpop.permute.xlu0 %4112
        %4114 = vrot.lane.b32.xlu0 %v2978, 32
        %v4115 = vpop.permute.xlu0 %4114
        %v4117 = vsel %vm1390, %v4101, 0
        %v4120 = vsel %vm1390, %v4103, 0
        %v4123 = vsel %vm1390, %v4105, 0
        %v4126 = vsel %vm1390, %v4107, 0
        %v4129 = vsel %vm1390, %v4109, 0
        %v4132 = vsel %vm1390, %v4111, 0
        %v4135 = vsel %vm1390, %v4113, 0
        %v4138 = vsel %vm1390, %v4115, 0
        %4140 = vmatprep.subr.bf16.mxu0 0
        %4141 = vmatpush1.bf16.xpose.msra.mxu0 %v4129
        %4142 = vmatprep.subr.bf16.mxu0 0
        %4143 = vmatpush1.bf16.xpose.msra.mxu0 %v4132
        %4144 = vmatprep.subr.bf16.mxu0 0
        %4145 = vmatpush1.bf16.xpose.msra.mxu0 %v4135
        %4146 = vmatprep.subr.bf16.mxu0 0
        %4147 = vmatpush1.bf16.xpose.msra.mxu0 %v4138
        %4148 = vmatprep.subr.bf16.mxu0 0
        %4149 = vmatpush1.bf16.xpose.msra.mxu0 0
        %4150 = vmatprep.subr.bf16.mxu0 0
        %4151 = vmatpush1.bf16.xpose.msra.mxu0 0
        %4152 = vmatprep.subr.bf16.mxu0 0
        %4153 = vmatpush1.bf16.xpose.msra.mxu0 0
        %4154 = vmatprep.subr.bf16.mxu0 0
        %4155 = vmatpush1.bf16.xpose.msra.mxu0 0
        %4156 = vmatprep.subr.bf16.mxu0 0
        %4157 = vmatpush1.bf16.xpose.msra.mxu0 0
        %4158 = vmatprep.subr.bf16.mxu0 0
        %4159 = vmatpush1.bf16.xpose.msra.mxu0 0
        %4160 = vmatprep.subr.bf16.mxu0 0
        %4161 = vmatpush1.bf16.xpose.msra.mxu0 0
        %4162 = vmatprep.subr.bf16.mxu0 0
        %4163 = vmatpush1.bf16.xpose.msra.mxu0 0
        %4164 = vmatprep.subr.bf16.mxu0 0
        %4165 = vmatpush1.bf16.xpose.msra.mxu0 0
        %4166 = vmatprep.subr.bf16.mxu0 0
        %4167 = vmatpush1.bf16.xpose.msra.mxu0 0
        %4168 = vmatprep.subr.bf16.mxu0 0
        %4169 = vmatpush1.bf16.xpose.msra.mxu0 0
        %4170 = vmatprep.subr.bf16.mxu0 0
        %4171 = vmatpush1.bf16.xpose.msra.mxu0 0
        %4172 = vmatprep.mubr.bf16.mxu0 0
        %4173 = vmatmul.mubr.bf16.gmra.mrb[0].mxu0 %v4117
        %v4174 = vpop.f32.mrb[0].mxu0
        %v4175 = vadd.f32 0.0, %v4174
        %v4176 = vpop.f32.mrb[0].mxu0
        %v4177 = vpop.f32.mrb[0].mxu0
        %v4178 = vadd.f32 0.0, %v4177
        %v4179 = vpop.f32.mrb[0].mxu0
        %4180 = vmatprep.mubr.bf16.mxu0 0
        %4181 = vmatmul.mubr.bf16.gmra.mrb[0].mxu0 %v4120
        %v4182 = vpop.f32.mrb[0].mxu0
        %v4183 = vadd.f32 0.0, %v4182
        %v4184 = vpop.f32.mrb[0].mxu0
        %v4185 = vpop.f32.mrb[0].mxu0
        %v4186 = vadd.f32 0.0, %v4185
        %v4187 = vpop.f32.mrb[0].mxu0
        %4188 = vmatprep.mubr.bf16.mxu0 0
        %4189 = vmatmul.mubr.bf16.gmra.mrb[0].mxu0 %v4123
        %v4190 = vpop.f32.mrb[0].mxu0
        %v4191 = vadd.f32 0.0, %v4190
        %v4192 = vpop.f32.mrb[0].mxu0
        %v4193 = vpop.f32.mrb[0].mxu0
        %v4194 = vadd.f32 0.0, %v4193
        %v4195 = vpop.f32.mrb[0].mxu0
        %4196 = vmatprep.mubr.bf16.mxu0 0
        %4197 = vmatmul.mubr.bf16.gmra.mrb[0].mxu0 %v4126
        %v4198 = vpop.f32.mrb[0].mxu0
        %v4199 = vadd.f32 0.0, %v4198
        %v4200 = vpop.f32.mrb[0].mxu0
        %v4201 = vpop.f32.mrb[0].mxu0
        %v4202 = vadd.f32 0.0, %v4201
        %v4203 = vpop.f32.mrb[0].mxu0
        %4204 = vdwg.mxu0
        %v4205 = vmul.f32 %v4175, 0.17677669
        %v4206 = vmul.f32 %v4178, 0.17677669
        %v4207 = vmul.f32 %v4183, 0.17677669
        %v4208 = vmul.f32 %v4186, 0.17677669
        %v4209 = vmul.f32 %v4191, 0.17677669
        %v4210 = vmul.f32 %v4194, 0.17677669
        %v4211 = vmul.f32 %v4199, 0.17677669
        %v4212 = vmul.f32 %v4202, 0.17677669
        %v4213 = vsel %vm1488, %v4205, -inf
        %4214 = vmax.xlane.f32.xlu0 %v4213
        %v4215 = vpop.xlane.xlu0 %4214
        %v4216 = vsel %vm1488, %v4206, -inf
        %4217 = vmax.xlane.f32.xlu0 %v4216
        %v4218 = vpop.xlane.xlu0 %4217
        %v4219 = vsel %vm1488, %v4207, -inf
        %4220 = vmax.xlane.f32.xlu0 %v4219
        %v4221 = vpop.xlane.xlu0 %4220
        %v4222 = vsel %vm1488, %v4208, -inf
        %4223 = vmax.xlane.f32.xlu0 %v4222
        %v4224 = vpop.xlane.xlu0 %4223
        %v4225 = vsel %vm1488, %v4209, -inf
        %4226 = vmax.xlane.f32.xlu0 %v4225
        %v4227 = vpop.xlane.xlu0 %4226
        %v4228 = vsel %vm1488, %v4210, -inf
        %4229 = vmax.xlane.f32.xlu0 %v4228
        %v4230 = vpop.xlane.xlu0 %4229
        %v4231 = vsel %vm1488, %v4211, -inf
        %4232 = vmax.xlane.f32.xlu0 %v4231
        %v4233 = vpop.xlane.xlu0 %4232
        %v4234 = vsel %vm1488, %v4212, -inf
        %4235 = vmax.xlane.f32.xlu0 %v4234
        %v4236 = vpop.xlane.xlu0 %4235
        %v4237 = vsub.f32 %v4205, %v4215
        %v4238 = vsub.f32 %v4206, %v4218
        %v4239 = vsub.f32 %v4207, %v4221
        %v4240 = vsub.f32 %v4208, %v4224
        %v4241 = vsub.f32 %v4209, %v4227
        %v4242 = vsub.f32 %v4210, %v4230
        %v4243 = vsub.f32 %v4211, %v4233
        %v4244 = vsub.f32 %v4212, %v4236
        %v4245 = vmul.f32 %v4237, 1.442695
        %v4246 = vpow.pop %v4245
        %v4247 = vmul.f32 %v4238, 1.442695
        %v4248 = vpow.pop %v4247
        %v4249 = vmul.f32 %v4239, 1.442695
        %v4250 = vpow.pop %v4249
        %v4251 = vmul.f32 %v4240, 1.442695
        %v4252 = vpow.pop %v4251
        %v4253 = vmul.f32 %v4241, 1.442695
        %v4254 = vpow.pop %v4253
        %v4255 = vmul.f32 %v4242, 1.442695
        %v4256 = vpow.pop %v4255
        %v4257 = vmul.f32 %v4243, 1.442695
        %v4258 = vpow.pop %v4257
        %v4259 = vmul.f32 %v4244, 1.442695
        %v4260 = vpow.pop %v4259
        %v4261 = vsel %vm1488, %v4246, 0.0
        %4262 = vadd.xlane.f32.xlu0 %v4261
        %v4263 = vpop.xlane.xlu0 %4262
        %v4264 = vsel %vm1488, %v4248, 0.0
        %4265 = vadd.xlane.f32.xlu0 %v4264
        %v4266 = vpop.xlane.xlu0 %4265
        %v4267 = vsel %vm1488, %v4250, 0.0
        %4268 = vadd.xlane.f32.xlu0 %v4267
        %v4269 = vpop.xlane.xlu0 %4268
        %v4270 = vsel %vm1488, %v4252, 0.0
        %4271 = vadd.xlane.f32.xlu0 %v4270
        %v4272 = vpop.xlane.xlu0 %4271
        %v4273 = vsel %vm1488, %v4254, 0.0
        %4274 = vadd.xlane.f32.xlu0 %v4273
        %v4275 = vpop.xlane.xlu0 %4274
        %v4276 = vsel %vm1488, %v4256, 0.0
        %4277 = vadd.xlane.f32.xlu0 %v4276
        %v4278 = vpop.xlane.xlu0 %4277
        %v4279 = vsel %vm1488, %v4258, 0.0
        %4280 = vadd.xlane.f32.xlu0 %v4279
        %v4281 = vpop.xlane.xlu0 %4280
        %v4282 = vsel %vm1488, %v4260, 0.0
        %4283 = vadd.xlane.f32.xlu0 %v4282
        %v4284 = vpop.xlane.xlu0 %4283
        %v4285 = vpack.c.bf16 %v4248, %v4246
        %v4286 = vpack.c.bf16 %v4252, %v4250
        %v4287 = vpack.c.bf16 %v4256, %v4254
        %v4288 = vpack.c.bf16 %v4260, %v4258
        %4289 = vrot.lane.b32.xlu0 %v2979, 32
        %v4290 = vpop.permute.xlu0 %4289
        %4291 = vrot.lane.b32.xlu0 %v2980, 32
        %v4292 = vpop.permute.xlu0 %4291
        %4293 = vrot.lane.b32.xlu0 %v2981, 32
        %v4294 = vpop.permute.xlu0 %4293
        %4295 = vrot.lane.b32.xlu0 %v2982, 32
        %v4296 = vpop.permute.xlu0 %4295
        %v4302 = vsel %vm1488, %v4285, 0
        %v4305 = vsel %vm1488, %v4286, 0
        %v4308 = vsel %vm1488, %v4287, 0
        %v4311 = vsel %vm1488, %v4288, 0
        %4313 = vmatprep.subr.bf16.mxu0 0
        %4314 = vmatpush1.bf16.msra.mxu0 %v4290
        %4315 = vmatprep.subr.bf16.mxu0 0
        %4316 = vmatpush1.bf16.msra.mxu0 %v4292
        %4317 = vmatprep.subr.bf16.mxu0 0
        %4318 = vmatpush1.bf16.msra.mxu0 %v4294
        %4319 = vmatprep.subr.bf16.mxu0 0
        %4320 = vmatpush1.bf16.msra.mxu0 %v4296
        %4321 = vmatprep.subr.bf16.mxu0 0
        %4322 = vmatpush1.bf16.msra.mxu0 0
        %4323 = vmatprep.subr.bf16.mxu0 0
        %4324 = vmatpush1.bf16.msra.mxu0 0
        %4325 = vmatprep.subr.bf16.mxu0 0
        %4326 = vmatpush1.bf16.msra.mxu0 0
        %4327 = vmatprep.subr.bf16.mxu0 0
        %4328 = vmatpush1.bf16.msra.mxu0 0
        %4329 = vmatprep.subr.bf16.mxu0 0
        %4330 = vmatpush1.bf16.msra.mxu0 0
        %4331 = vmatprep.subr.bf16.mxu0 0
        %4332 = vmatpush1.bf16.msra.mxu0 0
        %4333 = vmatprep.subr.bf16.mxu0 0
        %4334 = vmatpush1.bf16.msra.mxu0 0
        %4335 = vmatprep.subr.bf16.mxu0 0
        %4336 = vmatpush1.bf16.msra.mxu0 0
        %4337 = vmatprep.subr.bf16.mxu0 0
        %4338 = vmatpush1.bf16.msra.mxu0 0
        %4339 = vmatprep.subr.bf16.mxu0 0
        %4340 = vmatpush1.bf16.msra.mxu0 0
        %4341 = vmatprep.subr.bf16.mxu0 0
        %4342 = vmatpush1.bf16.msra.mxu0 0
        %4343 = vmatprep.subr.bf16.mxu0 0
        %4344 = vmatpush1.bf16.msra.mxu0 0
        %4345 = vmatprep.mubr.bf16.mxu0 0
        %4346 = vmatmul.mubr.bf16.gmra.mrb[0].mxu0 %v4302
        %v4347 = vpop.f32.mrb[0].mxu0
        %v4348 = vadd.f32 0.0, %v4347
        %v4349 = vpop.f32.mrb[0].mxu0
        %v4350 = vpop.f32.mrb[0].mxu0
        %v4351 = vadd.f32 0.0, %v4350
        %v4352 = vpop.f32.mrb[0].mxu0
        %4353 = vmatprep.mubr.bf16.mxu0 0
        %4354 = vmatmul.mubr.bf16.gmra.mrb[0].mxu0 %v4305
        %v4355 = vpop.f32.mrb[0].mxu0
        %v4356 = vadd.f32 0.0, %v4355
        %v4357 = vpop.f32.mrb[0].mxu0
        %v4358 = vpop.f32.mrb[0].mxu0
        %v4359 = vadd.f32 0.0, %v4358
        %v4360 = vpop.f32.mrb[0].mxu0
        %4361 = vmatprep.mubr.bf16.mxu0 0
        %4362 = vmatmul.mubr.bf16.gmra.mrb[0].mxu0 %v4308
        %v4363 = vpop.f32.mrb[0].mxu0
        %v4364 = vadd.f32 0.0, %v4363
        %v4365 = vpop.f32.mrb[0].mxu0
        %v4366 = vpop.f32.mrb[0].mxu0
        %v4367 = vadd.f32 0.0, %v4366
        %v4368 = vpop.f32.mrb[0].mxu0
        %4369 = vmatprep.mubr.bf16.mxu0 0
        %4370 = vmatmul.mubr.bf16.gmra.mrb[0].mxu0 %v4311
        %v4371 = vpop.f32.mrb[0].mxu0
        %v4372 = vadd.f32 0.0, %v4371
        %v4373 = vpop.f32.mrb[0].mxu0
        %v4374 = vpop.f32.mrb[0].mxu0
        %v4375 = vadd.f32 0.0, %v4374
        %v4376 = vpop.f32.mrb[0].mxu0
        %4377 = vdwg.mxu0
        %v4378 = vrcp.pop %v4263
        %v4379 = vrcp.pop %v4266
        %v4380 = vrcp.pop %v4269
        %v4381 = vrcp.pop %v4272
        %v4382 = vrcp.pop %v4275
        %v4383 = vrcp.pop %v4278
        %v4384 = vrcp.pop %v4281
        %v4385 = vrcp.pop %v4284
        %v4386 = vmul.f32 %v4348, %v4378
        %v4387 = vmul.f32 %v4351, %v4379
        %v4388 = vmul.f32 %v4356, %v4380
        %v4389 = vmul.f32 %v4359, %v4381
        %v4390 = vmul.f32 %v4364, %v4382
        %v4391 = vmul.f32 %v4367, %v4383
        %v4392 = vmul.f32 %v4372, %v4384
        %v4393 = vmul.f32 %v4375, %v4385
        %v4394 = vpack.c.bf16 %v4387, %v4386
        %v4395 = vpack.c.bf16 %v4389, %v4388
        %v4396 = vpack.c.bf16 %v4391, %v4390
        %v4397 = vpack.c.bf16 %v4393, %v4392
        %v4399 = vsel %vm1390, %v4394, 0
        %v4402 = vsel %vm1390, %v4395, 0
        %v4405 = vsel %vm1390, %v4396, 0
        %v4408 = vsel %vm1390, %v4397, 0
        %4410 = vmatprep.subr.bf16.mxu0 0
        %4411 = vmatpush1.bf16.msra.mxu0 %v2851
        %4412 = vmatprep.subr.bf16.mxu0 0
        %4413 = vmatpush1.bf16.msra.mxu0 %v2852
        %4414 = vmatprep.subr.bf16.mxu0 0
        %4415 = vmatpush1.bf16.msra.mxu0 0
        %4416 = vmatprep.subr.bf16.mxu0 0
        %4417 = vmatpush1.bf16.msra.mxu0 0
        %4418 = vmatprep.subr.bf16.mxu0 0
        %4419 = vmatpush1.bf16.msra.mxu0 0
        %4420 = vmatprep.subr.bf16.mxu0 0
        %4421 = vmatpush1.bf16.msra.mxu0 0
        %4422 = vmatprep.subr.bf16.mxu0 0
        %4423 = vmatpush1.bf16.msra.mxu0 0
        %4424 = vmatprep.subr.bf16.mxu0 0
        %4425 = vmatpush1.bf16.msra.mxu0 0
        %4426 = vmatprep.subr.bf16.mxu0 0
        %4427 = vmatpush1.bf16.msra.mxu0 0
        %4428 = vmatprep.subr.bf16.mxu0 0
        %4429 = vmatpush1.bf16.msra.mxu0 0
        %4430 = vmatprep.subr.bf16.mxu0 0
        %4431 = vmatpush1.bf16.msra.mxu0 0
        %4432 = vmatprep.subr.bf16.mxu0 0
        %4433 = vmatpush1.bf16.msra.mxu0 0
        %4434 = vmatprep.subr.bf16.mxu0 0
        %4435 = vmatpush1.bf16.msra.mxu0 0
        %4436 = vmatprep.subr.bf16.mxu0 0
        %4437 = vmatpush1.bf16.msra.mxu0 0
        %4438 = vmatprep.subr.bf16.mxu0 0
        %4439 = vmatpush1.bf16.msra.mxu0 0
        %4440 = vmatprep.subr.bf16.mxu0 0
        %4441 = vmatpush1.bf16.msra.mxu0 0
        %4442 = vmatprep.mubr.bf16.mxu0 0
        %4443 = vmatmul.mubr.bf16.gmra.mrb[0].mxu0 %v4399
        %v4444 = vpop.f32.mrb[0].mxu0
        %v4445 = vadd.f32 0.0, %v4444
        %v4446 = vpop.f32.mrb[0].mxu0
        %v4447 = vpop.f32.mrb[0].mxu0
        %v4448 = vadd.f32 0.0, %v4447
        %v4449 = vpop.f32.mrb[0].mxu0
        %4450 = vmatprep.mubr.bf16.mxu0 0
        %4451 = vmatmul.mubr.bf16.gmra.mrb[0].mxu0 %v4402
        %v4452 = vpop.f32.mrb[0].mxu0
        %v4453 = vadd.f32 0.0, %v4452
        %v4454 = vpop.f32.mrb[0].mxu0
        %v4455 = vpop.f32.mrb[0].mxu0
        %v4456 = vadd.f32 0.0, %v4455
        %v4457 = vpop.f32.mrb[0].mxu0
        %4458 = vmatprep.mubr.bf16.mxu0 0
        %4459 = vmatmul.mubr.bf16.gmra.mrb[0].mxu0 %v4405
        %v4460 = vpop.f32.mrb[0].mxu0
        %v4461 = vadd.f32 0.0, %v4460
        %v4462 = vpop.f32.mrb[0].mxu0
        %v4463 = vpop.f32.mrb[0].mxu0
        %v4464 = vadd.f32 0.0, %v4463
        %v4465 = vpop.f32.mrb[0].mxu0
        %4466 = vmatprep.mubr.bf16.mxu0 0
        %4467 = vmatmul.mubr.bf16.gmra.mrb[0].mxu0 %v4408
        %v4468 = vpop.f32.mrb[0].mxu0
        %v4469 = vadd.f32 0.0, %v4468
        %v4470 = vpop.f32.mrb[0].mxu0
        %v4471 = vpop.f32.mrb[0].mxu0
        %v4472 = vadd.f32 0.0, %v4471
        %v4473 = vpop.f32.mrb[0].mxu0
        %4474 = vdwg.mxu0
        %v4475 = vadd.f32 %v4092, %v4445
        %v4476 = vadd.f32 %v4093, %v4448
        %v4477 = vadd.f32 %v4094, %v4453
        %v4478 = vadd.f32 %v4095, %v4456
        %v4479 = vadd.f32 %v4096, %v4461
        %v4480 = vadd.f32 %v4097, %v4464
        %v4481 = vadd.f32 %v4098, %v4469
        %v4482 = vadd.f32 %v4099, %v4472
        %v4483 = vadd.f32 %v736, %v4475
        %v4484 = vadd.f32 %v737, %v4476
        %v4485 = vadd.f32 %v738, %v4477
        %v4486 = vadd.f32 %v739, %v4478
        %v4487 = vadd.f32 %v740, %v4479
        %v4488 = vadd.f32 %v741, %v4480
        %v4489 = vadd.f32 %v742, %v4481
        %v4490 = vadd.f32 %v743, %v4482
        %v4491 = vld [vmem:[%s678] sm:$0x1]
        %v4493 = vlaneseq
        %v4494 = vshrl.u32 %v4493, 7
        %v4495 = vsub.s32 0, %v4494
        %v4496 = vrot.slane %v4491, %v4495
        %v4498 = vadd.f32 %v4483, %v4496
        %v4499 = vadd.f32 %v4484, %v4496
        %v4500 = vadd.f32 %v4485, %v4496
        %v4501 = vadd.f32 %v4486, %v4496
        %v4502 = vadd.f32 %v4487, %v4496
        %v4503 = vadd.f32 %v4488, %v4496
        %v4504 = vadd.f32 %v4489, %v4496
        %v4505 = vadd.f32 %v4490, %v4496
        %4506 = vst [vmem:[#allocation11 + $0x40] sm:$0xff] %v4498
        %4507 = vst [vmem:[#allocation11 + $0x48] sm:$0xff] %v4499
        %4508 = vst [vmem:[#allocation11 + $0x50] sm:$0xff] %v4500
        %4509 = vst [vmem:[#allocation11 + $0x58] sm:$0xff] %v4501
        %4510 = vst [vmem:[#allocation11 + $0x60] sm:$0xff] %v4502
        %4511 = vst [vmem:[#allocation11 + $0x68] sm:$0xff] %v4503
        %4512 = vst [vmem:[#allocation11 + $0x70] sm:$0xff] %v4504
        %4513 = vst [vmem:[#allocation11 + $0x78] sm:$0xff] %v4505
        %v4514 = vld [vmem:[#allocation11] sm:$0xff]
        %v4515 = vld [vmem:[#allocation11 + $0x8] sm:$0xff]
        %v4516 = vld [vmem:[#allocation11 + $0x10] sm:$0xff]
        %v4517 = vld [vmem:[#allocation11 + $0x18] sm:$0xff]
        %v4518 = vld [vmem:[#allocation11 + $0x20] sm:$0xff]
        %v4519 = vld [vmem:[#allocation11 + $0x28] sm:$0xff]
        %v4520 = vld [vmem:[#allocation11 + $0x30] sm:$0xff]
        %v4521 = vld [vmem:[#allocation11 + $0x38] sm:$0xff]
        %v4522 = vld [vmem:[#allocation11 + $0x40] sm:$0xff]
        %v4523 = vld [vmem:[#allocation11 + $0x48] sm:$0xff]
        %v4524 = vld [vmem:[#allocation11 + $0x50] sm:$0xff]
        %v4525 = vld [vmem:[#allocation11 + $0x58] sm:$0xff]
        %v4526 = vld [vmem:[#allocation11 + $0x60] sm:$0xff]
        %v4527 = vld [vmem:[#allocation11 + $0x68] sm:$0xff]
        %v4528 = vld [vmem:[#allocation11 + $0x70] sm:$0xff]
        %v4529 = vld [vmem:[#allocation11 + $0x78] sm:$0xff]
        %v4530 = vld [vmem:[%s681] sm:$0x1]
        %v4531 = vld [vmem:[%s684] sm:$0x1]
        %4532 = vadd.xlane.f32.xlu0 %v4514
        %v4533 = vpop.xlane.xlu0 %4532
        %4534 = vadd.xlane.f32.xlu0 %v4515
        %v4535 = vpop.xlane.xlu0 %4534
        %4536 = vadd.xlane.f32.xlu0 %v4516
        %v4537 = vpop.xlane.xlu0 %4536
        %4538 = vadd.xlane.f32.xlu0 %v4517
        %v4539 = vpop.xlane.xlu0 %4538
        %4540 = vadd.xlane.f32.xlu0 %v4518
        %v4541 = vpop.xlane.xlu0 %4540
        %4542 = vadd.xlane.f32.xlu0 %v4519
        %v4543 = vpop.xlane.xlu0 %4542
        %4544 = vadd.xlane.f32.xlu0 %v4520
        %v4545 = vpop.xlane.xlu0 %4544
        %4546 = vadd.xlane.f32.xlu0 %v4521
        %v4547 = vpop.xlane.xlu0 %4546
        %4548 = vadd.xlane.f32.xlu0 %v4522
        %v4549 = vpop.xlane.xlu0 %4548
        %4550 = vadd.xlane.f32.xlu0 %v4523
        %v4551 = vpop.xlane.xlu0 %4550
        %4552 = vadd.xlane.f32.xlu0 %v4524
        %v4553 = vpop.xlane.xlu0 %4552
        %4554 = vadd.xlane.f32.xlu0 %v4525
        %v4555 = vpop.xlane.xlu0 %4554
        %4556 = vadd.xlane.f32.xlu0 %v4526
        %v4557 = vpop.xlane.xlu0 %4556
        %4558 = vadd.xlane.f32.xlu0 %v4527
        %v4559 = vpop.xlane.xlu0 %4558
        %4560 = vadd.xlane.f32.xlu0 %v4528
        %v4561 = vpop.xlane.xlu0 %4560
        %4562 = vadd.xlane.f32.xlu0 %v4529
        %v4563 = vpop.xlane.xlu0 %4562
        %v4564 = vmul.f32 %v4533, %v778
        %v4565 = vmul.f32 %v4535, %v778
        %v4566 = vmul.f32 %v4537, %v778
        %v4567 = vmul.f32 %v4539, %v778
        %v4568 = vmul.f32 %v4541, %v778
        %v4569 = vmul.f32 %v4543, %v778
        %v4570 = vmul.f32 %v4545, %v778
        %v4571 = vmul.f32 %v4547, %v778
        %v4572 = vmul.f32 %v4549, %v778
        %v4573 = vmul.f32 %v4551, %v778
        %v4574 = vmul.f32 %v4553, %v778
        %v4575 = vmul.f32 %v4555, %v778
        %v4576 = vmul.f32 %v4557, %v778
        %v4577 = vmul.f32 %v4559, %v778
        %v4578 = vmul.f32 %v4561, %v778
        %v4579 = vmul.f32 %v4563, %v778
        %v4580 = vsub.f32 %v4514, %v4564
        %v4581 = vsub.f32 %v4515, %v4565
        %v4582 = vsub.f32 %v4516, %v4566
        %v4583 = vsub.f32 %v4517, %v4567
        %v4584 = vsub.f32 %v4518, %v4568
        %v4585 = vsub.f32 %v4519, %v4569
        %v4586 = vsub.f32 %v4520, %v4570
        %v4587 = vsub.f32 %v4521, %v4571
        %v4588 = vsub.f32 %v4522, %v4572
        %v4589 = vsub.f32 %v4523, %v4573
        %v4590 = vsub.f32 %v4524, %v4574
        %v4591 = vsub.f32 %v4525, %v4575
        %v4592 = vsub.f32 %v4526, %v4576
        %v4593 = vsub.f32 %v4527, %v4577
        %v4594 = vsub.f32 %v4528, %v4578
        %v4595 = vsub.f32 %v4529, %v4579
        %v4596 = vmul.f32 %v4580, %v4580
        %v4597 = vmul.f32 %v4581, %v4581
        %v4598 = vmul.f32 %v4582, %v4582
        %v4599 = vmul.f32 %v4583, %v4583
        %v4600 = vmul.f32 %v4584, %v4584
        %v4601 = vmul.f32 %v4585, %v4585
        %v4602 = vmul.f32 %v4586, %v4586
        %v4603 = vmul.f32 %v4587, %v4587
        %v4604 = vmul.f32 %v4588, %v4588
        %v4605 = vmul.f32 %v4589, %v4589
        %v4606 = vmul.f32 %v4590, %v4590
        %v4607 = vmul.f32 %v4591, %v4591
        %v4608 = vmul.f32 %v4592, %v4592
        %v4609 = vmul.f32 %v4593, %v4593
        %v4610 = vmul.f32 %v4594, %v4594
        %v4611 = vmul.f32 %v4595, %v4595
        %4612 = vadd.xlane.f32.xlu0 %v4596
        %v4613 = vpop.xlane.xlu0 %4612
        %4614 = vadd.xlane.f32.xlu0 %v4597
        %v4615 = vpop.xlane.xlu0 %4614
        %4616 = vadd.xlane.f32.xlu0 %v4598
        %v4617 = vpop.xlane.xlu0 %4616
        %4618 = vadd.xlane.f32.xlu0 %v4599
        %v4619 = vpop.xlane.xlu0 %4618
        %4620 = vadd.xlane.f32.xlu0 %v4600
        %v4621 = vpop.xlane.xlu0 %4620
        %4622 = vadd.xlane.f32.xlu0 %v4601
        %v4623 = vpop.xlane.xlu0 %4622
        %4624 = vadd.xlane.f32.xlu0 %v4602
        %v4625 = vpop.xlane.xlu0 %4624
        %4626 = vadd.xlane.f32.xlu0 %v4603
        %v4627 = vpop.xlane.xlu0 %4626
        %4628 = vadd.xlane.f32.xlu0 %v4604
        %v4629 = vpop.xlane.xlu0 %4628
        %4630 = vadd.xlane.f32.xlu0 %v4605
        %v4631 = vpop.xlane.xlu0 %4630
        %4632 = vadd.xlane.f32.xlu0 %v4606
        %v4633 = vpop.xlane.xlu0 %4632
        %4634 = vadd.xlane.f32.xlu0 %v4607
        %v4635 = vpop.xlane.xlu0 %4634
        %4636 = vadd.xlane.f32.xlu0 %v4608
        %v4637 = vpop.xlane.xlu0 %4636
        %4638 = vadd.xlane.f32.xlu0 %v4609
        %v4639 = vpop.xlane.xlu0 %4638
        %4640 = vadd.xlane.f32.xlu0 %v4610
        %v4641 = vpop.xlane.xlu0 %4640
        %4642 = vadd.xlane.f32.xlu0 %v4611
        %v4643 = vpop.xlane.xlu0 %4642
        %v4644 = vmul.f32 %v4613, %v778
        %v4645 = vmul.f32 %v4615, %v778
        %v4646 = vmul.f32 %v4617, %v778
        %v4647 = vmul.f32 %v4619, %v778
        %v4648 = vmul.f32 %v4621, %v778
        %v4649 = vmul.f32 %v4623, %v778
        %v4650 = vmul.f32 %v4625, %v778
        %v4651 = vmul.f32 %v4627, %v778
        %v4652 = vmul.f32 %v4629, %v778
        %v4653 = vmul.f32 %v4631, %v778
        %v4654 = vmul.f32 %v4633, %v778
        %v4655 = vmul.f32 %v4635, %v778
        %v4656 = vmul.f32 %v4637, %v778
        %v4657 = vmul.f32 %v4639, %v778
        %v4658 = vmul.f32 %v4641, %v778
        %v4659 = vmul.f32 %v4643, %v778
        %v4660 = vadd.f32 %v4644, 1e-05
        %v4661 = vadd.f32 %v4645, 1e-05
        %v4662 = vadd.f32 %v4646, 1e-05
        %v4663 = vadd.f32 %v4647, 1e-05
        %v4664 = vadd.f32 %v4648, 1e-05
        %v4665 = vadd.f32 %v4649, 1e-05
        %v4666 = vadd.f32 %v4650, 1e-05
        %v4667 = vadd.f32 %v4651, 1e-05
        %v4668 = vadd.f32 %v4652, 1e-05
        %v4669 = vadd.f32 %v4653, 1e-05
        %v4670 = vadd.f32 %v4654, 1e-05
        %v4671 = vadd.f32 %v4655, 1e-05
        %v4672 = vadd.f32 %v4656, 1e-05
        %v4673 = vadd.f32 %v4657, 1e-05
        %v4674 = vadd.f32 %v4658, 1e-05
        %v4675 = vadd.f32 %v4659, 1e-05
        %v4676 = vrsqrt.pop %v4660
        %v4677 = vrsqrt.pop %v4661
        %v4678 = vrsqrt.pop %v4662
        %v4679 = vrsqrt.pop %v4663
        %v4680 = vrsqrt.pop %v4664
        %v4681 = vrsqrt.pop %v4665
        %v4682 = vrsqrt.pop %v4666
        %v4683 = vrsqrt.pop %v4667
        %v4684 = vrsqrt.pop %v4668
        %v4685 = vrsqrt.pop %v4669
        %v4686 = vrsqrt.pop %v4670
        %v4687 = vrsqrt.pop %v4671
        %v4688 = vrsqrt.pop %v4672
        %v4689 = vrsqrt.pop %v4673
        %v4690 = vrsqrt.pop %v4674
        %v4691 = vrsqrt.pop %v4675
        %v4692 = vmul.f32 %v4580, %v4676
        %v4693 = vmul.f32 %v4581, %v4677
        %v4694 = vmul.f32 %v4582, %v4678
        %v4695 = vmul.f32 %v4583, %v4679
        %v4696 = vmul.f32 %v4584, %v4680
        %v4697 = vmul.f32 %v4585, %v4681
        %v4698 = vmul.f32 %v4586, %v4682
        %v4699 = vmul.f32 %v4587, %v4683
        %v4700 = vmul.f32 %v4588, %v4684
        %v4701 = vmul.f32 %v4589, %v4685
        %v4702 = vmul.f32 %v4590, %v4686
        %v4703 = vmul.f32 %v4591, %v4687
        %v4704 = vmul.f32 %v4592, %v4688
        %v4705 = vmul.f32 %v4593, %v4689
        %v4706 = vmul.f32 %v4594, %v4690
        %v4707 = vmul.f32 %v4595, %v4691
        %v4709 = vlaneseq
        %v4710 = vshrl.u32 %v4709, 7
        %v4711 = vsub.s32 0, %v4710
        %v4712 = vrot.slane %v4530, %v4711
        %v4714 = vmul.f32 %v4692, %v4712
        %v4715 = vmul.f32 %v4693, %v4712
        %v4716 = vmul.f32 %v4694, %v4712
        %v4717 = vmul.f32 %v4695, %v4712
        %v4718 = vmul.f32 %v4696, %v4712
        %v4719 = vmul.f32 %v4697, %v4712
        %v4720 = vmul.f32 %v4698, %v4712
        %v4721 = vmul.f32 %v4699, %v4712
        %v4722 = vmul.f32 %v4700, %v4712
        %v4723 = vmul.f32 %v4701, %v4712
        %v4724 = vmul.f32 %v4702, %v4712
        %v4725 = vmul.f32 %v4703, %v4712
        %v4726 = vmul.f32 %v4704, %v4712
        %v4727 = vmul.f32 %v4705, %v4712
        %v4728 = vmul.f32 %v4706, %v4712
        %v4729 = vmul.f32 %v4707, %v4712
        %v4731 = vlaneseq
        %v4732 = vshrl.u32 %v4731, 7
        %v4733 = vsub.s32 0, %v4732
        %v4734 = vrot.slane %v4531, %v4733
        %v4736 = vadd.f32 %v4714, %v4734
        %v4737 = vadd.f32 %v4715, %v4734
        %v4738 = vadd.f32 %v4716, %v4734
        %v4739 = vadd.f32 %v4717, %v4734
        %v4740 = vadd.f32 %v4718, %v4734
        %v4741 = vadd.f32 %v4719, %v4734
        %v4742 = vadd.f32 %v4720, %v4734
        %v4743 = vadd.f32 %v4721, %v4734
        %v4744 = vadd.f32 %v4722, %v4734
        %v4745 = vadd.f32 %v4723, %v4734
        %v4746 = vadd.f32 %v4724, %v4734
        %v4747 = vadd.f32 %v4725, %v4734
        %v4748 = vadd.f32 %v4726, %v4734
        %v4749 = vadd.f32 %v4727, %v4734
        %v4750 = vadd.f32 %v4728, %v4734
        %v4751 = vadd.f32 %v4729, %v4734
        %v4752 = vpack.c.bf16 %v4737, %v4736
        %v4753 = vpack.c.bf16 %v4739, %v4738
        %v4754 = vpack.c.bf16 %v4741, %v4740
        %v4755 = vpack.c.bf16 %v4743, %v4742
        %v4756 = vpack.c.bf16 %v4745, %v4744
        %v4757 = vpack.c.bf16 %v4747, %v4746
        %v4758 = vpack.c.bf16 %v4749, %v4748
        %v4759 = vpack.c.bf16 %v4751, %v4750
        %v4760 = vld [vmem:[%s579] sm:$0xf]
        %v4761 = vld [vmem:[%s579 + $0x4] sm:$0xf]
        %v4762 = vld [vmem:[%s579 + $0x8] sm:$0xf]
        %v4763 = vld [vmem:[%s579 + $0xc] sm:$0xf]
        %v4764 = vld [vmem:[%s579 + $0x10] sm:$0xf]
        %v4765 = vld [vmem:[%s579 + $0x14] sm:$0xf]
        %v4766 = vld [vmem:[%s579 + $0x18] sm:$0xf]
        %v4767 = vld [vmem:[%s579 + $0x1c] sm:$0xf]
        %v4768 = vld [vmem:[%s579 + $0x20] sm:$0xf]
        %v4769 = vld [vmem:[%s579 + $0x24] sm:$0xf]
        %v4770 = vld [vmem:[%s579 + $0x28] sm:$0xf]
        %v4771 = vld [vmem:[%s579 + $0x2c] sm:$0xf]
        %v4772 = vld [vmem:[%s579 + $0x30] sm:$0xf]
        %v4773 = vld [vmem:[%s579 + $0x34] sm:$0xf]
        %v4774 = vld [vmem:[%s579 + $0x38] sm:$0xf]
        %v4775 = vld [vmem:[%s579 + $0x3c] sm:$0xf]
        %v4776 = vld [vmem:[%s687] sm:$0x1]
        %v4778 = vlaneseq
        %v4779 = vshrl.u32 %v4778, 7
        %v4780 = vsub.s32 0, %v4779
        %v4781 = vrot.slane %v4776, %v4780
        %v4799 = vunpack.c.l.b16 %v4760
        %v4800 = vunpack.c.l.b16 %v4761
        %v4801 = vunpack.c.l.b16 %v4762
        %v4802 = vunpack.c.l.b16 %v4763
        %v4803 = vunpack.c.l.b16 %v4764
        %v4804 = vunpack.c.l.b16 %v4765
        %v4805 = vunpack.c.l.b16 %v4766
        %v4806 = vunpack.c.l.b16 %v4767
        %v4807 = vunpack.c.l.b16 %v4768
        %v4808 = vunpack.c.l.b16 %v4769
        %v4809 = vunpack.c.l.b16 %v4770
        %v4810 = vunpack.c.l.b16 %v4771
        %v4811 = vunpack.c.l.b16 %v4772
        %v4812 = vunpack.c.l.b16 %v4773
        %v4813 = vunpack.c.l.b16 %v4774
        %v4814 = vunpack.c.l.b16 %v4775
        %v4815 = vpack.c.b16 %v4800, %v4799
        %v4816 = vpack.c.b16 %v4802, %v4801
        %v4817 = vpack.c.b16 %v4804, %v4803
        %v4818 = vpack.c.b16 %v4806, %v4805
        %v4819 = vpack.c.b16 %v4808, %v4807
        %v4820 = vpack.c.b16 %v4810, %v4809
        %v4821 = vpack.c.b16 %v4812, %v4811
        %v4822 = vpack.c.b16 %v4814, %v4813
        %4831 = vmatprep.subr.bf16.mxu0 0
        %4832 = vmatpush1.bf16.msra.mxu0 %v4815
        %4833 = vmatprep.subr.bf16.mxu0 0
        %4834 = vmatpush1.bf16.msra.mxu0 %v4816
        %4835 = vmatprep.subr.bf16.mxu0 0
        %4836 = vmatpush1.bf16.msra.mxu0 %v4817
        %4837 = vmatprep.subr.bf16.mxu0 0
        %4838 = vmatpush1.bf16.msra.mxu0 %v4818
        %4839 = vmatprep.subr.bf16.mxu0 0
        %4840 = vmatpush1.bf16.msra.mxu0 %v4819
        %4841 = vmatprep.subr.bf16.mxu0 0
        %4842 = vmatpush1.bf16.msra.mxu0 %v4820
        %4843 = vmatprep.subr.bf16.mxu0 0
        %4844 = vmatpush1.bf16.msra.mxu0 %v4821
        %4845 = vmatprep.subr.bf16.mxu0 0
        %4846 = vmatpush1.bf16.msra.mxu0 %v4822
        %4847 = vmatprep.subr.bf16.mxu0 0
        %4848 = vmatpush1.bf16.msra.mxu0 0
        %4849 = vmatprep.subr.bf16.mxu0 0
        %4850 = vmatpush1.bf16.msra.mxu0 0
        %4851 = vmatprep.subr.bf16.mxu0 0
        %4852 = vmatpush1.bf16.msra.mxu0 0
        %4853 = vmatprep.subr.bf16.mxu0 0
        %4854 = vmatpush1.bf16.msra.mxu0 0
        %4855 = vmatprep.subr.bf16.mxu0 0
        %4856 = vmatpush1.bf16.msra.mxu0 0
        %4857 = vmatprep.subr.bf16.mxu0 0
        %4858 = vmatpush1.bf16.msra.mxu0 0
        %4859 = vmatprep.subr.bf16.mxu0 0
        %4860 = vmatpush1.bf16.msra.mxu0 0
        %4861 = vmatprep.subr.bf16.mxu0 0
        %4862 = vmatpush1.bf16.msra.mxu0 0
        %4863 = vmatprep.mubr.bf16.mxu0 0
        %4864 = vmatmul.mubr.bf16.gmra.mrb[0].mxu0 %v4752
        %v4865 = vpop.f32.mrb[0].mxu0
        %v4866 = vadd.f32 %v4781, %v4865
        %v4867 = vpop.f32.mrb[0].mxu0
        %v4868 = vpop.f32.mrb[0].mxu0
        %v4869 = vadd.f32 %v4781, %v4868
        %v4870 = vpop.f32.mrb[0].mxu0
        %4871 = vmatprep.mubr.bf16.mxu0 0
        %4872 = vmatmul.mubr.bf16.gmra.mrb[0].mxu0 %v4753
        %v4873 = vpop.f32.mrb[0].mxu0
        %v4874 = vadd.f32 %v4781, %v4873
        %v4875 = vpop.f32.mrb[0].mxu0
        %v4876 = vpop.f32.mrb[0].mxu0
        %v4877 = vadd.f32 %v4781, %v4876
        %v4878 = vpop.f32.mrb[0].mxu0
        %4879 = vmatprep.mubr.bf16.mxu0 0
        %4880 = vmatmul.mubr.bf16.gmra.mrb[0].mxu0 %v4754
        %v4881 = vpop.f32.mrb[0].mxu0
        %v4882 = vadd.f32 %v4781, %v4881
        %v4883 = vpop.f32.mrb[0].mxu0
        %v4884 = vpop.f32.mrb[0].mxu0
        %v4885 = vadd.f32 %v4781, %v4884
        %v4886 = vpop.f32.mrb[0].mxu0
        %4887 = vmatprep.mubr.bf16.mxu0 0
        %4888 = vmatmul.mubr.bf16.gmra.mrb[0].mxu0 %v4755
        %v4889 = vpop.f32.mrb[0].mxu0
        %v4890 = vadd.f32 %v4781, %v4889
        %v4891 = vpop.f32.mrb[0].mxu0
        %v4892 = vpop.f32.mrb[0].mxu0
        %v4893 = vadd.f32 %v4781, %v4892
        %v4894 = vpop.f32.mrb[0].mxu0
        %4895 = vmatprep.mubr.bf16.mxu0 0
        %4896 = vmatmul.mubr.bf16.gmra.mrb[0].mxu0 %v4756
        %v4897 = vpop.f32.mrb[0].mxu0
        %v4898 = vadd.f32 %v4781, %v4897
        %v4899 = vpop.f32.mrb[0].mxu0
        %v4900 = vpop.f32.mrb[0].mxu0
        %v4901 = vadd.f32 %v4781, %v4900
        %v4902 = vpop.f32.mrb[0].mxu0
        %4903 = vmatprep.mubr.bf16.mxu0 0
        %4904 = vmatmul.mubr.bf16.gmra.mrb[0].mxu0 %v4757
        %v4905 = vpop.f32.mrb[0].mxu0
        %v4906 = vadd.f32 %v4781, %v4905
        %v4907 = vpop.f32.mrb[0].mxu0
        %v4908 = vpop.f32.mrb[0].mxu0
        %v4909 = vadd.f32 %v4781, %v4908
        %v4910 = vpop.f32.mrb[0].mxu0
        %4911 = vmatprep.mubr.bf16.mxu0 0
        %4912 = vmatmul.mubr.bf16.gmra.mrb[0].mxu0 %v4758
        %v4913 = vpop.f32.mrb[0].mxu0
        %v4914 = vadd.f32 %v4781, %v4913
        %v4915 = vpop.f32.mrb[0].mxu0
        %v4916 = vpop.f32.mrb[0].mxu0
        %v4917 = vadd.f32 %v4781, %v4916
        %v4918 = vpop.f32.mrb[0].mxu0
        %4919 = vmatprep.mubr.bf16.mxu0 0
        %4920 = vmatmul.mubr.bf16.gmra.mrb[0].mxu0 %v4759
        %v4921 = vpop.f32.mrb[0].mxu0
        %v4922 = vadd.f32 %v4781, %v4921
        %v4923 = vpop.f32.mrb[0].mxu0
        %v4924 = vpop.f32.mrb[0].mxu0
        %v4925 = vadd.f32 %v4781, %v4924
        %v4926 = vpop.f32.mrb[0].mxu0
        %4927 = vdwg.mxu0
        %v4928 = vmul.f32 %v4866, 0.5
        %v4929 = vmul.f32 %v4869, 0.5
        %v4930 = vmul.f32 %v4874, 0.5
        %v4931 = vmul.f32 %v4877, 0.5
        %v4932 = vmul.f32 %v4882, 0.5
        %v4933 = vmul.f32 %v4885, 0.5
        %v4934 = vmul.f32 %v4890, 0.5
        %v4935 = vmul.f32 %v4893, 0.5
        %v4936 = vmul.f32 %v4898, 0.5
        %v4937 = vmul.f32 %v4901, 0.5
        %v4938 = vmul.f32 %v4906, 0.5
        %v4939 = vmul.f32 %v4909, 0.5
        %v4940 = vmul.f32 %v4914, 0.5
        %v4941 = vmul.f32 %v4917, 0.5
        %v4942 = vmul.f32 %v4922, 0.5
        %v4943 = vmul.f32 %v4925, 0.5
        %v4944 = vmul.f32 %v4866, 0.044715
        %v4945 = vmul.f32 %v4869, 0.044715
        %v4946 = vmul.f32 %v4874, 0.044715
        %v4947 = vmul.f32 %v4877, 0.044715
        %v4948 = vmul.f32 %v4882, 0.044715
        %v4949 = vmul.f32 %v4885, 0.044715
        %v4950 = vmul.f32 %v4890, 0.044715
        %v4951 = vmul.f32 %v4893, 0.044715
        %v4952 = vmul.f32 %v4898, 0.044715
        %v4953 = vmul.f32 %v4901, 0.044715
        %v4954 = vmul.f32 %v4906, 0.044715
        %v4955 = vmul.f32 %v4909, 0.044715
        %v4956 = vmul.f32 %v4914, 0.044715
        %v4957 = vmul.f32 %v4917, 0.044715
        %v4958 = vmul.f32 %v4922, 0.044715
        %v4959 = vmul.f32 %v4925, 0.044715
        %v4960 = vmul.f32 %v4944, %v4866
        %v4961 = vmul.f32 %v4945, %v4869
        %v4962 = vmul.f32 %v4946, %v4874
        %v4963 = vmul.f32 %v4947, %v4877
        %v4964 = vmul.f32 %v4948, %v4882
        %v4965 = vmul.f32 %v4949, %v4885
        %v4966 = vmul.f32 %v4950, %v4890
        %v4967 = vmul.f32 %v4951, %v4893
        %v4968 = vmul.f32 %v4952, %v4898
        %v4969 = vmul.f32 %v4953, %v4901
        %v4970 = vmul.f32 %v4954, %v4906
        %v4971 = vmul.f32 %v4955, %v4909
        %v4972 = vmul.f32 %v4956, %v4914
        %v4973 = vmul.f32 %v4957, %v4917
        %v4974 = vmul.f32 %v4958, %v4922
        %v4975 = vmul.f32 %v4959, %v4925
        %v4976 = vmul.f32 %v4960, %v4866
        %v4977 = vmul.f32 %v4961, %v4869
        %v4978 = vmul.f32 %v4962, %v4874
        %v4979 = vmul.f32 %v4963, %v4877
        %v4980 = vmul.f32 %v4964, %v4882
        %v4981 = vmul.f32 %v4965, %v4885
        %v4982 = vmul.f32 %v4966, %v4890
        %v4983 = vmul.f32 %v4967, %v4893
        %v4984 = vmul.f32 %v4968, %v4898
        %v4985 = vmul.f32 %v4969, %v4901
        %v4986 = vmul.f32 %v4970, %v4906
        %v4987 = vmul.f32 %v4971, %v4909
        %v4988 = vmul.f32 %v4972, %v4914
        %v4989 = vmul.f32 %v4973, %v4917
        %v4990 = vmul.f32 %v4974, %v4922
        %v4991 = vmul.f32 %v4975, %v4925
        %v4992 = vadd.f32 %v4866, %v4976
        %v4993 = vadd.f32 %v4869, %v4977
        %v4994 = vadd.f32 %v4874, %v4978
        %v4995 = vadd.f32 %v4877, %v4979
        %v4996 = vadd.f32 %v4882, %v4980
        %v4997 = vadd.f32 %v4885, %v4981
        %v4998 = vadd.f32 %v4890, %v4982
        %v4999 = vadd.f32 %v4893, %v4983
        %v5000 = vadd.f32 %v4898, %v4984
        %v5001 = vadd.f32 %v4901, %v4985
        %v5002 = vadd.f32 %v4906, %v4986
        %v5003 = vadd.f32 %v4909, %v4987
        %v5004 = vadd.f32 %v4914, %v4988
        %v5005 = vadd.f32 %v4917, %v4989
        %v5006 = vadd.f32 %v4922, %v4990
        %v5007 = vadd.f32 %v4925, %v4991
        %v5008 = vmul.f32 %v4992, 0.7978846
        %v5009 = vmul.f32 %v4993, 0.7978846
        %v5010 = vmul.f32 %v4994, 0.7978846
        %v5011 = vmul.f32 %v4995, 0.7978846
        %v5012 = vmul.f32 %v4996, 0.7978846
        %v5013 = vmul.f32 %v4997, 0.7978846
        %v5014 = vmul.f32 %v4998, 0.7978846
        %v5015 = vmul.f32 %v4999, 0.7978846
        %v5016 = vmul.f32 %v5000, 0.7978846
        %v5017 = vmul.f32 %v5001, 0.7978846
        %v5018 = vmul.f32 %v5002, 0.7978846
        %v5019 = vmul.f32 %v5003, 0.7978846
        %v5020 = vmul.f32 %v5004, 0.7978846
        %v5021 = vmul.f32 %v5005, 0.7978846
        %v5022 = vmul.f32 %v5006, 0.7978846
        %v5023 = vmul.f32 %v5007, 0.7978846
        %v5024 = vtanh.pop %v5008
        %v5025 = vtanh.pop %v5009
        %v5026 = vtanh.pop %v5010
        %v5027 = vtanh.pop %v5011
        %v5028 = vtanh.pop %v5012
        %v5029 = vtanh.pop %v5013
        %v5030 = vtanh.pop %v5014
        %v5031 = vtanh.pop %v5015
        %v5032 = vtanh.pop %v5016
        %v5033 = vtanh.pop %v5017
        %v5034 = vtanh.pop %v5018
        %v5035 = vtanh.pop %v5019
        %v5036 = vtanh.pop %v5020
        %v5037 = vtanh.pop %v5021
        %v5038 = vtanh.pop %v5022
        %v5039 = vtanh.pop %v5023
        %v5040 = vadd.f32 %v5024, 1.0
        %v5041 = vadd.f32 %v5025, 1.0
        %v5042 = vadd.f32 %v5026, 1.0
        %v5043 = vadd.f32 %v5027, 1.0
        %v5044 = vadd.f32 %v5028, 1.0
        %v5045 = vadd.f32 %v5029, 1.0
        %v5046 = vadd.f32 %v5030, 1.0
        %v5047 = vadd.f32 %v5031, 1.0
        %v5048 = vadd.f32 %v5032, 1.0
        %v5049 = vadd.f32 %v5033, 1.0
        %v5050 = vadd.f32 %v5034, 1.0
        %v5051 = vadd.f32 %v5035, 1.0
        %v5052 = vadd.f32 %v5036, 1.0
        %v5053 = vadd.f32 %v5037, 1.0
        %v5054 = vadd.f32 %v5038, 1.0
        %v5055 = vadd.f32 %v5039, 1.0
        %v5056 = vmul.f32 %v4928, %v5040
        %v5057 = vmul.f32 %v4929, %v5041
        %v5058 = vmul.f32 %v4930, %v5042
        %v5059 = vmul.f32 %v4931, %v5043
        %v5060 = vmul.f32 %v4932, %v5044
        %v5061 = vmul.f32 %v4933, %v5045
        %v5062 = vmul.f32 %v4934, %v5046
        %v5063 = vmul.f32 %v4935, %v5047
        %v5064 = vmul.f32 %v4936, %v5048
        %v5065 = vmul.f32 %v4937, %v5049
        %v5066 = vmul.f32 %v4938, %v5050
        %v5067 = vmul.f32 %v4939, %v5051
        %v5068 = vmul.f32 %v4940, %v5052
        %v5069 = vmul.f32 %v4941, %v5053
        %v5070 = vmul.f32 %v4942, %v5054
        %v5071 = vmul.f32 %v4943, %v5055
        %v5072 = vpack.c.bf16 %v5057, %v5056
        %v5073 = vpack.c.bf16 %v5059, %v5058
        %v5074 = vpack.c.bf16 %v5061, %v5060
        %v5075 = vpack.c.bf16 %v5063, %v5062
        %v5076 = vpack.c.bf16 %v5065, %v5064
        %v5077 = vpack.c.bf16 %v5067, %v5066
        %v5078 = vpack.c.bf16 %v5069, %v5068
        %v5079 = vpack.c.bf16 %v5071, %v5070
        %v5080 = vld [vmem:[%s588] sm:$0xf]
        %v5081 = vld [vmem:[%s588 + $0x4] sm:$0xf]
        %v5082 = vld [vmem:[%s588 + $0x8] sm:$0xf]
        %v5083 = vld [vmem:[%s588 + $0xc] sm:$0xf]
        %v5084 = vld [vmem:[%s588 + $0x10] sm:$0xf]
        %v5085 = vld [vmem:[%s588 + $0x14] sm:$0xf]
        %v5086 = vld [vmem:[%s588 + $0x18] sm:$0xf]
        %v5087 = vld [vmem:[%s588 + $0x1c] sm:$0xf]
        %v5088 = vld [vmem:[%s588 + $0x20] sm:$0xf]
        %v5089 = vld [vmem:[%s588 + $0x24] sm:$0xf]
        %v5090 = vld [vmem:[%s588 + $0x28] sm:$0xf]
        %v5091 = vld [vmem:[%s588 + $0x2c] sm:$0xf]
        %v5092 = vld [vmem:[%s588 + $0x30] sm:$0xf]
        %v5093 = vld [vmem:[%s588 + $0x34] sm:$0xf]
        %v5094 = vld [vmem:[%s588 + $0x38] sm:$0xf]
        %v5095 = vld [vmem:[%s588 + $0x3c] sm:$0xf]
        %v5112 = vunpack.c.l.b16 %v5080
        %v5113 = vunpack.c.l.b16 %v5081
        %v5114 = vunpack.c.l.b16 %v5082
        %v5115 = vunpack.c.l.b16 %v5083
        %v5116 = vunpack.c.l.b16 %v5084
        %v5117 = vunpack.c.l.b16 %v5085
        %v5118 = vunpack.c.l.b16 %v5086
        %v5119 = vunpack.c.l.b16 %v5087
        %v5120 = vunpack.c.l.b16 %v5088
        %v5121 = vunpack.c.l.b16 %v5089
        %v5122 = vunpack.c.l.b16 %v5090
        %v5123 = vunpack.c.l.b16 %v5091
        %v5124 = vunpack.c.l.b16 %v5092
        %v5125 = vunpack.c.l.b16 %v5093
        %v5126 = vunpack.c.l.b16 %v5094
        %v5127 = vunpack.c.l.b16 %v5095
        %v5128 = vpack.c.b16 %v5113, %v5112
        %v5129 = vpack.c.b16 %v5115, %v5114
        %v5130 = vpack.c.b16 %v5117, %v5116
        %v5131 = vpack.c.b16 %v5119, %v5118
        %v5132 = vpack.c.b16 %v5121, %v5120
        %v5133 = vpack.c.b16 %v5123, %v5122
        %v5134 = vpack.c.b16 %v5125, %v5124
        %v5135 = vpack.c.b16 %v5127, %v5126
        %5144 = vmatprep.subr.bf16.mxu0 0
        %5145 = vmatpush1.bf16.msra.mxu0 %v5128
        %5146 = vmatprep.subr.bf16.mxu0 0
        %5147 = vmatpush1.bf16.msra.mxu0 %v5129
        %5148 = vmatprep.subr.bf16.mxu0 0
        %5149 = vmatpush1.bf16.msra.mxu0 %v5130
        %5150 = vmatprep.subr.bf16.mxu0 0
        %5151 = vmatpush1.bf16.msra.mxu0 %v5131
        %5152 = vmatprep.subr.bf16.mxu0 0
        %5153 = vmatpush1.bf16.msra.mxu0 %v5132
        %5154 = vmatprep.subr.bf16.mxu0 0
        %5155 = vmatpush1.bf16.msra.mxu0 %v5133
        %5156 = vmatprep.subr.bf16.mxu0 0
        %5157 = vmatpush1.bf16.msra.mxu0 %v5134
        %5158 = vmatprep.subr.bf16.mxu0 0
        %5159 = vmatpush1.bf16.msra.mxu0 %v5135
        %5160 = vmatprep.subr.bf16.mxu0 0
        %5161 = vmatpush1.bf16.msra.mxu0 0
        %5162 = vmatprep.subr.bf16.mxu0 0
        %5163 = vmatpush1.bf16.msra.mxu0 0
        %5164 = vmatprep.subr.bf16.mxu0 0
        %5165 = vmatpush1.bf16.msra.mxu0 0
        %5166 = vmatprep.subr.bf16.mxu0 0
        %5167 = vmatpush1.bf16.msra.mxu0 0
        %5168 = vmatprep.subr.bf16.mxu0 0
        %5169 = vmatpush1.bf16.msra.mxu0 0
        %5170 = vmatprep.subr.bf16.mxu0 0
        %5171 = vmatpush1.bf16.msra.mxu0 0
        %5172 = vmatprep.subr.bf16.mxu0 0
        %5173 = vmatpush1.bf16.msra.mxu0 0
        %5174 = vmatprep.subr.bf16.mxu0 0
        %5175 = vmatpush1.bf16.msra.mxu0 0
        %5176 = vmatprep.mubr.bf16.mxu0 0
        %5177 = vmatmul.mubr.bf16.gmra.mrb[0].mxu0 %v5072
        %v5178 = vpop.f32.mrb[0].mxu0
        %v5179 = vadd.f32 0.0, %v5178
        %v5180 = vpop.f32.mrb[0].mxu0
        %v5181 = vpop.f32.mrb[0].mxu0
        %v5182 = vadd.f32 0.0, %v5181
        %v5183 = vpop.f32.mrb[0].mxu0
        %5184 = vmatprep.mubr.bf16.mxu0 0
        %5185 = vmatmul.mubr.bf16.gmra.mrb[0].mxu0 %v5073
        %v5186 = vpop.f32.mrb[0].mxu0
        %v5187 = vadd.f32 0.0, %v5186
        %v5188 = vpop.f32.mrb[0].mxu0
        %v5189 = vpop.f32.mrb[0].mxu0
        %v5190 = vadd.f32 0.0, %v5189
        %v5191 = vpop.f32.mrb[0].mxu0
        %5192 = vmatprep.mubr.bf16.mxu0 0
        %5193 = vmatmul.mubr.bf16.gmra.mrb[0].mxu0 %v5074
        %v5194 = vpop.f32.mrb[0].mxu0
        %v5195 = vadd.f32 0.0, %v5194
        %v5196 = vpop.f32.mrb[0].mxu0
        %v5197 = vpop.f32.mrb[0].mxu0
        %v5198 = vadd.f32 0.0, %v5197
        %v5199 = vpop.f32.mrb[0].mxu0
        %5200 = vmatprep.mubr.bf16.mxu0 0
        %5201 = vmatmul.mubr.bf16.gmra.mrb[0].mxu0 %v5075
        %v5202 = vpop.f32.mrb[0].mxu0
        %v5203 = vadd.f32 0.0, %v5202
        %v5204 = vpop.f32.mrb[0].mxu0
        %v5205 = vpop.f32.mrb[0].mxu0
        %v5206 = vadd.f32 0.0, %v5205
        %v5207 = vpop.f32.mrb[0].mxu0
        %5208 = vmatprep.mubr.bf16.mxu0 0
        %5209 = vmatmul.mubr.bf16.gmra.mrb[0].mxu0 %v5076
        %v5210 = vpop.f32.mrb[0].mxu0
        %v5211 = vadd.f32 0.0, %v5210
        %v5212 = vpop.f32.mrb[0].mxu0
        %v5213 = vpop.f32.mrb[0].mxu0
        %v5214 = vadd.f32 0.0, %v5213
        %v5215 = vpop.f32.mrb[0].mxu0
        %5216 = vmatprep.mubr.bf16.mxu0 0
        %5217 = vmatmul.mubr.bf16.gmra.mrb[0].mxu0 %v5077
        %v5218 = vpop.f32.mrb[0].mxu0
        %v5219 = vadd.f32 0.0, %v5218
        %v5220 = vpop.f32.mrb[0].mxu0
        %v5221 = vpop.f32.mrb[0].mxu0
        %v5222 = vadd.f32 0.0, %v5221
        %v5223 = vpop.f32.mrb[0].mxu0
        %5224 = vmatprep.mubr.bf16.mxu0 0
        %5225 = vmatmul.mubr.bf16.gmra.mrb[0].mxu0 %v5078
        %v5226 = vpop.f32.mrb[0].mxu0
        %v5227 = vadd.f32 0.0, %v5226
        %v5228 = vpop.f32.mrb[0].mxu0
        %v5229 = vpop.f32.mrb[0].mxu0
        %v5230 = vadd.f32 0.0, %v5229
        %v5231 = vpop.f32.mrb[0].mxu0
        %5232 = vmatprep.mubr.bf16.mxu0 0
        %5233 = vmatmul.mubr.bf16.gmra.mrb[0].mxu0 %v5079
        %v5234 = vpop.f32.mrb[0].mxu0
        %v5235 = vadd.f32 0.0, %v5234
        %v5236 = vpop.f32.mrb[0].mxu0
        %v5237 = vpop.f32.mrb[0].mxu0
        %v5238 = vadd.f32 0.0, %v5237
        %v5239 = vpop.f32.mrb[0].mxu0
        %5240 = vdwg.mxu0
        %v5241 = vadd.f32 %v4514, %v5179
        %v5242 = vadd.f32 %v4515, %v5182
        %v5243 = vadd.f32 %v4516, %v5187
        %v5244 = vadd.f32 %v4517, %v5190
        %v5245 = vadd.f32 %v4518, %v5195
        %v5246 = vadd.f32 %v4519, %v5198
        %v5247 = vadd.f32 %v4520, %v5203
        %v5248 = vadd.f32 %v4521, %v5206
        %v5249 = vadd.f32 %v4522, %v5211
        %v5250 = vadd.f32 %v4523, %v5214
        %v5251 = vadd.f32 %v4524, %v5219
        %v5252 = vadd.f32 %v4525, %v5222
        %v5253 = vadd.f32 %v4526, %v5227
        %v5254 = vadd.f32 %v4527, %v5230
        %v5255 = vadd.f32 %v4528, %v5235
        %v5256 = vadd.f32 %v4529, %v5238
        %v5257 = vld [vmem:[%s690] sm:$0x1]
        %v5259 = vlaneseq
        %v5260 = vshrl.u32 %v5259, 7
        %v5261 = vsub.s32 0, %v5260
        %v5262 = vrot.slane %v5257, %v5261
        %v5264 = vadd.f32 %v5241, %v5262
        %v5265 = vadd.f32 %v5242, %v5262
        %v5266 = vadd.f32 %v5243, %v5262
        %v5267 = vadd.f32 %v5244, %v5262
        %v5268 = vadd.f32 %v5245, %v5262
        %v5269 = vadd.f32 %v5246, %v5262
        %v5270 = vadd.f32 %v5247, %v5262
        %v5271 = vadd.f32 %v5248, %v5262
        %v5272 = vadd.f32 %v5249, %v5262
        %v5273 = vadd.f32 %v5250, %v5262
        %v5274 = vadd.f32 %v5251, %v5262
        %v5275 = vadd.f32 %v5252, %v5262
        %v5276 = vadd.f32 %v5253, %v5262
        %v5277 = vadd.f32 %v5254, %v5262
        %v5278 = vadd.f32 %v5255, %v5262
        %v5279 = vadd.f32 %v5256, %v5262
        %5280 = vst [vmem:[#allocation11] sm:$0xff] %v5264
        %5281 = vst [vmem:[#allocation11 + $0x8] sm:$0xff] %v5265
        %5282 = vst [vmem:[#allocation11 + $0x10] sm:$0xff] %v5266
        %5283 = vst [vmem:[#allocation11 + $0x18] sm:$0xff] %v5267
        %5284 = vst [vmem:[#allocation11 + $0x20] sm:$0xff] %v5268
        %5285 = vst [vmem:[#allocation11 + $0x28] sm:$0xff] %v5269
        %5286 = vst [vmem:[#allocation11 + $0x30] sm:$0xff] %v5270
        %5287 = vst [vmem:[#allocation11 + $0x38] sm:$0xff] %v5271
        %5288 = vst [vmem:[#allocation11 + $0x40] sm:$0xff] %v5272
        %5289 = vst [vmem:[#allocation11 + $0x48] sm:$0xff] %v5273
        %5290 = vst [vmem:[#allocation11 + $0x50] sm:$0xff] %v5274
        %5291 = vst [vmem:[#allocation11 + $0x58] sm:$0xff] %v5275
        %5292 = vst [vmem:[#allocation11 + $0x60] sm:$0xff] %v5276
        %5293 = vst [vmem:[#allocation11 + $0x68] sm:$0xff] %v5277
        %5294 = vst [vmem:[#allocation11 + $0x70] sm:$0xff] %v5278
        %5295 = vst [vmem:[#allocation11 + $0x78] sm:$0xff] %v5279
        // Predicated region
        $region97: #{tpu_custom_call.1} parent=71 // pred_check
          %p5296 = pneg %p378
        $region98: #{tpu_custom_call.1} parent=71 // pred_check_branch
          %5298 = sbr.rel (%p5296) target = $region100
        $region99: #{tpu_custom_call.1} parent=71 // pred_region
          %s5300 = ssub.s32 2048, 2048
          %5301 = vsyncadd [#allocation4], %s5300
          %s5302 = sshll.u32 [#allocation11], 4
          %s5303 = int_to_ptr.vmem [resolvable:$true] %s5302
          %5308 = dma.vmem_to_hbm [thread:$0]  %s5303, 2048, %s13, [#allocation4], 128, 128, 8
        $region100: #{tpu_custom_call.1} parent=71 // pred_fallthru
          _
        // Predicated region
        $region101: #{tpu_custom_call.1} parent=71 // pred_check
          %p5309 = pneg %p378
        $region102: #{tpu_custom_call.1} parent=71 // pred_check_branch
          %5311 = sbr.rel (%p5309) target = $region104
        $region103: #{tpu_custom_call.1} parent=71 // pred_region
          %5312 = dma.done [#allocation4], 2048
        $region104: #{tpu_custom_call.1} parent=71 // pred_fallthru
          _
      $region72: #{tpu_custom_call.1} parent=5 // pred_fallthru
        _
      %p5313 = scmp.le.s32.totalorder 2, %s27
      // Predicated region
      $region105: #{tpu_custom_call.1} parent=5 // pred_check
        %p5314 = pneg %p5313
      $region106: #{tpu_custom_call.1} parent=5 // pred_check_branch
        %5316 = sbr.rel (%p5314) target = $region108
      $region107: #{tpu_custom_call.1} parent=5 // pred_region
        %s5317 = ssub.s32 %s27, 2
      $region108: #{tpu_custom_call.1} parent=5 // pred_fallthru
        _
    $region6: #{tpu_custom_call.1} parent=1 // loop_footer
      %s31 = sadd.s32 1, %s27
    $region7: #{tpu_custom_call.1} parent=1 // loop_footer_branch
      %26 = sbr.rel target = $region3
    $region8: #{tpu_custom_call.1} parent=1 // loop_exit
      _
    %5318 = vsyncpa [#allocation3], 1
    %s5319 = scalar_lea.sflag [#allocation3], 1
    %5320 = vsyncpa %s5319, 1
    %5321 = vsyncpa [#allocation6], 1
    %s5322 = scalar_lea.sflag [#allocation6], 1
    %5323 = vsyncpa %s5322, 1
    %5324 = vsyncpa [#allocation9], 1
    %s5325 = scalar_lea.sflag [#allocation9], 1
    %5326 = vsyncpa %s5325, 1
    %5327 = vsyncpa [#allocation4], 1
    %s5328 = scalar_lea.sflag [#allocation4], 1
    %5329 = vsyncpa %s5328, 1

</llo_original>
